<compile_context>
chip_gen: v7x
topology: tpu7x:2x2x1
jax: 0.10.0
libtpu: 0.0.40
codegen_flags: <defaults>
</compile_context>

<pallas_src>
import math

import numpy as np

import jax
import jax.numpy as jnp
from jax.experimental import pallas as pl
from jax.experimental.pallas import tpu as pltpu  # noqa: F401  (kept for TPU-specific tuning hooks)

# TPU's default f32 matmul precision is bf16 (1 pass); force full f32 so the
# pure-JAX reference and the Pallas kernel agree to ~1e-5.
jax.config.update("jax_default_matmul_precision", "highest")

# ----- model / test configuration (small, consistent with the module) -----
B, N, C = 2, 8, 32           # batch, tokens, embed_dim
NUM_HEADS = 4                # embed_num_heads
HEAD_DIM = C // NUM_HEADS    # 8
MLP_HIDDEN = int(C * 4.0)    # mlp_ratio = 4.0 -> 128
LN_EPS = 1e-5                # nn.LayerNorm default
SCALE = HEAD_DIM ** -0.5     # qk_scale=None -> head_dim ** -0.5

BN = B * N                   # 16 rows processed at once
HKV = NUM_HEADS * BN         # 64 score columns: j = h*(B*N) + b*N + m
LANES = 128                  # slab lane width (f32 lane tile)

# ----- packed parameter slab layout (rows x 128 lanes, all f32) -----
R_W0 = 0                     # rows [0, C)      : [ W_qkv' (C,3C) | W_proj (C,C) ]
R_FC1 = C                    # rows [C, 2C)     : W_fc1'  (C, 128)   (LN2 gamma folded)
R_FC2T = 2 * C               # rows [2C, 3C)    : W_fc2.T (C, 128)
R_VEC = 3 * C                # rows [3C, 3C+8)  : bias vectors (3 used, 5 pad)
R_MASK = 3 * C + 8           # rows [..., +HKV) : [ kv head mask (HKV,2C) | m_seg (HKV,HKV) ]
R_NEG = R_MASK + HKV         # rows [..., +BN)  : additive batch-validity bias (BN, HKV)
SLAB_ROWS = R_NEG + BN       # 184  (multiple of 8)
assert SLAB_ROWS % 8 == 0

HIGH = jax.lax.Precision.HIGHEST


# ---------------------------------------------------------------------------
# in-kernel math helpers (traced inside the Pallas kernel, all f32 on VPU/EUP)
# ---------------------------------------------------------------------------
def _erf(x):
    # Abramowitz & Stegun 7.1.26 polynomial (|err| < 1.5e-7), uses only exp on EUP.
    # TODO(synk): replace with lax.erf if/when Mosaic guarantees an erf lowering.
    a1, a2, a3, a4, a5 = 0.254829592, -0.284496736, 1.421413741, -1.453152027, 1.061405429
    p = 0.3275911
    s = jnp.where(x >= 0.0, 1.0, -1.0)
    ax = jnp.abs(x)
    t = 1.0 / (1.0 + p * ax)
    poly = ((((a5 * t + a4) * t + a3) * t + a2) * t + a1) * t
    return s * (1.0 - poly * jnp.exp(-ax * ax))


def _gelu_exact(x):
    # PyTorch nn.GELU() default (exact, erf-based)
    return 0.5 * x * (1.0 + _erf(x * (1.0 / math.sqrt(2.0))))


def _normalize(x):
    # LayerNorm WITHOUT affine: gamma/beta are folded into the following matmul.
    mu = jnp.mean(x, axis=-1, keepdims=True)
    xc = x - mu
    var = jnp.mean(xc * xc, axis=-1, keepdims=True)
    return xc * jax.lax.rsqrt(var + LN_EPS)


# ---------------------------------------------------------------------------
# Pallas kernel: full Block forward, single invocation, 2 input DMAs
# ---------------------------------------------------------------------------
def block_kernel(x_ref, w_ref, o_ref):
    f32 = jnp.float32
    x = x_ref[...]                                            # (BN, C)

    # ---- static views into the packed parameter/mask slab ----
    w_qkv = w_ref[R_W0:R_W0 + C, 0:3 * C]                     # (C, 3C)  LN1 gamma + SCALE folded
    w_proj = w_ref[R_W0:R_W0 + C, 3 * C:4 * C]                # (C, C)
    w_fc1 = w_ref[R_FC1:R_FC1 + C, :]                         # (C, 128) LN2 gamma folded
    w_fc2t = w_ref[R_FC2T:R_FC2T + C, :]                      # (C, 128) = W_fc2.T
    b_qkv = w_ref[R_VEC:R_VEC + 1, 0:3 * C]                   # (1, 3C)  = ln1_b @ W_qkv (Q part scaled)
    b_proj = w_ref[R_VEC:R_VEC + 1, 3 * C:4 * C]              # (1, C)
    b_fc1 = w_ref[R_VEC + 1:R_VEC + 2, :]                     # (1, 128) = ln2_b @ W_fc1 + b_fc1
    b_fc2 = w_ref[R_VEC + 2:R_VEC + 3, 0:C]                   # (1, C)
    kv_mask = w_ref[R_MASK:R_MASK + HKV, 0:2 * C]             # (HKV, 2C) head block-diagonal mask
    m_seg = w_ref[R_MASK:R_MASK + HKV, 2 * C:2 * C + HKV]     # (HKV, HKV) width-N segment-sum matrix
    neg_bias = w_ref[R_NEG:R_NEG + BN, 0:HKV]                 # (BN, HKV) 0 on same-batch cols, -1e30 else

    # ---------------- attention branch ----------------
    xh = _normalize(x)                                        # (BN, C)
    qkv = jnp.dot(xh, w_qkv, precision=HIGH,
                  preferred_element_type=f32) + b_qkv         # (BN, 3C), one MXU push
    q = qkv[:, :C]                                            # (BN, C), already * SCALE
    kv = qkv[:, C:3 * C]                                      # (BN, 2C) = [K | V]

    # Replicate [K|V] once per head and apply ONE combined block-diagonal head
    # mask; all heads & both batches are then handled by one score matmul and
    # one value matmul (K-transpose folded into dot_general's contraction).
    kv_rows = jnp.concatenate([kv] * NUM_HEADS, axis=0) * kv_mask   # (HKV, 2C)
    k_rows = kv_rows[:, :C]                                   # (HKV, C)
    v_rows = kv_rows[:, C:]                                   # (HKV, C)

    s = jax.lax.dot_general(q, k_rows, (((1,), (1,)), ((), ())),
                            precision=HIGH,
                            preferred_element_type=f32) + neg_bias  # (BN, HKV)

    # Softmax per width-N segment (one segment = one (head, batch) pair).
    # A per-row max is constant within each segment, so it cancels exactly;
    # the -1e30 bias makes cross-batch columns underflow to exactly 0.
    s_max = jnp.max(s, axis=-1, keepdims=True)
    e = jnp.exp(s - s_max)                                    # (BN, HKV)
    seg_sum = jnp.dot(e, m_seg, precision=HIGH,
                      preferred_element_type=f32)             # per-segment sums (MXU)
    p = e / jnp.maximum(seg_sum, 1e-30)                       # EXACT divide (approx recip was 3e-3 off)
    attn_out = jnp.dot(p, v_rows, precision=HIGH,
                       preferred_element_type=f32)            # (BN, C), heads already concatenated

    x1 = x + jnp.dot(attn_out, w_proj, precision=HIGH,
                     preferred_element_type=f32) + b_proj     # residual 1

    # ---------------- MLP branch ----------------
    xh2 = _normalize(x1)
    h1 = jnp.dot(xh2, w_fc1, precision=HIGH,
                 preferred_element_type=f32) + b_fc1          # (BN, 128)
    h1 = _gelu_exact(h1)
    mlp_out = jax.lax.dot_general(h1, w_fc2t, (((1,), (1,)), ((), ())),
                                  precision=HIGH,
                                  preferred_element_type=f32) + b_fc2

    o_ref[...] = x1 + mlp_out                                 # residual 2


# ---------------------------------------------------------------------------
# one-time parameter packing (numpy, outside the per-call path)
# ---------------------------------------------------------------------------
def pack_params(params):
    (ln1_g, ln1_b, w_qk, w_v, w_proj, b_proj,
     ln2_g, ln2_b, w_fc1, b_fc1, w_fc2, b_fc2) = [np.asarray(p, np.float32) for p in params]

    slab = np.zeros((SLAB_ROWS, LANES), np.float32)

    # --- fold LN1 affine + attention scale into the fused qkv projection ---
    w_qkv = np.concatenate([w_qk, w_v], axis=1)               # (C, 3C): [Wq | Wk | Wv]
    b_qkv = ln1_b.reshape(1, C) @ w_qkv                       # (1, 3C)  (beta folded -> bias)
    w_qkv = w_qkv * ln1_g.reshape(C, 1)                       # gamma folded into rows
    w_qkv[:, :C] *= SCALE                                     # attention scale folded into Q
    b_qkv[:, :C] *= SCALE

    # --- fold LN2 affine into fc1 ---
    w_fc1f = w_fc1 * ln2_g.reshape(C, 1)
    b_fc1f = ln2_b.reshape(1, C) @ w_fc1 + b_fc1.reshape(1, MLP_HIDDEN)

    slab[R_W0:R_W0 + C, 0:3 * C] = w_qkv
    slab[R_W0:R_W0 + C, 3 * C:4 * C] = w_proj
    slab[R_FC1:R_FC1 + C, 0:MLP_HIDDEN] = w_fc1f
    slab[R_FC2T:R_FC2T + C, 0:MLP_HIDDEN] = w_fc2.T           # transposed -> lane-dense (32,128)
    slab[R_VEC, 0:3 * C] = b_qkv[0]
    slab[R_VEC, 3 * C:4 * C] = b_proj.reshape(C)
    slab[R_VEC + 1, 0:MLP_HIDDEN] = b_fc1f[0]
    slab[R_VEC + 2, 0:C] = b_fc2.reshape(C)

    # --- masks as compile-time constants, packed into the same DMA slab ---
    # score column j indexes (head, batch, token): j = h*(B*N) + b*N + m
    row_head = np.arange(HKV) // BN                           # head of each replicated kv row
    col_head = np.arange(C) // HEAD_DIM
    col_head = np.concatenate([col_head, col_head])           # k columns then v columns
    slab[R_MASK:R_MASK + HKV, 0:2 * C] = (row_head[:, None] == col_head[None, :])

    jj = np.arange(HKV)
    slab[R_MASK:R_MASK + HKV, 2 * C:2 * C + HKV] = (jj[:, None] // N == jj[None, :] // N)

    row_b = np.arange(BN) // N
    col_b = (np.arange(HKV) % BN) // N
    slab[R_NEG:R_NEG + BN, 0:HKV] = np.where(row_b[:, None] == col_b[None, :], 0.0, -1e30)

    return jnp.asarray(slab)


# ---------------------------------------------------------------------------
# wrapper: no grid, everything resident in VMEM, output aliased onto the input
# ---------------------------------------------------------------------------
@jax.jit
def block_forward(x, slab):
    x2d = x.reshape(BN, C)
    out = pl.pallas_call(
        block_kernel,
        out_shape=jax.ShapeDtypeStruct((BN, C), jnp.float32),
        in_specs=[pl.BlockSpec((BN, C), lambda *_: (0, 0)),
                  pl.BlockSpec((SLAB_ROWS, LANES), lambda *_: (0, 0))],
        out_specs=pl.BlockSpec((BN, C), lambda *_: (0, 0)),
        input_output_aliases={0: 0},   # reuse x2d's buffer for the output
        # NOTE: deliberately NO grid / no megacore split at this size (per perf
        # review: duplicating the prologue across v7x's 2 TCs is a net loss).
    )(x2d, slab)
    return out.reshape(B, N, C)


# ---------------------------------------------------------------------------
# pure-JAX reference (mirrors the PyTorch forward exactly, unfolded params)
# ---------------------------------------------------------------------------
def block_ref(x, params):
    (ln1_g, ln1_b, w_qk, w_v, w_proj, b_proj,
     ln2_g, ln2_b, w_fc1, b_fc1, w_fc2, b_fc2) = params

    def ln(t, g, b):
        mu = jnp.mean(t, -1, keepdims=True)
        var = jnp.mean((t - mu) ** 2, -1, keepdims=True)
        return (t - mu) / jnp.sqrt(var + LN_EPS) * g + b

    xn = ln(x, ln1_g, ln1_b)
    qk = xn @ w_qk                                           # (B, N, 2C)
    v = xn @ w_v                                             # (B, N, C)
    q = qk[..., :C].reshape(B, N, NUM_HEADS, HEAD_DIM).transpose(0, 2, 1, 3)
    k = qk[..., C:].reshape(B, N, NUM_HEADS, HEAD_DIM).transpose(0, 2, 1, 3)
    vh = v.reshape(B, N, NUM_HEADS, HEAD_DIM).transpose(0, 2, 1, 3)
    attn = jnp.einsum("bhnd,bhmd->bhnm", q, k) * SCALE
    attn = jax.nn.softmax(attn, axis=-1)
    out = jnp.einsum("bhnm,bhmd->bhnd", attn, vh).transpose(0, 2, 1, 3).reshape(B, N, C)
    x1 = x + out @ w_proj + b_proj
    xn2 = ln(x1, ln2_g, ln2_b)
    h1 = xn2 @ w_fc1 + b_fc1
    h1 = 0.5 * h1 * (1.0 + jax.lax.erf(h1 / jnp.sqrt(2.0)))  # exact GELU
    return x1 + h1 @ w_fc2 + b_fc2


# ---------------------------------------------------------------------------
def init_params(key):
    ks = jax.random.split(key, 12)

    def lin_w(k, fan_in, fan_out):
        return jax.random.normal(k, (fan_in, fan_out), jnp.float32) / math.sqrt(fan_in)

    ln1_g = 1.0 + 0.1 * jax.random.normal(ks[0], (1, C), jnp.float32)
    ln1_b = 0.1 * jax.random.normal(ks[1], (1, C), jnp.float32)
    w_qk = lin_w(ks[2], C, 2 * C)          # qkv_bias=False -> no bias for qk / v
    w_v = lin_w(ks[3], C, C)
    w_proj = lin_w(ks[4], C, C)
    b_proj = 0.1 * jax.random.normal(ks[5], (1, C), jnp.float32)
    ln2_g = 1.0 + 0.1 * jax.random.normal(ks[6], (1, C), jnp.float32)
    ln2_b = 0.1 * jax.random.normal(ks[7], (1, C), jnp.float32)
    w_fc1 = lin_w(ks[8], C, MLP_HIDDEN)
    b_fc1 = 0.1 * jax.random.normal(ks[9], (1, MLP_HIDDEN), jnp.float32)
    w_fc2 = lin_w(ks[10], MLP_HIDDEN, C)
    b_fc2 = 0.1 * jax.random.normal(ks[11], (1, C), jnp.float32)
    return (ln1_g, ln1_b, w_qk, w_v, w_proj, b_proj,
            ln2_g, ln2_b, w_fc1, b_fc1, w_fc2, b_fc2)


if __name__ == "__main__":
    key = jax.random.PRNGKey(0)
    k_x, k_p = jax.random.split(key)
    x = jax.random.normal(k_x, (B, N, C), jnp.float32)
    params = init_params(k_p)
    slab = pack_params(params)        # one-time packing, NOT on the per-call path

    y = block_forward(x, slab)
    y = jax.block_until_ready(y)

    y_ref = block_ref(x, params)
    if not bool(jnp.allclose(y, y_ref, atol=2e-4, rtol=2e-4)):
        err = float(jnp.max(jnp.abs(y - y_ref)))
        raise AssertionError(f"Pallas kernel mismatch vs reference, max abs err = {err}")
    print("KERNEL_OK")
</pallas_src>

<mosaic_0001>
module attributes {stable_mosaic.version = 11 : i64} {
  func.func @block_kernel(%arg0: memref<16x32xf32, #tpu.memory_space<vmem>>, %arg1: memref<184x128xf32, #tpu.memory_space<vmem>>, %arg2: memref<16x32xf32, #tpu.memory_space<vmem>>) attributes {dimension_semantics = [], scalar_prefetch = 0 : i64, scratch_operands = 0 : i64, tpu.core_type = #tpu.core_type<tc>} {
    %c0 = arith.constant 0 : index
    %c0_0 = arith.constant 0 : index
    %0 = vector.load %arg0[%c0, %c0_0] : memref<16x32xf32, #tpu.memory_space<vmem>>, vector<16x32xf32>
    %c0_1 = arith.constant 0 : index
    %c0_2 = arith.constant 0 : index
    %1 = vector.load %arg1[%c0_1, %c0_2] : memref<184x128xf32, #tpu.memory_space<vmem>>, vector<32x96xf32>
    %c0_3 = arith.constant 0 : index
    %c96 = arith.constant 96 : index
    %2 = vector.load %arg1[%c0_3, %c96] : memref<184x128xf32, #tpu.memory_space<vmem>>, vector<32x32xf32>
    %c32 = arith.constant 32 : index
    %c0_4 = arith.constant 0 : index
    %3 = vector.load %arg1[%c32, %c0_4] : memref<184x128xf32, #tpu.memory_space<vmem>>, vector<32x128xf32>
    %c64 = arith.constant 64 : index
    %c0_5 = arith.constant 0 : index
    %4 = vector.load %arg1[%c64, %c0_5] : memref<184x128xf32, #tpu.memory_space<vmem>>, vector<32x128xf32>
    %c96_6 = arith.constant 96 : index
    %c0_7 = arith.constant 0 : index
    %5 = vector.load %arg1[%c96_6, %c0_7] : memref<184x128xf32, #tpu.memory_space<vmem>>, vector<1x96xf32>
    %c96_8 = arith.constant 96 : index
    %c96_9 = arith.constant 96 : index
    %6 = vector.load %arg1[%c96_8, %c96_9] : memref<184x128xf32, #tpu.memory_space<vmem>>, vector<1x32xf32>
    %c97 = arith.constant 97 : index
    %c0_10 = arith.constant 0 : index
    %7 = vector.load %arg1[%c97, %c0_10] : memref<184x128xf32, #tpu.memory_space<vmem>>, vector<1x128xf32>
    %c98 = arith.constant 98 : index
    %c0_11 = arith.constant 0 : index
    %8 = vector.load %arg1[%c98, %c0_11] : memref<184x128xf32, #tpu.memory_space<vmem>>, vector<1x32xf32>
    %c104 = arith.constant 104 : index
    %c0_12 = arith.constant 0 : index
    %9 = vector.load %arg1[%c104, %c0_12] : memref<184x128xf32, #tpu.memory_space<vmem>>, vector<64x64xf32>
    %c104_13 = arith.constant 104 : index
    %c64_14 = arith.constant 64 : index
    %10 = vector.load %arg1[%c104_13, %c64_14] : memref<184x128xf32, #tpu.memory_space<vmem>>, vector<64x64xf32>
    %c168 = arith.constant 168 : index
    %c0_15 = arith.constant 0 : index
    %11 = vector.load %arg1[%c168, %c0_15] : memref<184x128xf32, #tpu.memory_space<vmem>>, vector<16x64xf32>
    %cst = arith.constant dense<0.000000e+00> : vector<16xf32>
    %12 = vector.multi_reduction <add>, %0, %cst [1] : vector<16x32xf32> to vector<16xf32>
    %13 = vector.shape_cast %12 : vector<16xf32> to vector<16x1xf32>
    %cst_16 = arith.constant 3.200000e+01 : f32
    %14 = vector.broadcast %cst_16 : f32 to vector<16x1xf32>
    %15 = arith.divf %13, %14 : vector<16x1xf32>
    %16 = vector.broadcast %15 : vector<16x1xf32> to vector<16x32xf32>
    %17 = arith.subf %0, %16 : vector<16x32xf32>
    %18 = arith.mulf %17, %17 : vector<16x32xf32>
    %cst_17 = arith.constant dense<0.000000e+00> : vector<16xf32>
    %19 = vector.multi_reduction <add>, %18, %cst_17 [1] : vector<16x32xf32> to vector<16xf32>
    %20 = vector.shape_cast %19 : vector<16xf32> to vector<16x1xf32>
    %cst_18 = arith.constant 3.200000e+01 : f32
    %21 = vector.broadcast %cst_18 : f32 to vector<16x1xf32>
    %22 = arith.divf %20, %21 : vector<16x1xf32>
    %cst_19 = arith.constant 9.99999974E-6 : f32
    %23 = vector.broadcast %cst_19 : f32 to vector<16x1xf32>
    %24 = arith.addf %22, %23 : vector<16x1xf32>
    %25 = math.rsqrt %24 : vector<16x1xf32>
    %26 = vector.broadcast %25 : vector<16x1xf32> to vector<16x32xf32>
    %27 = arith.mulf %17, %26 : vector<16x32xf32>
    %cst_20 = arith.constant dense<0.000000e+00> : vector<16x96xf32>
    %28 = tpu.matmul %27, %1, %cst_20 {dimension_numbers = #tpu.dot_dimension_numbers<[1], [0], [0], [1], [0, 0, 1, 1], [], []>, precision = #tpu.contract_precision<fp32>} : vector<16x32xf32>, vector<32x96xf32>, vector<16x96xf32> -> vector<16x96xf32>
    %29 = vector.broadcast %5 : vector<1x96xf32> to vector<16x96xf32>
    %30 = arith.addf %28, %29 : vector<16x96xf32>
    %31 = vector.extract_strided_slice %30 {offsets = [0, 0], sizes = [16, 32], strides = [1, 1]} : vector<16x96xf32> to vector<16x32xf32>
    %32 = vector.extract_strided_slice %30 {offsets = [0, 32], sizes = [16, 64], strides = [1, 1]} : vector<16x96xf32> to vector<16x64xf32>
    %33 = tpu.concatenate %32, %32, %32, %32 in 0 : vector<16x64xf32>, vector<16x64xf32>, vector<16x64xf32>, vector<16x64xf32> -> vector<64x64xf32>
    %34 = arith.mulf %33, %9 : vector<64x64xf32>
    %35 = vector.extract_strided_slice %34 {offsets = [0, 0], sizes = [64, 32], strides = [1, 1]} : vector<64x64xf32> to vector<64x32xf32>
    %36 = vector.extract_strided_slice %34 {offsets = [0, 32], sizes = [64, 32], strides = [1, 1]} : vector<64x64xf32> to vector<64x32xf32>
    %cst_21 = arith.constant dense<0.000000e+00> : vector<16x64xf32>
    %37 = tpu.matmul %31, %35, %cst_21 {dimension_numbers = #tpu.dot_dimension_numbers<[1], [1], [0], [0], [0, 0, 1, 0], [], []>, precision = #tpu.contract_precision<fp32>} : vector<16x32xf32>, vector<64x32xf32>, vector<16x64xf32> -> vector<16x64xf32>
    %38 = arith.addf %37, %11 : vector<16x64xf32>
    %cst_22 = arith.constant dense<0xFF800000> : vector<16xf32>
    %39 = vector.multi_reduction <maximumf>, %38, %cst_22 [1] : vector<16x64xf32> to vector<16xf32>
    %40 = vector.shape_cast %39 : vector<16xf32> to vector<16x1xf32>
    %41 = vector.broadcast %40 : vector<16x1xf32> to vector<16x64xf32>
    %42 = arith.subf %38, %41 : vector<16x64xf32>
    %43 = math.exp %42 : vector<16x64xf32>
    %cst_23 = arith.constant dense<0.000000e+00> : vector<16x64xf32>
    %44 = tpu.matmul %43, %10, %cst_23 {dimension_numbers = #tpu.dot_dimension_numbers<[1], [0], [0], [1], [0, 0, 1, 1], [], []>, precision = #tpu.contract_precision<fp32>} : vector<16x64xf32>, vector<64x64xf32>, vector<16x64xf32> -> vector<16x64xf32>
    %cst_24 = arith.constant 1.000000e-30 : f32
    %45 = vector.broadcast %cst_24 : f32 to vector<16x64xf32>
    %46 = arith.maximumf %44, %45 : vector<16x64xf32>
    %47 = arith.divf %43, %46 : vector<16x64xf32>
    %cst_25 = arith.constant dense<0.000000e+00> : vector<16x32xf32>
    %48 = tpu.matmul %47, %36, %cst_25 {dimension_numbers = #tpu.dot_dimension_numbers<[1], [0], [0], [1], [0, 0, 1, 1], [], []>, precision = #tpu.contract_precision<fp32>} : vector<16x64xf32>, vector<64x32xf32>, vector<16x32xf32> -> vector<16x32xf32>
    %cst_26 = arith.constant dense<0.000000e+00> : vector<16x32xf32>
    %49 = tpu.matmul %48, %2, %cst_26 {dimension_numbers = #tpu.dot_dimension_numbers<[1], [0], [0], [1], [0, 0, 1, 1], [], []>, precision = #tpu.contract_precision<fp32>} : vector<16x32xf32>, vector<32x32xf32>, vector<16x32xf32> -> vector<16x32xf32>
    %50 = arith.addf %0, %49 : vector<16x32xf32>
    %51 = vector.broadcast %6 : vector<1x32xf32> to vector<16x32xf32>
    %52 = arith.addf %50, %51 : vector<16x32xf32>
    %cst_27 = arith.constant dense<0.000000e+00> : vector<16xf32>
    %53 = vector.multi_reduction <add>, %52, %cst_27 [1] : vector<16x32xf32> to vector<16xf32>
    %54 = vector.shape_cast %53 : vector<16xf32> to vector<16x1xf32>
    %cst_28 = arith.constant 3.200000e+01 : f32
    %55 = vector.broadcast %cst_28 : f32 to vector<16x1xf32>
    %56 = arith.divf %54, %55 : vector<16x1xf32>
    %57 = vector.broadcast %56 : vector<16x1xf32> to vector<16x32xf32>
    %58 = arith.subf %52, %57 : vector<16x32xf32>
    %59 = arith.mulf %58, %58 : vector<16x32xf32>
    %cst_29 = arith.constant dense<0.000000e+00> : vector<16xf32>
    %60 = vector.multi_reduction <add>, %59, %cst_29 [1] : vector<16x32xf32> to vector<16xf32>
    %61 = vector.shape_cast %60 : vector<16xf32> to vector<16x1xf32>
    %cst_30 = arith.constant 3.200000e+01 : f32
    %62 = vector.broadcast %cst_30 : f32 to vector<16x1xf32>
    %63 = arith.divf %61, %62 : vector<16x1xf32>
    %cst_31 = arith.constant 9.99999974E-6 : f32
    %64 = vector.broadcast %cst_31 : f32 to vector<16x1xf32>
    %65 = arith.addf %63, %64 : vector<16x1xf32>
    %66 = math.rsqrt %65 : vector<16x1xf32>
    %67 = vector.broadcast %66 : vector<16x1xf32> to vector<16x32xf32>
    %68 = arith.mulf %58, %67 : vector<16x32xf32>
    %cst_32 = arith.constant dense<0.000000e+00> : vector<16x128xf32>
    %69 = tpu.matmul %68, %3, %cst_32 {dimension_numbers = #tpu.dot_dimension_numbers<[1], [0], [0], [1], [0, 0, 1, 1], [], []>, precision = #tpu.contract_precision<fp32>} : vector<16x32xf32>, vector<32x128xf32>, vector<16x128xf32> -> vector<16x128xf32>
    %70 = vector.broadcast %7 : vector<1x128xf32> to vector<16x128xf32>
    %71 = arith.addf %69, %70 : vector<16x128xf32>
    %cst_33 = arith.constant 5.000000e-01 : f32
    %72 = vector.broadcast %cst_33 : f32 to vector<16x128xf32>
    %73 = arith.mulf %72, %71 : vector<16x128xf32>
    %cst_34 = arith.constant 0.707106769 : f32
    %74 = vector.broadcast %cst_34 : f32 to vector<16x128xf32>
    %75 = arith.mulf %71, %74 : vector<16x128xf32>
    %cst_35 = arith.constant 0.000000e+00 : f32
    %76 = vector.broadcast %cst_35 : f32 to vector<16x128xf32>
    %77 = arith.cmpf oge, %75, %76 : vector<16x128xf32>
    %cst_36 = arith.constant 1.000000e+00 : f32
    %cst_37 = arith.constant -1.000000e+00 : f32
    %78 = vector.broadcast %cst_36 : f32 to vector<16x128xf32>
    %79 = vector.broadcast %cst_37 : f32 to vector<16x128xf32>
    %80 = arith.select %77, %78, %79 : vector<16x128xi1>, vector<16x128xf32>
    %81 = math.absf %75 : vector<16x128xf32>
    %cst_38 = arith.constant 0.327591091 : f32
    %82 = vector.broadcast %cst_38 : f32 to vector<16x128xf32>
    %83 = arith.mulf %82, %81 : vector<16x128xf32>
    %cst_39 = arith.constant 1.000000e+00 : f32
    %84 = vector.broadcast %cst_39 : f32 to vector<16x128xf32>
    %85 = arith.addf %84, %83 : vector<16x128xf32>
    %cst_40 = arith.constant 1.000000e+00 : f32
    %86 = vector.broadcast %cst_40 : f32 to vector<16x128xf32>
    %87 = arith.divf %86, %85 : vector<16x128xf32>
    %cst_41 = arith.constant 1.06140542 : f32
    %88 = vector.broadcast %cst_41 : f32 to vector<16x128xf32>
    %89 = arith.mulf %88, %87 : vector<16x128xf32>
    %cst_42 = arith.constant -1.45315206 : f32
    %90 = vector.broadcast %cst_42 : f32 to vector<16x128xf32>
    %91 = arith.addf %89, %90 : vector<16x128xf32>
    %92 = arith.mulf %91, %87 : vector<16x128xf32>
    %cst_43 = arith.constant 1.42141378 : f32
    %93 = vector.broadcast %cst_43 : f32 to vector<16x128xf32>
    %94 = arith.addf %92, %93 : vector<16x128xf32>
    %95 = arith.mulf %94, %87 : vector<16x128xf32>
    %cst_44 = arith.constant -0.284496725 : f32
    %96 = vector.broadcast %cst_44 : f32 to vector<16x128xf32>
    %97 = arith.addf %95, %96 : vector<16x128xf32>
    %98 = arith.mulf %97, %87 : vector<16x128xf32>
    %cst_45 = arith.constant 0.254829586 : f32
    %99 = vector.broadcast %cst_45 : f32 to vector<16x128xf32>
    %100 = arith.addf %98, %99 : vector<16x128xf32>
    %101 = arith.mulf %100, %87 : vector<16x128xf32>
    %cst_46 = arith.constant 0.000000e+00 : f32
    %102 = vector.broadcast %cst_46 : f32 to vector<16x128xf32>
    %103 = arith.subf %102, %81 : vector<16x128xf32>
    %104 = arith.mulf %103, %81 : vector<16x128xf32>
    %105 = math.exp %104 : vector<16x128xf32>
    %106 = arith.mulf %101, %105 : vector<16x128xf32>
    %cst_47 = arith.constant 1.000000e+00 : f32
    %107 = vector.broadcast %cst_47 : f32 to vector<16x128xf32>
    %108 = arith.subf %107, %106 : vector<16x128xf32>
    %109 = arith.mulf %80, %108 : vector<16x128xf32>
    %cst_48 = arith.constant 1.000000e+00 : f32
    %110 = vector.broadcast %cst_48 : f32 to vector<16x128xf32>
    %111 = arith.addf %110, %109 : vector<16x128xf32>
    %112 = arith.mulf %73, %111 : vector<16x128xf32>
    %cst_49 = arith.constant dense<0.000000e+00> : vector<16x32xf32>
    %113 = tpu.matmul %112, %4, %cst_49 {dimension_numbers = #tpu.dot_dimension_numbers<[1], [1], [0], [0], [0, 0, 1, 0], [], []>, precision = #tpu.contract_precision<fp32>} : vector<16x128xf32>, vector<32x128xf32>, vector<16x32xf32> -> vector<16x32xf32>
    %114 = vector.broadcast %8 : vector<1x32xf32> to vector<16x32xf32>
    %115 = arith.addf %113, %114 : vector<16x32xf32>
    %116 = arith.addf %52, %115 : vector<16x32xf32>
    %c0_50 = arith.constant 0 : index
    %c0_51 = arith.constant 0 : index
    %117 = vector.load %arg2[%c0_50, %c0_51] : memref<16x32xf32, #tpu.memory_space<vmem>>, vector<16x32xf32>
    tpu.vector_store %arg2[%c0_50, %c0_51], %116 {strides = array<i32>} : memref<16x32xf32, #tpu.memory_space<vmem>>, vector<16x32xf32>,
    return
  }
}

</mosaic_0001>

<llo_original>
// kernel: block_forward.1
$region0: #{block_forward.1}
  #allocation0 [shape = 'u32[]', space=smem, size = 0x4, offset = 0x4, fixed_abs, tag = 'smem constant byte address 0x4 - core index']
  #allocation1 [shape = 'u32[144,128]{1,0:T(1,128)}', space=vmem, size = 0x12000, scoped, tag = 'internal scratch']
  %s0 = inlined_call_operand.vmem [shape: f32[16,32], index: 0, kind: input, shape index: {}, may-alias: {0,2}]
  %s1 = inlined_call_operand.hbm [shape: f32[184,128], index: 1, kind: input, shape index: {}]
  %s2 = inlined_call_operand.vmem [shape: f32[16,32], index: 2, kind: output, shape index: {}, may-alias: {0,2}]
  %s3 = sld [smem:[#allocation0]]
  $region22: #{block_forward.1} parent=0
    _
  %s5 = ssub.s32 1, %s3
  %s6 = scalar_select 0, %s5, %s3
  $region1: #{block_forward.1} parent=0
    #allocation2 [shape = 'u8[94208]{0}', space=vmem, size = 0x17000, scoped, tag = 'input window, operand 1, single buffered']
    #allocation3 [shape = 's32[1]{0}', space=sflag, size = 0x4, scoped, tag = 'scoped memory for block_forward.1']
    %7 = vsyncpa [#allocation3], 0
    // Predicated region
    $region2: #{block_forward.1} parent=1 // pred_check
      _
    $region3: #{block_forward.1} parent=1 // pred_check_branch
      %9 = sbr.rel (0) target = $region5
    $region4: #{block_forward.1} parent=1 // pred_region
      _
    $region5: #{block_forward.1} parent=1 // pred_fallthru
      _
    // Predicated region
    $region6: #{block_forward.1} parent=1 // pred_check
      _
    $region7: #{block_forward.1} parent=1 // pred_check_branch
      %11 = sbr.rel (0) target = $region9
    $region8: #{block_forward.1} parent=1 // pred_region
      %s13 = ssub.s32 2944, 2944
      %14 = vsyncadd [#allocation3], %s13
      %s15 = sshll.u32 [#allocation2], 4
      %s16 = int_to_ptr.vmem [resolvable:$true] %s15
      %21 = dma.hbm_to_vmem [thread:$0]  %s1, 2944, %s16, [#allocation3], 128, 128, 8
    $region9: #{block_forward.1} parent=1 // pred_fallthru
      _
    // Predicated region
    $region10: #{block_forward.1} parent=1 // pred_check
      _
    $region11: #{block_forward.1} parent=1 // pred_check_branch
      %23 = sbr.rel (0) target = $region13
    $region12: #{block_forward.1} parent=1 // pred_region
      %24 = dma.done [#allocation3], 2944
    $region13: #{block_forward.1} parent=1 // pred_fallthru
      _
    %v25 = vld [vmem:[%s0] sm:$0xff]
    %v26 = vld [vmem:[%s0 + $0x8] sm:$0xff]
    %v27 = vld [vmem:[#allocation2] sm:$0xff]
    %v28 = vld [vmem:[#allocation2 + $0x8] sm:$0xff]
    %v29 = vld [vmem:[#allocation2 + $0x10] sm:$0xff]
    %v30 = vld [vmem:[#allocation2 + $0x18] sm:$0xff]
    %v31 = vld [vmem:[#allocation2 + $0x20] sm:$0xff]
    %v32 = vld [vmem:[#allocation2 + $0x28] sm:$0xff]
    %v33 = vld [vmem:[#allocation2 + $0x30] sm:$0xff]
    %v34 = vld [vmem:[#allocation2 + $0x38] sm:$0xff]
    %v35 = vld [vmem:[#allocation2 + $0x40] sm:$0xff]
    %v36 = vld [vmem:[#allocation2 + $0x48] sm:$0xff]
    %v37 = vld [vmem:[#allocation2 + $0x50] sm:$0xff]
    %v38 = vld [vmem:[#allocation2 + $0x58] sm:$0xff]
    %v39 = vld [vmem:[#allocation2 + $0x60] sm:$0x1]
    %v40 = vld [vmem:[#allocation2 + $0x61] sm:$0x1]
    %v41 = vld [vmem:[#allocation2 + $0x62] sm:$0x1]
    %v42 = vld [vmem:[#allocation2 + $0x68] sm:$0xff]
    %v43 = vld [vmem:[#allocation2 + $0x70] sm:$0xff]
    %v44 = vld [vmem:[#allocation2 + $0x78] sm:$0xff]
    %v45 = vld [vmem:[#allocation2 + $0x80] sm:$0xff]
    %v46 = vld [vmem:[#allocation2 + $0x88] sm:$0xff]
    %v47 = vld [vmem:[#allocation2 + $0x90] sm:$0xff]
    %v48 = vld [vmem:[#allocation2 + $0x98] sm:$0xff]
    %v49 = vld [vmem:[#allocation2 + $0xa0] sm:$0xff]
    %v50 = vld [vmem:[#allocation2 + $0xa8] sm:$0xff]
    %v51 = vld [vmem:[#allocation2 + $0xb0] sm:$0xff]
    %vm52 = vcmask 261120
    %v53 = vsel %vm52, %v25, 0.0
    %54 = vadd.xlane.f32.xlu0 %v53
    %v55 = vpop.xlane.xlu0 %54
    %v56 = vsel %vm52, %v26, 0.0
    %57 = vadd.xlane.f32.xlu0 %v56
    %v58 = vpop.xlane.xlu0 %57
    %v59 = vrcp.pop 32.0
    %v60 = vmul.f32 %v55, %v59
    %v61 = vmul.f32 %v58, %v59
    %v62 = vsub.f32 %v25, %v60
    %v63 = vsub.f32 %v26, %v61
    %v64 = vmul.f32 %v62, %v62
    %v65 = vmul.f32 %v63, %v63
    %v66 = vsel %vm52, %v64, 0.0
    %67 = vadd.xlane.f32.xlu0 %v66
    %v68 = vpop.xlane.xlu0 %67
    %v69 = vsel %vm52, %v65, 0.0
    %70 = vadd.xlane.f32.xlu0 %v69
    %v71 = vpop.xlane.xlu0 %70
    %v72 = vmul.f32 %v68, %v59
    %v73 = vmul.f32 %v71, %v59
    %v74 = vadd.f32 %v72, 1e-05
    %v75 = vadd.f32 %v73, 1e-05
    %v76 = vrsqrt.pop %v74
    %v77 = vrsqrt.pop %v75
    %v78 = vmul.f32 %v62, %v76
    %v79 = vmul.f32 %v63, %v77
    %v80 = vlaneseq
    %v81 = vshrl.u32 %v80, 7
    %v82 = vsub.s32 0, %v81
    %v83 = vrot.slane %v39, %v82
    %v85 = vsel %vm52, %v78, 0
    %v88 = vsel %vm52, %v79, 0
    %90 = vmatprep.subr.mxu0 0.0
    %v91 = vand.u32 %v27, 4294901760
    %92 = vmatpush1.msra.mxu0 %v91
    %93 = vmatprep.subr.mxu0 0.0
    %v94 = vand.u32 %v28, 4294901760
    %95 = vmatpush1.msra.mxu0 %v94
    %96 = vmatprep.subr.mxu0 0.0
    %v97 = vand.u32 %v29, 4294901760
    %98 = vmatpush1.msra.mxu0 %v97
    %99 = vmatprep.subr.mxu0 0.0
    %v100 = vand.u32 %v30, 4294901760
    %101 = vmatpush1.msra.mxu0 %v100
    %102 = vmatprep.subr.mxu0 0.0
    %103 = vmatpush1.msra.mxu0 0.0
    %104 = vmatprep.subr.mxu0 0.0
    %105 = vmatpush1.msra.mxu0 0.0
    %106 = vmatprep.subr.mxu0 0.0
    %107 = vmatpush1.msra.mxu0 0.0
    %108 = vmatprep.subr.mxu0 0.0
    %109 = vmatpush1.msra.mxu0 0.0
    %110 = vmatprep.subr.mxu0 0.0
    %111 = vmatpush1.msra.mxu0 0.0
    %112 = vmatprep.subr.mxu0 0.0
    %113 = vmatpush1.msra.mxu0 0.0
    %114 = vmatprep.subr.mxu0 0.0
    %115 = vmatpush1.msra.mxu0 0.0
    %116 = vmatprep.subr.mxu0 0.0
    %117 = vmatpush1.msra.mxu0 0.0
    %118 = vmatprep.subr.mxu0 0.0
    %119 = vmatpush1.msra.mxu0 0.0
    %120 = vmatprep.subr.mxu0 0.0
    %121 = vmatpush1.msra.mxu0 0.0
    %122 = vmatprep.subr.mxu0 0.0
    %123 = vmatpush1.msra.mxu0 0.0
    %124 = vmatprep.subr.mxu0 0.0
    %125 = vmatpush1.msra.mxu0 0.0
    %126 = vmatprep.subr.mxu0 0.0
    %127 = vmatpush1.msra.mxu0 0.0
    %128 = vmatprep.subr.mxu0 0.0
    %129 = vmatpush1.msra.mxu0 0.0
    %130 = vmatprep.subr.mxu0 0.0
    %131 = vmatpush1.msra.mxu0 0.0
    %132 = vmatprep.subr.mxu0 0.0
    %133 = vmatpush1.msra.mxu0 0.0
    %134 = vmatprep.subr.mxu0 0.0
    %135 = vmatpush1.msra.mxu0 0.0
    %136 = vmatprep.subr.mxu0 0.0
    %137 = vmatpush1.msra.mxu0 0.0
    %138 = vmatprep.subr.mxu0 0.0
    %139 = vmatpush1.msra.mxu0 0.0
    %140 = vmatprep.subr.mxu0 0.0
    %141 = vmatpush1.msra.mxu0 0.0
    %142 = vmatprep.subr.mxu0 0.0
    %143 = vmatpush1.msra.mxu0 0.0
    %144 = vmatprep.subr.mxu0 0.0
    %145 = vmatpush1.msra.mxu0 0.0
    %146 = vmatprep.subr.mxu0 0.0
    %147 = vmatpush1.msra.mxu0 0.0
    %148 = vmatprep.subr.mxu0 0.0
    %149 = vmatpush1.msra.mxu0 0.0
    %150 = vmatprep.subr.mxu0 0.0
    %151 = vmatpush1.msra.mxu0 0.0
    %152 = vmatprep.subr.mxu0 0.0
    %153 = vmatpush1.msra.mxu0 0.0
    %154 = vmatprep.subr.mxu0 0.0
    %155 = vmatpush1.msra.mxu0 0.0
    %156 = vmatprep.subr.mxu0 0.0
    %157 = vmatpush1.msra.mxu0 0.0
    %158 = vmatprep.mubr.f32.mxu0 0.0
    %v159 = vand.u32 %v85, 4294901760
    %v160 = vsub.f32 %v85, %v159
    %v161 = vand.u32 %v160, 4294901760
    %v162 = vsub.f32 %v160, %v161
    %v163 = vand.u32 %v162, 4294901760
    %164 = vmatmul.mubr.f32.gmra.mrb[0].mxu0 %v163
    %v165 = vpop.f32.mrb[0].mxu0
    %v166 = vadd.f32 %v83, %v165
    %v167 = vpop.f32.mrb[0].mxu0
    %168 = vmatprep.mubr.f32.mxu0 0.0
    %v169 = vand.u32 %v88, 4294901760
    %v170 = vsub.f32 %v88, %v169
    %v171 = vand.u32 %v170, 4294901760
    %v172 = vsub.f32 %v170, %v171
    %v173 = vand.u32 %v172, 4294901760
    %174 = vmatmul.mubr.f32.gmra.mrb[0].mxu0 %v173
    %v175 = vpop.f32.mrb[0].mxu0
    %v176 = vadd.f32 %v83, %v175
    %v177 = vpop.f32.mrb[0].mxu0
    %178 = vdwg.mxu0
    %179 = vmatprep.subr.mxu0 0.0
    %v180 = vand.u32 %v27, 4294901760
    %v181 = vsub.f32 %v27, %v180
    %v182 = vand.u32 %v181, 4294901760
    %v183 = vsub.f32 %v181, %v182
    %v184 = vand.u32 %v183, 4294901760
    %185 = vmatpush1.msra.mxu0 %v184
    %186 = vmatprep.subr.mxu0 0.0
    %v187 = vand.u32 %v28, 4294901760
    %v188 = vsub.f32 %v28, %v187
    %v189 = vand.u32 %v188, 4294901760
    %v190 = vsub.f32 %v188, %v189
    %v191 = vand.u32 %v190, 4294901760
    %192 = vmatpush1.msra.mxu0 %v191
    %193 = vmatprep.subr.mxu0 0.0
    %v194 = vand.u32 %v29, 4294901760
    %v195 = vsub.f32 %v29, %v194
    %v196 = vand.u32 %v195, 4294901760
    %v197 = vsub.f32 %v195, %v196
    %v198 = vand.u32 %v197, 4294901760
    %199 = vmatpush1.msra.mxu0 %v198
    %200 = vmatprep.subr.mxu0 0.0
    %v201 = vand.u32 %v30, 4294901760
    %v202 = vsub.f32 %v30, %v201
    %v203 = vand.u32 %v202, 4294901760
    %v204 = vsub.f32 %v202, %v203
    %v205 = vand.u32 %v204, 4294901760
    %206 = vmatpush1.msra.mxu0 %v205
    %207 = vmatprep.subr.mxu0 0.0
    %208 = vmatpush1.msra.mxu0 0.0
    %209 = vmatprep.subr.mxu0 0.0
    %210 = vmatpush1.msra.mxu0 0.0
    %211 = vmatprep.subr.mxu0 0.0
    %212 = vmatpush1.msra.mxu0 0.0
    %213 = vmatprep.subr.mxu0 0.0
    %214 = vmatpush1.msra.mxu0 0.0
    %215 = vmatprep.subr.mxu0 0.0
    %216 = vmatpush1.msra.mxu0 0.0
    %217 = vmatprep.subr.mxu0 0.0
    %218 = vmatpush1.msra.mxu0 0.0
    %219 = vmatprep.subr.mxu0 0.0
    %220 = vmatpush1.msra.mxu0 0.0
    %221 = vmatprep.subr.mxu0 0.0
    %222 = vmatpush1.msra.mxu0 0.0
    %223 = vmatprep.subr.mxu0 0.0
    %224 = vmatpush1.msra.mxu0 0.0
    %225 = vmatprep.subr.mxu0 0.0
    %226 = vmatpush1.msra.mxu0 0.0
    %227 = vmatprep.subr.mxu0 0.0
    %228 = vmatpush1.msra.mxu0 0.0
    %229 = vmatprep.subr.mxu0 0.0
    %230 = vmatpush1.msra.mxu0 0.0
    %231 = vmatprep.subr.mxu0 0.0
    %232 = vmatpush1.msra.mxu0 0.0
    %233 = vmatprep.subr.mxu0 0.0
    %234 = vmatpush1.msra.mxu0 0.0
    %235 = vmatprep.subr.mxu0 0.0
    %236 = vmatpush1.msra.mxu0 0.0
    %237 = vmatprep.subr.mxu0 0.0
    %238 = vmatpush1.msra.mxu0 0.0
    %239 = vmatprep.subr.mxu0 0.0
    %240 = vmatpush1.msra.mxu0 0.0
    %241 = vmatprep.subr.mxu0 0.0
    %242 = vmatpush1.msra.mxu0 0.0
    %243 = vmatprep.subr.mxu0 0.0
    %244 = vmatpush1.msra.mxu0 0.0
    %245 = vmatprep.subr.mxu0 0.0
    %246 = vmatpush1.msra.mxu0 0.0
    %247 = vmatprep.subr.mxu0 0.0
    %248 = vmatpush1.msra.mxu0 0.0
    %249 = vmatprep.subr.mxu0 0.0
    %250 = vmatpush1.msra.mxu0 0.0
    %251 = vmatprep.subr.mxu0 0.0
    %252 = vmatpush1.msra.mxu0 0.0
    %253 = vmatprep.subr.mxu0 0.0
    %254 = vmatpush1.msra.mxu0 0.0
    %255 = vmatprep.subr.mxu0 0.0
    %256 = vmatpush1.msra.mxu0 0.0
    %257 = vmatprep.subr.mxu0 0.0
    %258 = vmatpush1.msra.mxu0 0.0
    %259 = vmatprep.subr.mxu0 0.0
    %260 = vmatpush1.msra.mxu0 0.0
    %261 = vmatprep.subr.mxu0 0.0
    %262 = vmatpush1.msra.mxu0 0.0
    %263 = vmatprep.mubr.f32.mxu0 0.0
    %v264 = vand.u32 %v85, 4294901760
    %265 = vmatmul.mubr.f32.gmra.mrb[0].mxu0 %v264
    %v266 = vpop.f32.mrb[0].mxu0
    %v267 = vadd.f32 %v166, %v266
    %v268 = vpop.f32.mrb[0].mxu0
    %269 = vmatprep.mubr.f32.mxu0 0.0
    %v270 = vand.u32 %v88, 4294901760
    %271 = vmatmul.mubr.f32.gmra.mrb[0].mxu0 %v270
    %v272 = vpop.f32.mrb[0].mxu0
    %v273 = vadd.f32 %v176, %v272
    %v274 = vpop.f32.mrb[0].mxu0
    %275 = vdwg.mxu0
    %276 = vmatprep.subr.mxu0 0.0
    %v277 = vand.u32 %v27, 4294901760
    %v278 = vsub.f32 %v27, %v277
    %279 = vmatpush1.msra.mxu0 %v278
    %280 = vmatprep.subr.mxu0 0.0
    %v281 = vand.u32 %v28, 4294901760
    %v282 = vsub.f32 %v28, %v281
    %283 = vmatpush1.msra.mxu0 %v282
    %284 = vmatprep.subr.mxu0 0.0
    %v285 = vand.u32 %v29, 4294901760
    %v286 = vsub.f32 %v29, %v285
    %287 = vmatpush1.msra.mxu0 %v286
    %288 = vmatprep.subr.mxu0 0.0
    %v289 = vand.u32 %v30, 4294901760
    %v290 = vsub.f32 %v30, %v289
    %291 = vmatpush1.msra.mxu0 %v290
    %292 = vmatprep.subr.mxu0 0.0
    %293 = vmatpush1.msra.mxu0 0.0
    %294 = vmatprep.subr.mxu0 0.0
    %295 = vmatpush1.msra.mxu0 0.0
    %296 = vmatprep.subr.mxu0 0.0
    %297 = vmatpush1.msra.mxu0 0.0
    %298 = vmatprep.subr.mxu0 0.0
    %299 = vmatpush1.msra.mxu0 0.0
    %300 = vmatprep.subr.mxu0 0.0
    %301 = vmatpush1.msra.mxu0 0.0
    %302 = vmatprep.subr.mxu0 0.0
    %303 = vmatpush1.msra.mxu0 0.0
    %304 = vmatprep.subr.mxu0 0.0
    %305 = vmatpush1.msra.mxu0 0.0
    %306 = vmatprep.subr.mxu0 0.0
    %307 = vmatpush1.msra.mxu0 0.0
    %308 = vmatprep.subr.mxu0 0.0
    %309 = vmatpush1.msra.mxu0 0.0
    %310 = vmatprep.subr.mxu0 0.0
    %311 = vmatpush1.msra.mxu0 0.0
    %312 = vmatprep.subr.mxu0 0.0
    %313 = vmatpush1.msra.mxu0 0.0
    %314 = vmatprep.subr.mxu0 0.0
    %315 = vmatpush1.msra.mxu0 0.0
    %316 = vmatprep.subr.mxu0 0.0
    %317 = vmatpush1.msra.mxu0 0.0
    %318 = vmatprep.subr.mxu0 0.0
    %319 = vmatpush1.msra.mxu0 0.0
    %320 = vmatprep.subr.mxu0 0.0
    %321 = vmatpush1.msra.mxu0 0.0
    %322 = vmatprep.subr.mxu0 0.0
    %323 = vmatpush1.msra.mxu0 0.0
    %324 = vmatprep.subr.mxu0 0.0
    %325 = vmatpush1.msra.mxu0 0.0
    %326 = vmatprep.subr.mxu0 0.0
    %327 = vmatpush1.msra.mxu0 0.0
    %328 = vmatprep.subr.mxu0 0.0
    %329 = vmatpush1.msra.mxu0 0.0
    %330 = vmatprep.subr.mxu0 0.0
    %331 = vmatpush1.msra.mxu0 0.0
    %332 = vmatprep.subr.mxu0 0.0
    %333 = vmatpush1.msra.mxu0 0.0
    %334 = vmatprep.subr.mxu0 0.0
    %335 = vmatpush1.msra.mxu0 0.0
    %336 = vmatprep.subr.mxu0 0.0
    %337 = vmatpush1.msra.mxu0 0.0
    %338 = vmatprep.subr.mxu0 0.0
    %339 = vmatpush1.msra.mxu0 0.0
    %340 = vmatprep.subr.mxu0 0.0
    %341 = vmatpush1.msra.mxu0 0.0
    %342 = vmatprep.subr.mxu0 0.0
    %343 = vmatpush1.msra.mxu0 0.0
    %344 = vmatprep.subr.mxu0 0.0
    %345 = vmatpush1.msra.mxu0 0.0
    %346 = vmatprep.subr.mxu0 0.0
    %347 = vmatpush1.msra.mxu0 0.0
    %348 = vmatprep.mubr.f32.mxu0 0.0
    %v349 = vand.u32 %v85, 4294901760
    %v350 = vsub.f32 %v85, %v349
    %351 = vmatmul.mubr.f32.gmra.mrb[0].mxu0 %v350
    %v352 = vpop.f32.mrb[0].mxu0
    %v353 = vadd.f32 %v267, %v352
    %v354 = vpop.f32.mrb[0].mxu0
    %355 = vmatprep.mubr.f32.mxu0 0.0
    %v356 = vand.u32 %v88, 4294901760
    %v357 = vsub.f32 %v88, %v356
    %358 = vmatmul.mubr.f32.gmra.mrb[0].mxu0 %v357
    %v359 = vpop.f32.mrb[0].mxu0
    %v360 = vadd.f32 %v273, %v359
    %v361 = vpop.f32.mrb[0].mxu0
    %362 = vdwg.mxu0
    %363 = vmatprep.subr.mxu0 0.0
    %v364 = vand.u32 %v27, 4294901760
    %365 = vmatpush1.msra.mxu0 %v364
    %366 = vmatprep.subr.mxu0 0.0
    %v367 = vand.u32 %v28, 4294901760
    %368 = vmatpush1.msra.mxu0 %v367
    %369 = vmatprep.subr.mxu0 0.0
    %v370 = vand.u32 %v29, 4294901760
    %371 = vmatpush1.msra.mxu0 %v370
    %372 = vmatprep.subr.mxu0 0.0
    %v373 = vand.u32 %v30, 4294901760
    %374 = vmatpush1.msra.mxu0 %v373
    %375 = vmatprep.subr.mxu0 0.0
    %376 = vmatpush1.msra.mxu0 0.0
    %377 = vmatprep.subr.mxu0 0.0
    %378 = vmatpush1.msra.mxu0 0.0
    %379 = vmatprep.subr.mxu0 0.0
    %380 = vmatpush1.msra.mxu0 0.0
    %381 = vmatprep.subr.mxu0 0.0
    %382 = vmatpush1.msra.mxu0 0.0
    %383 = vmatprep.subr.mxu0 0.0
    %384 = vmatpush1.msra.mxu0 0.0
    %385 = vmatprep.subr.mxu0 0.0
    %386 = vmatpush1.msra.mxu0 0.0
    %387 = vmatprep.subr.mxu0 0.0
    %388 = vmatpush1.msra.mxu0 0.0
    %389 = vmatprep.subr.mxu0 0.0
    %390 = vmatpush1.msra.mxu0 0.0
    %391 = vmatprep.subr.mxu0 0.0
    %392 = vmatpush1.msra.mxu0 0.0
    %393 = vmatprep.subr.mxu0 0.0
    %394 = vmatpush1.msra.mxu0 0.0
    %395 = vmatprep.subr.mxu0 0.0
    %396 = vmatpush1.msra.mxu0 0.0
    %397 = vmatprep.subr.mxu0 0.0
    %398 = vmatpush1.msra.mxu0 0.0
    %399 = vmatprep.subr.mxu0 0.0
    %400 = vmatpush1.msra.mxu0 0.0
    %401 = vmatprep.subr.mxu0 0.0
    %402 = vmatpush1.msra.mxu0 0.0
    %403 = vmatprep.subr.mxu0 0.0
    %404 = vmatpush1.msra.mxu0 0.0
    %405 = vmatprep.subr.mxu0 0.0
    %406 = vmatpush1.msra.mxu0 0.0
    %407 = vmatprep.subr.mxu0 0.0
    %408 = vmatpush1.msra.mxu0 0.0
    %409 = vmatprep.subr.mxu0 0.0
    %410 = vmatpush1.msra.mxu0 0.0
    %411 = vmatprep.subr.mxu0 0.0
    %412 = vmatpush1.msra.mxu0 0.0
    %413 = vmatprep.subr.mxu0 0.0
    %414 = vmatpush1.msra.mxu0 0.0
    %415 = vmatprep.subr.mxu0 0.0
    %416 = vmatpush1.msra.mxu0 0.0
    %417 = vmatprep.subr.mxu0 0.0
    %418 = vmatpush1.msra.mxu0 0.0
    %419 = vmatprep.subr.mxu0 0.0
    %420 = vmatpush1.msra.mxu0 0.0
    %421 = vmatprep.subr.mxu0 0.0
    %422 = vmatpush1.msra.mxu0 0.0
    %423 = vmatprep.subr.mxu0 0.0
    %424 = vmatpush1.msra.mxu0 0.0
    %425 = vmatprep.subr.mxu0 0.0
    %426 = vmatpush1.msra.mxu0 0.0
    %427 = vmatprep.subr.mxu0 0.0
    %428 = vmatpush1.msra.mxu0 0.0
    %429 = vmatprep.subr.mxu0 0.0
    %430 = vmatpush1.msra.mxu0 0.0
    %431 = vmatprep.mubr.f32.mxu0 0.0
    %v432 = vand.u32 %v85, 4294901760
    %v433 = vsub.f32 %v85, %v432
    %v434 = vand.u32 %v433, 4294901760
    %435 = vmatmul.mubr.f32.gmra.mrb[0].mxu0 %v434
    %v436 = vpop.f32.mrb[0].mxu0
    %v437 = vadd.f32 %v353, %v436
    %v438 = vpop.f32.mrb[0].mxu0
    %439 = vmatprep.mubr.f32.mxu0 0.0
    %v440 = vand.u32 %v88, 4294901760
    %v441 = vsub.f32 %v88, %v440
    %v442 = vand.u32 %v441, 4294901760
    %443 = vmatmul.mubr.f32.gmra.mrb[0].mxu0 %v442
    %v444 = vpop.f32.mrb[0].mxu0
    %v445 = vadd.f32 %v360, %v444
    %v446 = vpop.f32.mrb[0].mxu0
    %447 = vdwg.mxu0
    %448 = vmatprep.subr.mxu0 0.0
    %v449 = vand.u32 %v27, 4294901760
    %v450 = vsub.f32 %v27, %v449
    %v451 = vand.u32 %v450, 4294901760
    %452 = vmatpush1.msra.mxu0 %v451
    %453 = vmatprep.subr.mxu0 0.0
    %v454 = vand.u32 %v28, 4294901760
    %v455 = vsub.f32 %v28, %v454
    %v456 = vand.u32 %v455, 4294901760
    %457 = vmatpush1.msra.mxu0 %v456
    %458 = vmatprep.subr.mxu0 0.0
    %v459 = vand.u32 %v29, 4294901760
    %v460 = vsub.f32 %v29, %v459
    %v461 = vand.u32 %v460, 4294901760
    %462 = vmatpush1.msra.mxu0 %v461
    %463 = vmatprep.subr.mxu0 0.0
    %v464 = vand.u32 %v30, 4294901760
    %v465 = vsub.f32 %v30, %v464
    %v466 = vand.u32 %v465, 4294901760
    %467 = vmatpush1.msra.mxu0 %v466
    %468 = vmatprep.subr.mxu0 0.0
    %469 = vmatpush1.msra.mxu0 0.0
    %470 = vmatprep.subr.mxu0 0.0
    %471 = vmatpush1.msra.mxu0 0.0
    %472 = vmatprep.subr.mxu0 0.0
    %473 = vmatpush1.msra.mxu0 0.0
    %474 = vmatprep.subr.mxu0 0.0
    %475 = vmatpush1.msra.mxu0 0.0
    %476 = vmatprep.subr.mxu0 0.0
    %477 = vmatpush1.msra.mxu0 0.0
    %478 = vmatprep.subr.mxu0 0.0
    %479 = vmatpush1.msra.mxu0 0.0
    %480 = vmatprep.subr.mxu0 0.0
    %481 = vmatpush1.msra.mxu0 0.0
    %482 = vmatprep.subr.mxu0 0.0
    %483 = vmatpush1.msra.mxu0 0.0
    %484 = vmatprep.subr.mxu0 0.0
    %485 = vmatpush1.msra.mxu0 0.0
    %486 = vmatprep.subr.mxu0 0.0
    %487 = vmatpush1.msra.mxu0 0.0
    %488 = vmatprep.subr.mxu0 0.0
    %489 = vmatpush1.msra.mxu0 0.0
    %490 = vmatprep.subr.mxu0 0.0
    %491 = vmatpush1.msra.mxu0 0.0
    %492 = vmatprep.subr.mxu0 0.0
    %493 = vmatpush1.msra.mxu0 0.0
    %494 = vmatprep.subr.mxu0 0.0
    %495 = vmatpush1.msra.mxu0 0.0
    %496 = vmatprep.subr.mxu0 0.0
    %497 = vmatpush1.msra.mxu0 0.0
    %498 = vmatprep.subr.mxu0 0.0
    %499 = vmatpush1.msra.mxu0 0.0
    %500 = vmatprep.subr.mxu0 0.0
    %501 = vmatpush1.msra.mxu0 0.0
    %502 = vmatprep.subr.mxu0 0.0
    %503 = vmatpush1.msra.mxu0 0.0
    %504 = vmatprep.subr.mxu0 0.0
    %505 = vmatpush1.msra.mxu0 0.0
    %506 = vmatprep.subr.mxu0 0.0
    %507 = vmatpush1.msra.mxu0 0.0
    %508 = vmatprep.subr.mxu0 0.0
    %509 = vmatpush1.msra.mxu0 0.0
    %510 = vmatprep.subr.mxu0 0.0
    %511 = vmatpush1.msra.mxu0 0.0
    %512 = vmatprep.subr.mxu0 0.0
    %513 = vmatpush1.msra.mxu0 0.0
    %514 = vmatprep.subr.mxu0 0.0
    %515 = vmatpush1.msra.mxu0 0.0
    %516 = vmatprep.subr.mxu0 0.0
    %517 = vmatpush1.msra.mxu0 0.0
    %518 = vmatprep.subr.mxu0 0.0
    %519 = vmatpush1.msra.mxu0 0.0
    %520 = vmatprep.subr.mxu0 0.0
    %521 = vmatpush1.msra.mxu0 0.0
    %522 = vmatprep.subr.mxu0 0.0
    %523 = vmatpush1.msra.mxu0 0.0
    %524 = vmatprep.mubr.f32.mxu0 0.0
    %v525 = vand.u32 %v85, 4294901760
    %526 = vmatmul.mubr.f32.gmra.mrb[0].mxu0 %v525
    %v527 = vpop.f32.mrb[0].mxu0
    %v528 = vadd.f32 %v437, %v527
    %v529 = vpop.f32.mrb[0].mxu0
    %530 = vmatprep.mubr.f32.mxu0 0.0
    %v531 = vand.u32 %v88, 4294901760
    %532 = vmatmul.mubr.f32.gmra.mrb[0].mxu0 %v531
    %v533 = vpop.f32.mrb[0].mxu0
    %v534 = vadd.f32 %v445, %v533
    %v535 = vpop.f32.mrb[0].mxu0
    %536 = vdwg.mxu0
    %537 = vmatprep.subr.mxu0 0.0
    %v538 = vand.u32 %v27, 4294901760
    %539 = vmatpush1.msra.mxu0 %v538
    %540 = vmatprep.subr.mxu0 0.0
    %v541 = vand.u32 %v28, 4294901760
    %542 = vmatpush1.msra.mxu0 %v541
    %543 = vmatprep.subr.mxu0 0.0
    %v544 = vand.u32 %v29, 4294901760
    %545 = vmatpush1.msra.mxu0 %v544
    %546 = vmatprep.subr.mxu0 0.0
    %v547 = vand.u32 %v30, 4294901760
    %548 = vmatpush1.msra.mxu0 %v547
    %549 = vmatprep.subr.mxu0 0.0
    %550 = vmatpush1.msra.mxu0 0.0
    %551 = vmatprep.subr.mxu0 0.0
    %552 = vmatpush1.msra.mxu0 0.0
    %553 = vmatprep.subr.mxu0 0.0
    %554 = vmatpush1.msra.mxu0 0.0
    %555 = vmatprep.subr.mxu0 0.0
    %556 = vmatpush1.msra.mxu0 0.0
    %557 = vmatprep.subr.mxu0 0.0
    %558 = vmatpush1.msra.mxu0 0.0
    %559 = vmatprep.subr.mxu0 0.0
    %560 = vmatpush1.msra.mxu0 0.0
    %561 = vmatprep.subr.mxu0 0.0
    %562 = vmatpush1.msra.mxu0 0.0
    %563 = vmatprep.subr.mxu0 0.0
    %564 = vmatpush1.msra.mxu0 0.0
    %565 = vmatprep.subr.mxu0 0.0
    %566 = vmatpush1.msra.mxu0 0.0
    %567 = vmatprep.subr.mxu0 0.0
    %568 = vmatpush1.msra.mxu0 0.0
    %569 = vmatprep.subr.mxu0 0.0
    %570 = vmatpush1.msra.mxu0 0.0
    %571 = vmatprep.subr.mxu0 0.0
    %572 = vmatpush1.msra.mxu0 0.0
    %573 = vmatprep.subr.mxu0 0.0
    %574 = vmatpush1.msra.mxu0 0.0
    %575 = vmatprep.subr.mxu0 0.0
    %576 = vmatpush1.msra.mxu0 0.0
    %577 = vmatprep.subr.mxu0 0.0
    %578 = vmatpush1.msra.mxu0 0.0
    %579 = vmatprep.subr.mxu0 0.0
    %580 = vmatpush1.msra.mxu0 0.0
    %581 = vmatprep.subr.mxu0 0.0
    %582 = vmatpush1.msra.mxu0 0.0
    %583 = vmatprep.subr.mxu0 0.0
    %584 = vmatpush1.msra.mxu0 0.0
    %585 = vmatprep.subr.mxu0 0.0
    %586 = vmatpush1.msra.mxu0 0.0
    %587 = vmatprep.subr.mxu0 0.0
    %588 = vmatpush1.msra.mxu0 0.0
    %589 = vmatprep.subr.mxu0 0.0
    %590 = vmatpush1.msra.mxu0 0.0
    %591 = vmatprep.subr.mxu0 0.0
    %592 = vmatpush1.msra.mxu0 0.0
    %593 = vmatprep.subr.mxu0 0.0
    %594 = vmatpush1.msra.mxu0 0.0
    %595 = vmatprep.subr.mxu0 0.0
    %596 = vmatpush1.msra.mxu0 0.0
    %597 = vmatprep.subr.mxu0 0.0
    %598 = vmatpush1.msra.mxu0 0.0
    %599 = vmatprep.subr.mxu0 0.0
    %600 = vmatpush1.msra.mxu0 0.0
    %601 = vmatprep.subr.mxu0 0.0
    %602 = vmatpush1.msra.mxu0 0.0
    %603 = vmatprep.subr.mxu0 0.0
    %604 = vmatpush1.msra.mxu0 0.0
    %605 = vmatprep.mubr.f32.mxu0 0.0
    %v606 = vand.u32 %v85, 4294901760
    %607 = vmatmul.mubr.f32.gmra.mrb[0].mxu0 %v606
    %v608 = vpop.f32.mrb[0].mxu0
    %v609 = vadd.f32 %v528, %v608
    %v610 = vpop.f32.mrb[0].mxu0
    %611 = vmatprep.mubr.f32.mxu0 0.0
    %v612 = vand.u32 %v88, 4294901760
    %613 = vmatmul.mubr.f32.gmra.mrb[0].mxu0 %v612
    %v614 = vpop.f32.mrb[0].mxu0
    %v615 = vadd.f32 %v534, %v614
    %v616 = vpop.f32.mrb[0].mxu0
    %617 = vdwg.mxu0
    %626 = vrot.lane.b32.xlu0 %v42, 32
    %v627 = vpop.permute.xlu0 %626
    %628 = vrot.lane.b32.xlu0 %v43, 32
    %v629 = vpop.permute.xlu0 %628
    %630 = vrot.lane.b32.xlu0 %v44, 32
    %v631 = vpop.permute.xlu0 %630
    %632 = vrot.lane.b32.xlu0 %v45, 32
    %v633 = vpop.permute.xlu0 %632
    %634 = vrot.lane.b32.xlu0 %v46, 32
    %v635 = vpop.permute.xlu0 %634
    %636 = vrot.lane.b32.xlu0 %v47, 32
    %v637 = vpop.permute.xlu0 %636
    %638 = vrot.lane.b32.xlu0 %v48, 32
    %v639 = vpop.permute.xlu0 %638
    %640 = vrot.lane.b32.xlu0 %v49, 32
    %v641 = vpop.permute.xlu0 %640
    %v650 = vmul.f32 %v609, %v627
    %v651 = vmul.f32 %v615, %v629
    %v652 = vmul.f32 %v609, %v631
    %v653 = vmul.f32 %v615, %v633
    %v654 = vmul.f32 %v609, %v635
    %v655 = vmul.f32 %v615, %v637
    %v656 = vmul.f32 %v609, %v639
    %v657 = vmul.f32 %v615, %v641
    %666 = vrot.lane.b32.xlu0 %v650, 96
    %v667 = vpop.permute.xlu0 %666
    %668 = vrot.lane.b32.xlu0 %v651, 96
    %v669 = vpop.permute.xlu0 %668
    %670 = vrot.lane.b32.xlu0 %v652, 96
    %v671 = vpop.permute.xlu0 %670
    %672 = vrot.lane.b32.xlu0 %v653, 96
    %v673 = vpop.permute.xlu0 %672
    %674 = vrot.lane.b32.xlu0 %v654, 96
    %v675 = vpop.permute.xlu0 %674
    %676 = vrot.lane.b32.xlu0 %v655, 96
    %v677 = vpop.permute.xlu0 %676
    %678 = vrot.lane.b32.xlu0 %v656, 96
    %v679 = vpop.permute.xlu0 %678
    %680 = vrot.lane.b32.xlu0 %v657, 96
    %v681 = vpop.permute.xlu0 %680
    %v683 = vsel %vm52, %v609, 0
    %v686 = vsel %vm52, %v615, 0
    %v688 = vsel %vm52, %v667, 0
    %v690 = vsel %vm52, %v669, 0
    %v692 = vsel %vm52, %v671, 0
    %v694 = vsel %vm52, %v673, 0
    %v696 = vsel %vm52, %v675, 0
    %v698 = vsel %vm52, %v677, 0
    %v700 = vsel %vm52, %v679, 0
    %v702 = vsel %vm52, %v681, 0
    %704 = vmatprep.subr.mxu0 0.0
    %v705 = vand.u32 %v688, 4294901760
    %706 = vmatpush1.xpose.msra.mxu0 %v705
    %707 = vmatprep.subr.mxu0 0.0
    %v708 = vand.u32 %v690, 4294901760
    %709 = vmatpush1.xpose.msra.mxu0 %v708
    %710 = vmatprep.subr.mxu0 0.0
    %v711 = vand.u32 %v692, 4294901760
    %712 = vmatpush1.xpose.msra.mxu0 %v711
    %713 = vmatprep.subr.mxu0 0.0
    %v714 = vand.u32 %v694, 4294901760
    %715 = vmatpush1.xpose.msra.mxu0 %v714
    %716 = vmatprep.subr.mxu0 0.0
    %v717 = vand.u32 %v696, 4294901760
    %718 = vmatpush1.xpose.msra.mxu0 %v717
    %719 = vmatprep.subr.mxu0 0.0
    %v720 = vand.u32 %v698, 4294901760
    %721 = vmatpush1.xpose.msra.mxu0 %v720
    %722 = vmatprep.subr.mxu0 0.0
    %v723 = vand.u32 %v700, 4294901760
    %724 = vmatpush1.xpose.msra.mxu0 %v723
    %725 = vmatprep.subr.mxu0 0.0
    %v726 = vand.u32 %v702, 4294901760
    %727 = vmatpush1.xpose.msra.mxu0 %v726
    %728 = vmatprep.subr.mxu0 0.0
    %729 = vmatpush1.xpose.msra.mxu0 0.0
    %730 = vmatprep.subr.mxu0 0.0
    %731 = vmatpush1.xpose.msra.mxu0 0.0
    %732 = vmatprep.subr.mxu0 0.0
    %733 = vmatpush1.xpose.msra.mxu0 0.0
    %734 = vmatprep.subr.mxu0 0.0
    %735 = vmatpush1.xpose.msra.mxu0 0.0
    %736 = vmatprep.subr.mxu0 0.0
    %737 = vmatpush1.xpose.msra.mxu0 0.0
    %738 = vmatprep.subr.mxu0 0.0
    %739 = vmatpush1.xpose.msra.mxu0 0.0
    %740 = vmatprep.subr.mxu0 0.0
    %741 = vmatpush1.xpose.msra.mxu0 0.0
    %742 = vmatprep.subr.mxu0 0.0
    %743 = vmatpush1.xpose.msra.mxu0 0.0
    %744 = vmatprep.subr.mxu0 0.0
    %745 = vmatpush1.xpose.msra.mxu0 0.0
    %746 = vmatprep.subr.mxu0 0.0
    %747 = vmatpush1.xpose.msra.mxu0 0.0
    %748 = vmatprep.subr.mxu0 0.0
    %749 = vmatpush1.xpose.msra.mxu0 0.0
    %750 = vmatprep.subr.mxu0 0.0
    %751 = vmatpush1.xpose.msra.mxu0 0.0
    %752 = vmatprep.subr.mxu0 0.0
    %753 = vmatpush1.xpose.msra.mxu0 0.0
    %754 = vmatprep.subr.mxu0 0.0
    %755 = vmatpush1.xpose.msra.mxu0 0.0
    %756 = vmatprep.subr.mxu0 0.0
    %757 = vmatpush1.xpose.msra.mxu0 0.0
    %758 = vmatprep.subr.mxu0 0.0
    %759 = vmatpush1.xpose.msra.mxu0 0.0
    %760 = vmatprep.subr.mxu0 0.0
    %761 = vmatpush1.xpose.msra.mxu0 0.0
    %762 = vmatprep.subr.mxu0 0.0
    %763 = vmatpush1.xpose.msra.mxu0 0.0
    %764 = vmatprep.subr.mxu0 0.0
    %765 = vmatpush1.xpose.msra.mxu0 0.0
    %766 = vmatprep.subr.mxu0 0.0
    %767 = vmatpush1.xpose.msra.mxu0 0.0
    %768 = vmatprep.subr.mxu0 0.0
    %769 = vmatpush1.xpose.msra.mxu0 0.0
    %770 = vmatprep.subr.mxu0 0.0
    %771 = vmatpush1.xpose.msra.mxu0 0.0
    %772 = vmatprep.subr.mxu0 0.0
    %773 = vmatpush1.xpose.msra.mxu0 0.0
    %774 = vmatprep.subr.mxu0 0.0
    %775 = vmatpush1.xpose.msra.mxu0 0.0
    %776 = vmatprep.mubr.f32.mxu0 0.0
    %v777 = vand.u32 %v683, 4294901760
    %v778 = vsub.f32 %v683, %v777
    %v779 = vand.u32 %v778, 4294901760
    %v780 = vsub.f32 %v778, %v779
    %v781 = vand.u32 %v780, 4294901760
    %782 = vmatmul.mubr.f32.gmra.mrb[0].mxu0 %v781
    %v783 = vpop.f32.mrb[0].mxu0
    %v784 = vadd.f32 %v50, %v783
    %v785 = vpop.f32.mrb[0].mxu0
    %786 = vmatprep.mubr.f32.mxu0 0.0
    %v787 = vand.u32 %v686, 4294901760
    %v788 = vsub.f32 %v686, %v787
    %v789 = vand.u32 %v788, 4294901760
    %v790 = vsub.f32 %v788, %v789
    %v791 = vand.u32 %v790, 4294901760
    %792 = vmatmul.mubr.f32.gmra.mrb[0].mxu0 %v791
    %v793 = vpop.f32.mrb[0].mxu0
    %v794 = vadd.f32 %v51, %v793
    %v795 = vpop.f32.mrb[0].mxu0
    %796 = vdwg.mxu0
    %797 = vmatprep.subr.mxu0 0.0
    %v798 = vand.u32 %v688, 4294901760
    %v799 = vsub.f32 %v688, %v798
    %v800 = vand.u32 %v799, 4294901760
    %v801 = vsub.f32 %v799, %v800
    %v802 = vand.u32 %v801, 4294901760
    %803 = vmatpush1.xpose.msra.mxu0 %v802
    %804 = vmatprep.subr.mxu0 0.0
    %v805 = vand.u32 %v690, 4294901760
    %v806 = vsub.f32 %v690, %v805
    %v807 = vand.u32 %v806, 4294901760
    %v808 = vsub.f32 %v806, %v807
    %v809 = vand.u32 %v808, 4294901760
    %810 = vmatpush1.xpose.msra.mxu0 %v809
    %811 = vmatprep.subr.mxu0 0.0
    %v812 = vand.u32 %v692, 4294901760
    %v813 = vsub.f32 %v692, %v812
    %v814 = vand.u32 %v813, 4294901760
    %v815 = vsub.f32 %v813, %v814
    %v816 = vand.u32 %v815, 4294901760
    %817 = vmatpush1.xpose.msra.mxu0 %v816
    %818 = vmatprep.subr.mxu0 0.0
    %v819 = vand.u32 %v694, 4294901760
    %v820 = vsub.f32 %v694, %v819
    %v821 = vand.u32 %v820, 4294901760
    %v822 = vsub.f32 %v820, %v821
    %v823 = vand.u32 %v822, 4294901760
    %824 = vmatpush1.xpose.msra.mxu0 %v823
    %825 = vmatprep.subr.mxu0 0.0
    %v826 = vand.u32 %v696, 4294901760
    %v827 = vsub.f32 %v696, %v826
    %v828 = vand.u32 %v827, 4294901760
    %v829 = vsub.f32 %v827, %v828
    %v830 = vand.u32 %v829, 4294901760
    %831 = vmatpush1.xpose.msra.mxu0 %v830
    %832 = vmatprep.subr.mxu0 0.0
    %v833 = vand.u32 %v698, 4294901760
    %v834 = vsub.f32 %v698, %v833
    %v835 = vand.u32 %v834, 4294901760
    %v836 = vsub.f32 %v834, %v835
    %v837 = vand.u32 %v836, 4294901760
    %838 = vmatpush1.xpose.msra.mxu0 %v837
    %839 = vmatprep.subr.mxu0 0.0
    %v840 = vand.u32 %v700, 4294901760
    %v841 = vsub.f32 %v700, %v840
    %v842 = vand.u32 %v841, 4294901760
    %v843 = vsub.f32 %v841, %v842
    %v844 = vand.u32 %v843, 4294901760
    %845 = vmatpush1.xpose.msra.mxu0 %v844
    %846 = vmatprep.subr.mxu0 0.0
    %v847 = vand.u32 %v702, 4294901760
    %v848 = vsub.f32 %v702, %v847
    %v849 = vand.u32 %v848, 4294901760
    %v850 = vsub.f32 %v848, %v849
    %v851 = vand.u32 %v850, 4294901760
    %852 = vmatpush1.xpose.msra.mxu0 %v851
    %853 = vmatprep.subr.mxu0 0.0
    %854 = vmatpush1.xpose.msra.mxu0 0.0
    %855 = vmatprep.subr.mxu0 0.0
    %856 = vmatpush1.xpose.msra.mxu0 0.0
    %857 = vmatprep.subr.mxu0 0.0
    %858 = vmatpush1.xpose.msra.mxu0 0.0
    %859 = vmatprep.subr.mxu0 0.0
    %860 = vmatpush1.xpose.msra.mxu0 0.0
    %861 = vmatprep.subr.mxu0 0.0
    %862 = vmatpush1.xpose.msra.mxu0 0.0
    %863 = vmatprep.subr.mxu0 0.0
    %864 = vmatpush1.xpose.msra.mxu0 0.0
    %865 = vmatprep.subr.mxu0 0.0
    %866 = vmatpush1.xpose.msra.mxu0 0.0
    %867 = vmatprep.subr.mxu0 0.0
    %868 = vmatpush1.xpose.msra.mxu0 0.0
    %869 = vmatprep.subr.mxu0 0.0
    %870 = vmatpush1.xpose.msra.mxu0 0.0
    %871 = vmatprep.subr.mxu0 0.0
    %872 = vmatpush1.xpose.msra.mxu0 0.0
    %873 = vmatprep.subr.mxu0 0.0
    %874 = vmatpush1.xpose.msra.mxu0 0.0
    %875 = vmatprep.subr.mxu0 0.0
    %876 = vmatpush1.xpose.msra.mxu0 0.0
    %877 = vmatprep.subr.mxu0 0.0
    %878 = vmatpush1.xpose.msra.mxu0 0.0
    %879 = vmatprep.subr.mxu0 0.0
    %880 = vmatpush1.xpose.msra.mxu0 0.0
    %881 = vmatprep.subr.mxu0 0.0
    %882 = vmatpush1.xpose.msra.mxu0 0.0
    %883 = vmatprep.subr.mxu0 0.0
    %884 = vmatpush1.xpose.msra.mxu0 0.0
    %885 = vmatprep.subr.mxu0 0.0
    %886 = vmatpush1.xpose.msra.mxu0 0.0
    %887 = vmatprep.subr.mxu0 0.0
    %888 = vmatpush1.xpose.msra.mxu0 0.0
    %889 = vmatprep.subr.mxu0 0.0
    %890 = vmatpush1.xpose.msra.mxu0 0.0
    %891 = vmatprep.subr.mxu0 0.0
    %892 = vmatpush1.xpose.msra.mxu0 0.0
    %893 = vmatprep.subr.mxu0 0.0
    %894 = vmatpush1.xpose.msra.mxu0 0.0
    %895 = vmatprep.subr.mxu0 0.0
    %896 = vmatpush1.xpose.msra.mxu0 0.0
    %897 = vmatprep.subr.mxu0 0.0
    %898 = vmatpush1.xpose.msra.mxu0 0.0
    %899 = vmatprep.subr.mxu0 0.0
    %900 = vmatpush1.xpose.msra.mxu0 0.0
    %901 = vmatprep.mubr.f32.mxu0 0.0
    %v902 = vand.u32 %v683, 4294901760
    %903 = vmatmul.mubr.f32.gmra.mrb[0].mxu0 %v902
    %v904 = vpop.f32.mrb[0].mxu0
    %v905 = vadd.f32 %v784, %v904
    %v906 = vpop.f32.mrb[0].mxu0
    %907 = vmatprep.mubr.f32.mxu0 0.0
    %v908 = vand.u32 %v686, 4294901760
    %909 = vmatmul.mubr.f32.gmra.mrb[0].mxu0 %v908
    %v910 = vpop.f32.mrb[0].mxu0
    %v911 = vadd.f32 %v794, %v910
    %v912 = vpop.f32.mrb[0].mxu0
    %913 = vdwg.mxu0
    %914 = vmatprep.subr.mxu0 0.0
    %v915 = vand.u32 %v688, 4294901760
    %v916 = vsub.f32 %v688, %v915
    %917 = vmatpush1.xpose.msra.mxu0 %v916
    %918 = vmatprep.subr.mxu0 0.0
    %v919 = vand.u32 %v690, 4294901760
    %v920 = vsub.f32 %v690, %v919
    %921 = vmatpush1.xpose.msra.mxu0 %v920
    %922 = vmatprep.subr.mxu0 0.0
    %v923 = vand.u32 %v692, 4294901760
    %v924 = vsub.f32 %v692, %v923
    %925 = vmatpush1.xpose.msra.mxu0 %v924
    %926 = vmatprep.subr.mxu0 0.0
    %v927 = vand.u32 %v694, 4294901760
    %v928 = vsub.f32 %v694, %v927
    %929 = vmatpush1.xpose.msra.mxu0 %v928
    %930 = vmatprep.subr.mxu0 0.0
    %v931 = vand.u32 %v696, 4294901760
    %v932 = vsub.f32 %v696, %v931
    %933 = vmatpush1.xpose.msra.mxu0 %v932
    %934 = vmatprep.subr.mxu0 0.0
    %v935 = vand.u32 %v698, 4294901760
    %v936 = vsub.f32 %v698, %v935
    %937 = vmatpush1.xpose.msra.mxu0 %v936
    %938 = vmatprep.subr.mxu0 0.0
    %v939 = vand.u32 %v700, 4294901760
    %v940 = vsub.f32 %v700, %v939
    %941 = vmatpush1.xpose.msra.mxu0 %v940
    %942 = vmatprep.subr.mxu0 0.0
    %v943 = vand.u32 %v702, 4294901760
    %v944 = vsub.f32 %v702, %v943
    %945 = vmatpush1.xpose.msra.mxu0 %v944
    %946 = vmatprep.subr.mxu0 0.0
    %947 = vmatpush1.xpose.msra.mxu0 0.0
    %948 = vmatprep.subr.mxu0 0.0
    %949 = vmatpush1.xpose.msra.mxu0 0.0
    %950 = vmatprep.subr.mxu0 0.0
    %951 = vmatpush1.xpose.msra.mxu0 0.0
    %952 = vmatprep.subr.mxu0 0.0
    %953 = vmatpush1.xpose.msra.mxu0 0.0
    %954 = vmatprep.subr.mxu0 0.0
    %955 = vmatpush1.xpose.msra.mxu0 0.0
    %956 = vmatprep.subr.mxu0 0.0
    %957 = vmatpush1.xpose.msra.mxu0 0.0
    %958 = vmatprep.subr.mxu0 0.0
    %959 = vmatpush1.xpose.msra.mxu0 0.0
    %960 = vmatprep.subr.mxu0 0.0
    %961 = vmatpush1.xpose.msra.mxu0 0.0
    %962 = vmatprep.subr.mxu0 0.0
    %963 = vmatpush1.xpose.msra.mxu0 0.0
    %964 = vmatprep.subr.mxu0 0.0
    %965 = vmatpush1.xpose.msra.mxu0 0.0
    %966 = vmatprep.subr.mxu0 0.0
    %967 = vmatpush1.xpose.msra.mxu0 0.0
    %968 = vmatprep.subr.mxu0 0.0
    %969 = vmatpush1.xpose.msra.mxu0 0.0
    %970 = vmatprep.subr.mxu0 0.0
    %971 = vmatpush1.xpose.msra.mxu0 0.0
    %972 = vmatprep.subr.mxu0 0.0
    %973 = vmatpush1.xpose.msra.mxu0 0.0
    %974 = vmatprep.subr.mxu0 0.0
    %975 = vmatpush1.xpose.msra.mxu0 0.0
    %976 = vmatprep.subr.mxu0 0.0
    %977 = vmatpush1.xpose.msra.mxu0 0.0
    %978 = vmatprep.subr.mxu0 0.0
    %979 = vmatpush1.xpose.msra.mxu0 0.0
    %980 = vmatprep.subr.mxu0 0.0
    %981 = vmatpush1.xpose.msra.mxu0 0.0
    %982 = vmatprep.subr.mxu0 0.0
    %983 = vmatpush1.xpose.msra.mxu0 0.0
    %984 = vmatprep.subr.mxu0 0.0
    %985 = vmatpush1.xpose.msra.mxu0 0.0
    %986 = vmatprep.subr.mxu0 0.0
    %987 = vmatpush1.xpose.msra.mxu0 0.0
    %988 = vmatprep.subr.mxu0 0.0
    %989 = vmatpush1.xpose.msra.mxu0 0.0
    %990 = vmatprep.subr.mxu0 0.0
    %991 = vmatpush1.xpose.msra.mxu0 0.0
    %992 = vmatprep.subr.mxu0 0.0
    %993 = vmatpush1.xpose.msra.mxu0 0.0
    %994 = vmatprep.mubr.f32.mxu0 0.0
    %v995 = vand.u32 %v683, 4294901760
    %v996 = vsub.f32 %v683, %v995
    %997 = vmatmul.mubr.f32.gmra.mrb[0].mxu0 %v996
    %v998 = vpop.f32.mrb[0].mxu0
    %v999 = vadd.f32 %v905, %v998
    %v1000 = vpop.f32.mrb[0].mxu0
    %1001 = vmatprep.mubr.f32.mxu0 0.0
    %v1002 = vand.u32 %v686, 4294901760
    %v1003 = vsub.f32 %v686, %v1002
    %1004 = vmatmul.mubr.f32.gmra.mrb[0].mxu0 %v1003
    %v1005 = vpop.f32.mrb[0].mxu0
    %v1006 = vadd.f32 %v911, %v1005
    %v1007 = vpop.f32.mrb[0].mxu0
    %1008 = vdwg.mxu0
    %1009 = vmatprep.subr.mxu0 0.0
    %v1010 = vand.u32 %v688, 4294901760
    %1011 = vmatpush1.xpose.msra.mxu0 %v1010
    %1012 = vmatprep.subr.mxu0 0.0
    %v1013 = vand.u32 %v690, 4294901760
    %1014 = vmatpush1.xpose.msra.mxu0 %v1013
    %1015 = vmatprep.subr.mxu0 0.0
    %v1016 = vand.u32 %v692, 4294901760
    %1017 = vmatpush1.xpose.msra.mxu0 %v1016
    %1018 = vmatprep.subr.mxu0 0.0
    %v1019 = vand.u32 %v694, 4294901760
    %1020 = vmatpush1.xpose.msra.mxu0 %v1019
    %1021 = vmatprep.subr.mxu0 0.0
    %v1022 = vand.u32 %v696, 4294901760
    %1023 = vmatpush1.xpose.msra.mxu0 %v1022
    %1024 = vmatprep.subr.mxu0 0.0
    %v1025 = vand.u32 %v698, 4294901760
    %1026 = vmatpush1.xpose.msra.mxu0 %v1025
    %1027 = vmatprep.subr.mxu0 0.0
    %v1028 = vand.u32 %v700, 4294901760
    %1029 = vmatpush1.xpose.msra.mxu0 %v1028
    %1030 = vmatprep.subr.mxu0 0.0
    %v1031 = vand.u32 %v702, 4294901760
    %1032 = vmatpush1.xpose.msra.mxu0 %v1031
    %1033 = vmatprep.subr.mxu0 0.0
    %1034 = vmatpush1.xpose.msra.mxu0 0.0
    %1035 = vmatprep.subr.mxu0 0.0
    %1036 = vmatpush1.xpose.msra.mxu0 0.0
    %1037 = vmatprep.subr.mxu0 0.0
    %1038 = vmatpush1.xpose.msra.mxu0 0.0
    %1039 = vmatprep.subr.mxu0 0.0
    %1040 = vmatpush1.xpose.msra.mxu0 0.0
    %1041 = vmatprep.subr.mxu0 0.0
    %1042 = vmatpush1.xpose.msra.mxu0 0.0
    %1043 = vmatprep.subr.mxu0 0.0
    %1044 = vmatpush1.xpose.msra.mxu0 0.0
    %1045 = vmatprep.subr.mxu0 0.0
    %1046 = vmatpush1.xpose.msra.mxu0 0.0
    %1047 = vmatprep.subr.mxu0 0.0
    %1048 = vmatpush1.xpose.msra.mxu0 0.0
    %1049 = vmatprep.subr.mxu0 0.0
    %1050 = vmatpush1.xpose.msra.mxu0 0.0
    %1051 = vmatprep.subr.mxu0 0.0
    %1052 = vmatpush1.xpose.msra.mxu0 0.0
    %1053 = vmatprep.subr.mxu0 0.0
    %1054 = vmatpush1.xpose.msra.mxu0 0.0
    %1055 = vmatprep.subr.mxu0 0.0
    %1056 = vmatpush1.xpose.msra.mxu0 0.0
    %1057 = vmatprep.subr.mxu0 0.0
    %1058 = vmatpush1.xpose.msra.mxu0 0.0
    %1059 = vmatprep.subr.mxu0 0.0
    %1060 = vmatpush1.xpose.msra.mxu0 0.0
    %1061 = vmatprep.subr.mxu0 0.0
    %1062 = vmatpush1.xpose.msra.mxu0 0.0
    %1063 = vmatprep.subr.mxu0 0.0
    %1064 = vmatpush1.xpose.msra.mxu0 0.0
    %1065 = vmatprep.subr.mxu0 0.0
    %1066 = vmatpush1.xpose.msra.mxu0 0.0
    %1067 = vmatprep.subr.mxu0 0.0
    %1068 = vmatpush1.xpose.msra.mxu0 0.0
    %1069 = vmatprep.subr.mxu0 0.0
    %1070 = vmatpush1.xpose.msra.mxu0 0.0
    %1071 = vmatprep.subr.mxu0 0.0
    %1072 = vmatpush1.xpose.msra.mxu0 0.0
    %1073 = vmatprep.subr.mxu0 0.0
    %1074 = vmatpush1.xpose.msra.mxu0 0.0
    %1075 = vmatprep.subr.mxu0 0.0
    %1076 = vmatpush1.xpose.msra.mxu0 0.0
    %1077 = vmatprep.subr.mxu0 0.0
    %1078 = vmatpush1.xpose.msra.mxu0 0.0
    %1079 = vmatprep.subr.mxu0 0.0
    %1080 = vmatpush1.xpose.msra.mxu0 0.0
    %1081 = vmatprep.mubr.f32.mxu0 0.0
    %v1082 = vand.u32 %v683, 4294901760
    %v1083 = vsub.f32 %v683, %v1082
    %v1084 = vand.u32 %v1083, 4294901760
    %1085 = vmatmul.mubr.f32.gmra.mrb[0].mxu0 %v1084
    %v1086 = vpop.f32.mrb[0].mxu0
    %v1087 = vadd.f32 %v999, %v1086
    %v1088 = vpop.f32.mrb[0].mxu0
    %1089 = vmatprep.mubr.f32.mxu0 0.0
    %v1090 = vand.u32 %v686, 4294901760
    %v1091 = vsub.f32 %v686, %v1090
    %v1092 = vand.u32 %v1091, 4294901760
    %1093 = vmatmul.mubr.f32.gmra.mrb[0].mxu0 %v1092
    %v1094 = vpop.f32.mrb[0].mxu0
    %v1095 = vadd.f32 %v1006, %v1094
    %v1096 = vpop.f32.mrb[0].mxu0
    %1097 = vdwg.mxu0
    %1098 = vmatprep.subr.mxu0 0.0
    %v1099 = vand.u32 %v688, 4294901760
    %v1100 = vsub.f32 %v688, %v1099
    %v1101 = vand.u32 %v1100, 4294901760
    %1102 = vmatpush1.xpose.msra.mxu0 %v1101
    %1103 = vmatprep.subr.mxu0 0.0
    %v1104 = vand.u32 %v690, 4294901760
    %v1105 = vsub.f32 %v690, %v1104
    %v1106 = vand.u32 %v1105, 4294901760
    %1107 = vmatpush1.xpose.msra.mxu0 %v1106
    %1108 = vmatprep.subr.mxu0 0.0
    %v1109 = vand.u32 %v692, 4294901760
    %v1110 = vsub.f32 %v692, %v1109
    %v1111 = vand.u32 %v1110, 4294901760
    %1112 = vmatpush1.xpose.msra.mxu0 %v1111
    %1113 = vmatprep.subr.mxu0 0.0
    %v1114 = vand.u32 %v694, 4294901760
    %v1115 = vsub.f32 %v694, %v1114
    %v1116 = vand.u32 %v1115, 4294901760
    %1117 = vmatpush1.xpose.msra.mxu0 %v1116
    %1118 = vmatprep.subr.mxu0 0.0
    %v1119 = vand.u32 %v696, 4294901760
    %v1120 = vsub.f32 %v696, %v1119
    %v1121 = vand.u32 %v1120, 4294901760
    %1122 = vmatpush1.xpose.msra.mxu0 %v1121
    %1123 = vmatprep.subr.mxu0 0.0
    %v1124 = vand.u32 %v698, 4294901760
    %v1125 = vsub.f32 %v698, %v1124
    %v1126 = vand.u32 %v1125, 4294901760
    %1127 = vmatpush1.xpose.msra.mxu0 %v1126
    %1128 = vmatprep.subr.mxu0 0.0
    %v1129 = vand.u32 %v700, 4294901760
    %v1130 = vsub.f32 %v700, %v1129
    %v1131 = vand.u32 %v1130, 4294901760
    %1132 = vmatpush1.xpose.msra.mxu0 %v1131
    %1133 = vmatprep.subr.mxu0 0.0
    %v1134 = vand.u32 %v702, 4294901760
    %v1135 = vsub.f32 %v702, %v1134
    %v1136 = vand.u32 %v1135, 4294901760
    %1137 = vmatpush1.xpose.msra.mxu0 %v1136
    %1138 = vmatprep.subr.mxu0 0.0
    %1139 = vmatpush1.xpose.msra.mxu0 0.0
    %1140 = vmatprep.subr.mxu0 0.0
    %1141 = vmatpush1.xpose.msra.mxu0 0.0
    %1142 = vmatprep.subr.mxu0 0.0
    %1143 = vmatpush1.xpose.msra.mxu0 0.0
    %1144 = vmatprep.subr.mxu0 0.0
    %1145 = vmatpush1.xpose.msra.mxu0 0.0
    %1146 = vmatprep.subr.mxu0 0.0
    %1147 = vmatpush1.xpose.msra.mxu0 0.0
    %1148 = vmatprep.subr.mxu0 0.0
    %1149 = vmatpush1.xpose.msra.mxu0 0.0
    %1150 = vmatprep.subr.mxu0 0.0
    %1151 = vmatpush1.xpose.msra.mxu0 0.0
    %1152 = vmatprep.subr.mxu0 0.0
    %1153 = vmatpush1.xpose.msra.mxu0 0.0
    %1154 = vmatprep.subr.mxu0 0.0
    %1155 = vmatpush1.xpose.msra.mxu0 0.0
    %1156 = vmatprep.subr.mxu0 0.0
    %1157 = vmatpush1.xpose.msra.mxu0 0.0
    %1158 = vmatprep.subr.mxu0 0.0
    %1159 = vmatpush1.xpose.msra.mxu0 0.0
    %1160 = vmatprep.subr.mxu0 0.0
    %1161 = vmatpush1.xpose.msra.mxu0 0.0
    %1162 = vmatprep.subr.mxu0 0.0
    %1163 = vmatpush1.xpose.msra.mxu0 0.0
    %1164 = vmatprep.subr.mxu0 0.0
    %1165 = vmatpush1.xpose.msra.mxu0 0.0
    %1166 = vmatprep.subr.mxu0 0.0
    %1167 = vmatpush1.xpose.msra.mxu0 0.0
    %1168 = vmatprep.subr.mxu0 0.0
    %1169 = vmatpush1.xpose.msra.mxu0 0.0
    %1170 = vmatprep.subr.mxu0 0.0
    %1171 = vmatpush1.xpose.msra.mxu0 0.0
    %1172 = vmatprep.subr.mxu0 0.0
    %1173 = vmatpush1.xpose.msra.mxu0 0.0
    %1174 = vmatprep.subr.mxu0 0.0
    %1175 = vmatpush1.xpose.msra.mxu0 0.0
    %1176 = vmatprep.subr.mxu0 0.0
    %1177 = vmatpush1.xpose.msra.mxu0 0.0
    %1178 = vmatprep.subr.mxu0 0.0
    %1179 = vmatpush1.xpose.msra.mxu0 0.0
    %1180 = vmatprep.subr.mxu0 0.0
    %1181 = vmatpush1.xpose.msra.mxu0 0.0
    %1182 = vmatprep.subr.mxu0 0.0
    %1183 = vmatpush1.xpose.msra.mxu0 0.0
    %1184 = vmatprep.subr.mxu0 0.0
    %1185 = vmatpush1.xpose.msra.mxu0 0.0
    %1186 = vmatprep.mubr.f32.mxu0 0.0
    %v1187 = vand.u32 %v683, 4294901760
    %1188 = vmatmul.mubr.f32.gmra.mrb[0].mxu0 %v1187
    %v1189 = vpop.f32.mrb[0].mxu0
    %v1190 = vadd.f32 %v1087, %v1189
    %v1191 = vpop.f32.mrb[0].mxu0
    %1192 = vmatprep.mubr.f32.mxu0 0.0
    %v1193 = vand.u32 %v686, 4294901760
    %1194 = vmatmul.mubr.f32.gmra.mrb[0].mxu0 %v1193
    %v1195 = vpop.f32.mrb[0].mxu0
    %v1196 = vadd.f32 %v1095, %v1195
    %v1197 = vpop.f32.mrb[0].mxu0
    %1198 = vdwg.mxu0
    %1199 = vmatprep.subr.mxu0 0.0
    %v1200 = vand.u32 %v688, 4294901760
    %1201 = vmatpush1.xpose.msra.mxu0 %v1200
    %1202 = vmatprep.subr.mxu0 0.0
    %v1203 = vand.u32 %v690, 4294901760
    %1204 = vmatpush1.xpose.msra.mxu0 %v1203
    %1205 = vmatprep.subr.mxu0 0.0
    %v1206 = vand.u32 %v692, 4294901760
    %1207 = vmatpush1.xpose.msra.mxu0 %v1206
    %1208 = vmatprep.subr.mxu0 0.0
    %v1209 = vand.u32 %v694, 4294901760
    %1210 = vmatpush1.xpose.msra.mxu0 %v1209
    %1211 = vmatprep.subr.mxu0 0.0
    %v1212 = vand.u32 %v696, 4294901760
    %1213 = vmatpush1.xpose.msra.mxu0 %v1212
    %1214 = vmatprep.subr.mxu0 0.0
    %v1215 = vand.u32 %v698, 4294901760
    %1216 = vmatpush1.xpose.msra.mxu0 %v1215
    %1217 = vmatprep.subr.mxu0 0.0
    %v1218 = vand.u32 %v700, 4294901760
    %1219 = vmatpush1.xpose.msra.mxu0 %v1218
    %1220 = vmatprep.subr.mxu0 0.0
    %v1221 = vand.u32 %v702, 4294901760
    %1222 = vmatpush1.xpose.msra.mxu0 %v1221
    %1223 = vmatprep.subr.mxu0 0.0
    %1224 = vmatpush1.xpose.msra.mxu0 0.0
    %1225 = vmatprep.subr.mxu0 0.0
    %1226 = vmatpush1.xpose.msra.mxu0 0.0
    %1227 = vmatprep.subr.mxu0 0.0
    %1228 = vmatpush1.xpose.msra.mxu0 0.0
    %1229 = vmatprep.subr.mxu0 0.0
    %1230 = vmatpush1.xpose.msra.mxu0 0.0
    %1231 = vmatprep.subr.mxu0 0.0
    %1232 = vmatpush1.xpose.msra.mxu0 0.0
    %1233 = vmatprep.subr.mxu0 0.0
    %1234 = vmatpush1.xpose.msra.mxu0 0.0
    %1235 = vmatprep.subr.mxu0 0.0
    %1236 = vmatpush1.xpose.msra.mxu0 0.0
    %1237 = vmatprep.subr.mxu0 0.0
    %1238 = vmatpush1.xpose.msra.mxu0 0.0
    %1239 = vmatprep.subr.mxu0 0.0
    %1240 = vmatpush1.xpose.msra.mxu0 0.0
    %1241 = vmatprep.subr.mxu0 0.0
    %1242 = vmatpush1.xpose.msra.mxu0 0.0
    %1243 = vmatprep.subr.mxu0 0.0
    %1244 = vmatpush1.xpose.msra.mxu0 0.0
    %1245 = vmatprep.subr.mxu0 0.0
    %1246 = vmatpush1.xpose.msra.mxu0 0.0
    %1247 = vmatprep.subr.mxu0 0.0
    %1248 = vmatpush1.xpose.msra.mxu0 0.0
    %1249 = vmatprep.subr.mxu0 0.0
    %1250 = vmatpush1.xpose.msra.mxu0 0.0
    %1251 = vmatprep.subr.mxu0 0.0
    %1252 = vmatpush1.xpose.msra.mxu0 0.0
    %1253 = vmatprep.subr.mxu0 0.0
    %1254 = vmatpush1.xpose.msra.mxu0 0.0
    %1255 = vmatprep.subr.mxu0 0.0
    %1256 = vmatpush1.xpose.msra.mxu0 0.0
    %1257 = vmatprep.subr.mxu0 0.0
    %1258 = vmatpush1.xpose.msra.mxu0 0.0
    %1259 = vmatprep.subr.mxu0 0.0
    %1260 = vmatpush1.xpose.msra.mxu0 0.0
    %1261 = vmatprep.subr.mxu0 0.0
    %1262 = vmatpush1.xpose.msra.mxu0 0.0
    %1263 = vmatprep.subr.mxu0 0.0
    %1264 = vmatpush1.xpose.msra.mxu0 0.0
    %1265 = vmatprep.subr.mxu0 0.0
    %1266 = vmatpush1.xpose.msra.mxu0 0.0
    %1267 = vmatprep.subr.mxu0 0.0
    %1268 = vmatpush1.xpose.msra.mxu0 0.0
    %1269 = vmatprep.subr.mxu0 0.0
    %1270 = vmatpush1.xpose.msra.mxu0 0.0
    %1271 = vmatprep.mubr.f32.mxu0 0.0
    %v1272 = vand.u32 %v683, 4294901760
    %1273 = vmatmul.mubr.f32.gmra.mrb[0].mxu0 %v1272
    %v1274 = vpop.f32.mrb[0].mxu0
    %v1275 = vadd.f32 %v1190, %v1274
    %v1276 = vpop.f32.mrb[0].mxu0
    %1277 = vmatprep.mubr.f32.mxu0 0.0
    %v1278 = vand.u32 %v686, 4294901760
    %1279 = vmatmul.mubr.f32.gmra.mrb[0].mxu0 %v1278
    %v1280 = vpop.f32.mrb[0].mxu0
    %v1281 = vadd.f32 %v1196, %v1280
    %v1282 = vpop.f32.mrb[0].mxu0
    %1283 = vdwg.mxu0
    %vm1284 = vcmask 523264
    %v1285 = vsel %vm1284, %v1275, -inf
    %1286 = vmax.xlane.f32.xlu0 %v1285
    %v1287 = vpop.xlane.xlu0 %1286
    %v1288 = vsel %vm1284, %v1281, -inf
    %1289 = vmax.xlane.f32.xlu0 %v1288
    %v1290 = vpop.xlane.xlu0 %1289
    %v1291 = vsub.f32 %v1275, %v1287
    %v1292 = vsub.f32 %v1281, %v1290
    %v1293 = vmul.f32 %v1291, 1.442695
    %v1294 = vpow.pop %v1293
    %v1295 = vmul.f32 %v1292, 1.442695
    %v1296 = vpow.pop %v1295
    %1297 = vrot.lane.b32.xlu0 %v42, 64
    %v1298 = vpop.permute.xlu0 %1297
    %1299 = vrot.lane.b32.xlu0 %v43, 64
    %v1300 = vpop.permute.xlu0 %1299
    %1301 = vrot.lane.b32.xlu0 %v44, 64
    %v1302 = vpop.permute.xlu0 %1301
    %1303 = vrot.lane.b32.xlu0 %v45, 64
    %v1304 = vpop.permute.xlu0 %1303
    %1305 = vrot.lane.b32.xlu0 %v46, 64
    %v1306 = vpop.permute.xlu0 %1305
    %1307 = vrot.lane.b32.xlu0 %v47, 64
    %v1308 = vpop.permute.xlu0 %1307
    %1309 = vrot.lane.b32.xlu0 %v48, 64
    %v1310 = vpop.permute.xlu0 %1309
    %1311 = vrot.lane.b32.xlu0 %v49, 64
    %v1312 = vpop.permute.xlu0 %1311
    %v1322 = vsel %vm1284, %v1294, 0
    %v1325 = vsel %vm1284, %v1296, 0
    %1327 = vmatprep.subr.mxu0 0.0
    %v1328 = vand.u32 %v1298, 4294901760
    %1329 = vmatpush1.msra.mxu0 %v1328
    %1330 = vmatprep.subr.mxu0 0.0
    %v1331 = vand.u32 %v1300, 4294901760
    %1332 = vmatpush1.msra.mxu0 %v1331
    %1333 = vmatprep.subr.mxu0 0.0
    %v1334 = vand.u32 %v1302, 4294901760
    %1335 = vmatpush1.msra.mxu0 %v1334
    %1336 = vmatprep.subr.mxu0 0.0
    %v1337 = vand.u32 %v1304, 4294901760
    %1338 = vmatpush1.msra.mxu0 %v1337
    %1339 = vmatprep.subr.mxu0 0.0
    %v1340 = vand.u32 %v1306, 4294901760
    %1341 = vmatpush1.msra.mxu0 %v1340
    %1342 = vmatprep.subr.mxu0 0.0
    %v1343 = vand.u32 %v1308, 4294901760
    %1344 = vmatpush1.msra.mxu0 %v1343
    %1345 = vmatprep.subr.mxu0 0.0
    %v1346 = vand.u32 %v1310, 4294901760
    %1347 = vmatpush1.msra.mxu0 %v1346
    %1348 = vmatprep.subr.mxu0 0.0
    %v1349 = vand.u32 %v1312, 4294901760
    %1350 = vmatpush1.msra.mxu0 %v1349
    %1351 = vmatprep.subr.mxu0 0.0
    %1352 = vmatpush1.msra.mxu0 0.0
    %1353 = vmatprep.subr.mxu0 0.0
    %1354 = vmatpush1.msra.mxu0 0.0
    %1355 = vmatprep.subr.mxu0 0.0
    %1356 = vmatpush1.msra.mxu0 0.0
    %1357 = vmatprep.subr.mxu0 0.0
    %1358 = vmatpush1.msra.mxu0 0.0
    %1359 = vmatprep.subr.mxu0 0.0
    %1360 = vmatpush1.msra.mxu0 0.0
    %1361 = vmatprep.subr.mxu0 0.0
    %1362 = vmatpush1.msra.mxu0 0.0
    %1363 = vmatprep.subr.mxu0 0.0
    %1364 = vmatpush1.msra.mxu0 0.0
    %1365 = vmatprep.subr.mxu0 0.0
    %1366 = vmatpush1.msra.mxu0 0.0
    %1367 = vmatprep.subr.mxu0 0.0
    %1368 = vmatpush1.msra.mxu0 0.0
    %1369 = vmatprep.subr.mxu0 0.0
    %1370 = vmatpush1.msra.mxu0 0.0
    %1371 = vmatprep.subr.mxu0 0.0
    %1372 = vmatpush1.msra.mxu0 0.0
    %1373 = vmatprep.subr.mxu0 0.0
    %1374 = vmatpush1.msra.mxu0 0.0
    %1375 = vmatprep.subr.mxu0 0.0
    %1376 = vmatpush1.msra.mxu0 0.0
    %1377 = vmatprep.subr.mxu0 0.0
    %1378 = vmatpush1.msra.mxu0 0.0
    %1379 = vmatprep.subr.mxu0 0.0
    %1380 = vmatpush1.msra.mxu0 0.0
    %1381 = vmatprep.subr.mxu0 0.0
    %1382 = vmatpush1.msra.mxu0 0.0
    %1383 = vmatprep.subr.mxu0 0.0
    %1384 = vmatpush1.msra.mxu0 0.0
    %1385 = vmatprep.subr.mxu0 0.0
    %1386 = vmatpush1.msra.mxu0 0.0
    %1387 = vmatprep.subr.mxu0 0.0
    %1388 = vmatpush1.msra.mxu0 0.0
    %1389 = vmatprep.subr.mxu0 0.0
    %1390 = vmatpush1.msra.mxu0 0.0
    %1391 = vmatprep.subr.mxu0 0.0
    %1392 = vmatpush1.msra.mxu0 0.0
    %1393 = vmatprep.subr.mxu0 0.0
    %1394 = vmatpush1.msra.mxu0 0.0
    %1395 = vmatprep.subr.mxu0 0.0
    %1396 = vmatpush1.msra.mxu0 0.0
    %1397 = vmatprep.subr.mxu0 0.0
    %1398 = vmatpush1.msra.mxu0 0.0
    %1399 = vmatprep.mubr.f32.mxu0 0.0
    %v1400 = vand.u32 %v1322, 4294901760
    %v1401 = vsub.f32 %v1322, %v1400
    %v1402 = vand.u32 %v1401, 4294901760
    %v1403 = vsub.f32 %v1401, %v1402
    %v1404 = vand.u32 %v1403, 4294901760
    %1405 = vmatmul.mubr.f32.gmra.mrb[0].mxu0 %v1404
    %v1406 = vpop.f32.mrb[0].mxu0
    %v1407 = vadd.f32 0.0, %v1406
    %v1408 = vpop.f32.mrb[0].mxu0
    %1409 = vmatprep.mubr.f32.mxu0 0.0
    %v1410 = vand.u32 %v1325, 4294901760
    %v1411 = vsub.f32 %v1325, %v1410
    %v1412 = vand.u32 %v1411, 4294901760
    %v1413 = vsub.f32 %v1411, %v1412
    %v1414 = vand.u32 %v1413, 4294901760
    %1415 = vmatmul.mubr.f32.gmra.mrb[0].mxu0 %v1414
    %v1416 = vpop.f32.mrb[0].mxu0
    %v1417 = vadd.f32 0.0, %v1416
    %v1418 = vpop.f32.mrb[0].mxu0
    %1419 = vdwg.mxu0
    %1420 = vmatprep.subr.mxu0 0.0
    %v1421 = vand.u32 %v1298, 4294901760
    %v1422 = vsub.f32 %v1298, %v1421
    %v1423 = vand.u32 %v1422, 4294901760
    %v1424 = vsub.f32 %v1422, %v1423
    %v1425 = vand.u32 %v1424, 4294901760
    %1426 = vmatpush1.msra.mxu0 %v1425
    %1427 = vmatprep.subr.mxu0 0.0
    %v1428 = vand.u32 %v1300, 4294901760
    %v1429 = vsub.f32 %v1300, %v1428
    %v1430 = vand.u32 %v1429, 4294901760
    %v1431 = vsub.f32 %v1429, %v1430
    %v1432 = vand.u32 %v1431, 4294901760
    %1433 = vmatpush1.msra.mxu0 %v1432
    %1434 = vmatprep.subr.mxu0 0.0
    %v1435 = vand.u32 %v1302, 4294901760
    %v1436 = vsub.f32 %v1302, %v1435
    %v1437 = vand.u32 %v1436, 4294901760
    %v1438 = vsub.f32 %v1436, %v1437
    %v1439 = vand.u32 %v1438, 4294901760
    %1440 = vmatpush1.msra.mxu0 %v1439
    %1441 = vmatprep.subr.mxu0 0.0
    %v1442 = vand.u32 %v1304, 4294901760
    %v1443 = vsub.f32 %v1304, %v1442
    %v1444 = vand.u32 %v1443, 4294901760
    %v1445 = vsub.f32 %v1443, %v1444
    %v1446 = vand.u32 %v1445, 4294901760
    %1447 = vmatpush1.msra.mxu0 %v1446
    %1448 = vmatprep.subr.mxu0 0.0
    %v1449 = vand.u32 %v1306, 4294901760
    %v1450 = vsub.f32 %v1306, %v1449
    %v1451 = vand.u32 %v1450, 4294901760
    %v1452 = vsub.f32 %v1450, %v1451
    %v1453 = vand.u32 %v1452, 4294901760
    %1454 = vmatpush1.msra.mxu0 %v1453
    %1455 = vmatprep.subr.mxu0 0.0
    %v1456 = vand.u32 %v1308, 4294901760
    %v1457 = vsub.f32 %v1308, %v1456
    %v1458 = vand.u32 %v1457, 4294901760
    %v1459 = vsub.f32 %v1457, %v1458
    %v1460 = vand.u32 %v1459, 4294901760
    %1461 = vmatpush1.msra.mxu0 %v1460
    %1462 = vmatprep.subr.mxu0 0.0
    %v1463 = vand.u32 %v1310, 4294901760
    %v1464 = vsub.f32 %v1310, %v1463
    %v1465 = vand.u32 %v1464, 4294901760
    %v1466 = vsub.f32 %v1464, %v1465
    %v1467 = vand.u32 %v1466, 4294901760
    %1468 = vmatpush1.msra.mxu0 %v1467
    %1469 = vmatprep.subr.mxu0 0.0
    %v1470 = vand.u32 %v1312, 4294901760
    %v1471 = vsub.f32 %v1312, %v1470
    %v1472 = vand.u32 %v1471, 4294901760
    %v1473 = vsub.f32 %v1471, %v1472
    %v1474 = vand.u32 %v1473, 4294901760
    %1475 = vmatpush1.msra.mxu0 %v1474
    %1476 = vmatprep.subr.mxu0 0.0
    %1477 = vmatpush1.msra.mxu0 0.0
    %1478 = vmatprep.subr.mxu0 0.0
    %1479 = vmatpush1.msra.mxu0 0.0
    %1480 = vmatprep.subr.mxu0 0.0
    %1481 = vmatpush1.msra.mxu0 0.0
    %1482 = vmatprep.subr.mxu0 0.0
    %1483 = vmatpush1.msra.mxu0 0.0
    %1484 = vmatprep.subr.mxu0 0.0
    %1485 = vmatpush1.msra.mxu0 0.0
    %1486 = vmatprep.subr.mxu0 0.0
    %1487 = vmatpush1.msra.mxu0 0.0
    %1488 = vmatprep.subr.mxu0 0.0
    %1489 = vmatpush1.msra.mxu0 0.0
    %1490 = vmatprep.subr.mxu0 0.0
    %1491 = vmatpush1.msra.mxu0 0.0
    %1492 = vmatprep.subr.mxu0 0.0
    %1493 = vmatpush1.msra.mxu0 0.0
    %1494 = vmatprep.subr.mxu0 0.0
    %1495 = vmatpush1.msra.mxu0 0.0
    %1496 = vmatprep.subr.mxu0 0.0
    %1497 = vmatpush1.msra.mxu0 0.0
    %1498 = vmatprep.subr.mxu0 0.0
    %1499 = vmatpush1.msra.mxu0 0.0
    %1500 = vmatprep.subr.mxu0 0.0
    %1501 = vmatpush1.msra.mxu0 0.0
    %1502 = vmatprep.subr.mxu0 0.0
    %1503 = vmatpush1.msra.mxu0 0.0
    %1504 = vmatprep.subr.mxu0 0.0
    %1505 = vmatpush1.msra.mxu0 0.0
    %1506 = vmatprep.subr.mxu0 0.0
    %1507 = vmatpush1.msra.mxu0 0.0
    %1508 = vmatprep.subr.mxu0 0.0
    %1509 = vmatpush1.msra.mxu0 0.0
    %1510 = vmatprep.subr.mxu0 0.0
    %1511 = vmatpush1.msra.mxu0 0.0
    %1512 = vmatprep.subr.mxu0 0.0
    %1513 = vmatpush1.msra.mxu0 0.0
    %1514 = vmatprep.subr.mxu0 0.0
    %1515 = vmatpush1.msra.mxu0 0.0
    %1516 = vmatprep.subr.mxu0 0.0
    %1517 = vmatpush1.msra.mxu0 0.0
    %1518 = vmatprep.subr.mxu0 0.0
    %1519 = vmatpush1.msra.mxu0 0.0
    %1520 = vmatprep.subr.mxu0 0.0
    %1521 = vmatpush1.msra.mxu0 0.0
    %1522 = vmatprep.subr.mxu0 0.0
    %1523 = vmatpush1.msra.mxu0 0.0
    %1524 = vmatprep.mubr.f32.mxu0 0.0
    %v1525 = vand.u32 %v1322, 4294901760
    %1526 = vmatmul.mubr.f32.gmra.mrb[0].mxu0 %v1525
    %v1527 = vpop.f32.mrb[0].mxu0
    %v1528 = vadd.f32 %v1407, %v1527
    %v1529 = vpop.f32.mrb[0].mxu0
    %1530 = vmatprep.mubr.f32.mxu0 0.0
    %v1531 = vand.u32 %v1325, 4294901760
    %1532 = vmatmul.mubr.f32.gmra.mrb[0].mxu0 %v1531
    %v1533 = vpop.f32.mrb[0].mxu0
    %v1534 = vadd.f32 %v1417, %v1533
    %v1535 = vpop.f32.mrb[0].mxu0
    %1536 = vdwg.mxu0
    %1537 = vmatprep.subr.mxu0 0.0
    %v1538 = vand.u32 %v1298, 4294901760
    %v1539 = vsub.f32 %v1298, %v1538
    %1540 = vmatpush1.msra.mxu0 %v1539
    %1541 = vmatprep.subr.mxu0 0.0
    %v1542 = vand.u32 %v1300, 4294901760
    %v1543 = vsub.f32 %v1300, %v1542
    %1544 = vmatpush1.msra.mxu0 %v1543
    %1545 = vmatprep.subr.mxu0 0.0
    %v1546 = vand.u32 %v1302, 4294901760
    %v1547 = vsub.f32 %v1302, %v1546
    %1548 = vmatpush1.msra.mxu0 %v1547
    %1549 = vmatprep.subr.mxu0 0.0
    %v1550 = vand.u32 %v1304, 4294901760
    %v1551 = vsub.f32 %v1304, %v1550
    %1552 = vmatpush1.msra.mxu0 %v1551
    %1553 = vmatprep.subr.mxu0 0.0
    %v1554 = vand.u32 %v1306, 4294901760
    %v1555 = vsub.f32 %v1306, %v1554
    %1556 = vmatpush1.msra.mxu0 %v1555
    %1557 = vmatprep.subr.mxu0 0.0
    %v1558 = vand.u32 %v1308, 4294901760
    %v1559 = vsub.f32 %v1308, %v1558
    %1560 = vmatpush1.msra.mxu0 %v1559
    %1561 = vmatprep.subr.mxu0 0.0
    %v1562 = vand.u32 %v1310, 4294901760
    %v1563 = vsub.f32 %v1310, %v1562
    %1564 = vmatpush1.msra.mxu0 %v1563
    %1565 = vmatprep.subr.mxu0 0.0
    %v1566 = vand.u32 %v1312, 4294901760
    %v1567 = vsub.f32 %v1312, %v1566
    %1568 = vmatpush1.msra.mxu0 %v1567
    %1569 = vmatprep.subr.mxu0 0.0
    %1570 = vmatpush1.msra.mxu0 0.0
    %1571 = vmatprep.subr.mxu0 0.0
    %1572 = vmatpush1.msra.mxu0 0.0
    %1573 = vmatprep.subr.mxu0 0.0
    %1574 = vmatpush1.msra.mxu0 0.0
    %1575 = vmatprep.subr.mxu0 0.0
    %1576 = vmatpush1.msra.mxu0 0.0
    %1577 = vmatprep.subr.mxu0 0.0
    %1578 = vmatpush1.msra.mxu0 0.0
    %1579 = vmatprep.subr.mxu0 0.0
    %1580 = vmatpush1.msra.mxu0 0.0
    %1581 = vmatprep.subr.mxu0 0.0
    %1582 = vmatpush1.msra.mxu0 0.0
    %1583 = vmatprep.subr.mxu0 0.0
    %1584 = vmatpush1.msra.mxu0 0.0
    %1585 = vmatprep.subr.mxu0 0.0
    %1586 = vmatpush1.msra.mxu0 0.0
    %1587 = vmatprep.subr.mxu0 0.0
    %1588 = vmatpush1.msra.mxu0 0.0
    %1589 = vmatprep.subr.mxu0 0.0
    %1590 = vmatpush1.msra.mxu0 0.0
    %1591 = vmatprep.subr.mxu0 0.0
    %1592 = vmatpush1.msra.mxu0 0.0
    %1593 = vmatprep.subr.mxu0 0.0
    %1594 = vmatpush1.msra.mxu0 0.0
    %1595 = vmatprep.subr.mxu0 0.0
    %1596 = vmatpush1.msra.mxu0 0.0
    %1597 = vmatprep.subr.mxu0 0.0
    %1598 = vmatpush1.msra.mxu0 0.0
    %1599 = vmatprep.subr.mxu0 0.0
    %1600 = vmatpush1.msra.mxu0 0.0
    %1601 = vmatprep.subr.mxu0 0.0
    %1602 = vmatpush1.msra.mxu0 0.0
    %1603 = vmatprep.subr.mxu0 0.0
    %1604 = vmatpush1.msra.mxu0 0.0
    %1605 = vmatprep.subr.mxu0 0.0
    %1606 = vmatpush1.msra.mxu0 0.0
    %1607 = vmatprep.subr.mxu0 0.0
    %1608 = vmatpush1.msra.mxu0 0.0
    %1609 = vmatprep.subr.mxu0 0.0
    %1610 = vmatpush1.msra.mxu0 0.0
    %1611 = vmatprep.subr.mxu0 0.0
    %1612 = vmatpush1.msra.mxu0 0.0
    %1613 = vmatprep.subr.mxu0 0.0
    %1614 = vmatpush1.msra.mxu0 0.0
    %1615 = vmatprep.subr.mxu0 0.0
    %1616 = vmatpush1.msra.mxu0 0.0
    %1617 = vmatprep.mubr.f32.mxu0 0.0
    %v1618 = vand.u32 %v1322, 4294901760
    %v1619 = vsub.f32 %v1322, %v1618
    %1620 = vmatmul.mubr.f32.gmra.mrb[0].mxu0 %v1619
    %v1621 = vpop.f32.mrb[0].mxu0
    %v1622 = vadd.f32 %v1528, %v1621
    %v1623 = vpop.f32.mrb[0].mxu0
    %1624 = vmatprep.mubr.f32.mxu0 0.0
    %v1625 = vand.u32 %v1325, 4294901760
    %v1626 = vsub.f32 %v1325, %v1625
    %1627 = vmatmul.mubr.f32.gmra.mrb[0].mxu0 %v1626
    %v1628 = vpop.f32.mrb[0].mxu0
    %v1629 = vadd.f32 %v1534, %v1628
    %v1630 = vpop.f32.mrb[0].mxu0
    %1631 = vdwg.mxu0
    %1632 = vmatprep.subr.mxu0 0.0
    %v1633 = vand.u32 %v1298, 4294901760
    %1634 = vmatpush1.msra.mxu0 %v1633
    %1635 = vmatprep.subr.mxu0 0.0
    %v1636 = vand.u32 %v1300, 4294901760
    %1637 = vmatpush1.msra.mxu0 %v1636
    %1638 = vmatprep.subr.mxu0 0.0
    %v1639 = vand.u32 %v1302, 4294901760
    %1640 = vmatpush1.msra.mxu0 %v1639
    %1641 = vmatprep.subr.mxu0 0.0
    %v1642 = vand.u32 %v1304, 4294901760
    %1643 = vmatpush1.msra.mxu0 %v1642
    %1644 = vmatprep.subr.mxu0 0.0
    %v1645 = vand.u32 %v1306, 4294901760
    %1646 = vmatpush1.msra.mxu0 %v1645
    %1647 = vmatprep.subr.mxu0 0.0
    %v1648 = vand.u32 %v1308, 4294901760
    %1649 = vmatpush1.msra.mxu0 %v1648
    %1650 = vmatprep.subr.mxu0 0.0
    %v1651 = vand.u32 %v1310, 4294901760
    %1652 = vmatpush1.msra.mxu0 %v1651
    %1653 = vmatprep.subr.mxu0 0.0
    %v1654 = vand.u32 %v1312, 4294901760
    %1655 = vmatpush1.msra.mxu0 %v1654
    %1656 = vmatprep.subr.mxu0 0.0
    %1657 = vmatpush1.msra.mxu0 0.0
    %1658 = vmatprep.subr.mxu0 0.0
    %1659 = vmatpush1.msra.mxu0 0.0
    %1660 = vmatprep.subr.mxu0 0.0
    %1661 = vmatpush1.msra.mxu0 0.0
    %1662 = vmatprep.subr.mxu0 0.0
    %1663 = vmatpush1.msra.mxu0 0.0
    %1664 = vmatprep.subr.mxu0 0.0
    %1665 = vmatpush1.msra.mxu0 0.0
    %1666 = vmatprep.subr.mxu0 0.0
    %1667 = vmatpush1.msra.mxu0 0.0
    %1668 = vmatprep.subr.mxu0 0.0
    %1669 = vmatpush1.msra.mxu0 0.0
    %1670 = vmatprep.subr.mxu0 0.0
    %1671 = vmatpush1.msra.mxu0 0.0
    %1672 = vmatprep.subr.mxu0 0.0
    %1673 = vmatpush1.msra.mxu0 0.0
    %1674 = vmatprep.subr.mxu0 0.0
    %1675 = vmatpush1.msra.mxu0 0.0
    %1676 = vmatprep.subr.mxu0 0.0
    %1677 = vmatpush1.msra.mxu0 0.0
    %1678 = vmatprep.subr.mxu0 0.0
    %1679 = vmatpush1.msra.mxu0 0.0
    %1680 = vmatprep.subr.mxu0 0.0
    %1681 = vmatpush1.msra.mxu0 0.0
    %1682 = vmatprep.subr.mxu0 0.0
    %1683 = vmatpush1.msra.mxu0 0.0
    %1684 = vmatprep.subr.mxu0 0.0
    %1685 = vmatpush1.msra.mxu0 0.0
    %1686 = vmatprep.subr.mxu0 0.0
    %1687 = vmatpush1.msra.mxu0 0.0
    %1688 = vmatprep.subr.mxu0 0.0
    %1689 = vmatpush1.msra.mxu0 0.0
    %1690 = vmatprep.subr.mxu0 0.0
    %1691 = vmatpush1.msra.mxu0 0.0
    %1692 = vmatprep.subr.mxu0 0.0
    %1693 = vmatpush1.msra.mxu0 0.0
    %1694 = vmatprep.subr.mxu0 0.0
    %1695 = vmatpush1.msra.mxu0 0.0
    %1696 = vmatprep.subr.mxu0 0.0
    %1697 = vmatpush1.msra.mxu0 0.0
    %1698 = vmatprep.subr.mxu0 0.0
    %1699 = vmatpush1.msra.mxu0 0.0
    %1700 = vmatprep.subr.mxu0 0.0
    %1701 = vmatpush1.msra.mxu0 0.0
    %1702 = vmatprep.subr.mxu0 0.0
    %1703 = vmatpush1.msra.mxu0 0.0
    %1704 = vmatprep.mubr.f32.mxu0 0.0
    %v1705 = vand.u32 %v1322, 4294901760
    %v1706 = vsub.f32 %v1322, %v1705
    %v1707 = vand.u32 %v1706, 4294901760
    %1708 = vmatmul.mubr.f32.gmra.mrb[0].mxu0 %v1707
    %v1709 = vpop.f32.mrb[0].mxu0
    %v1710 = vadd.f32 %v1622, %v1709
    %v1711 = vpop.f32.mrb[0].mxu0
    %1712 = vmatprep.mubr.f32.mxu0 0.0
    %v1713 = vand.u32 %v1325, 4294901760
    %v1714 = vsub.f32 %v1325, %v1713
    %v1715 = vand.u32 %v1714, 4294901760
    %1716 = vmatmul.mubr.f32.gmra.mrb[0].mxu0 %v1715
    %v1717 = vpop.f32.mrb[0].mxu0
    %v1718 = vadd.f32 %v1629, %v1717
    %v1719 = vpop.f32.mrb[0].mxu0
    %1720 = vdwg.mxu0
    %1721 = vmatprep.subr.mxu0 0.0
    %v1722 = vand.u32 %v1298, 4294901760
    %v1723 = vsub.f32 %v1298, %v1722
    %v1724 = vand.u32 %v1723, 4294901760
    %1725 = vmatpush1.msra.mxu0 %v1724
    %1726 = vmatprep.subr.mxu0 0.0
    %v1727 = vand.u32 %v1300, 4294901760
    %v1728 = vsub.f32 %v1300, %v1727
    %v1729 = vand.u32 %v1728, 4294901760
    %1730 = vmatpush1.msra.mxu0 %v1729
    %1731 = vmatprep.subr.mxu0 0.0
    %v1732 = vand.u32 %v1302, 4294901760
    %v1733 = vsub.f32 %v1302, %v1732
    %v1734 = vand.u32 %v1733, 4294901760
    %1735 = vmatpush1.msra.mxu0 %v1734
    %1736 = vmatprep.subr.mxu0 0.0
    %v1737 = vand.u32 %v1304, 4294901760
    %v1738 = vsub.f32 %v1304, %v1737
    %v1739 = vand.u32 %v1738, 4294901760
    %1740 = vmatpush1.msra.mxu0 %v1739
    %1741 = vmatprep.subr.mxu0 0.0
    %v1742 = vand.u32 %v1306, 4294901760
    %v1743 = vsub.f32 %v1306, %v1742
    %v1744 = vand.u32 %v1743, 4294901760
    %1745 = vmatpush1.msra.mxu0 %v1744
    %1746 = vmatprep.subr.mxu0 0.0
    %v1747 = vand.u32 %v1308, 4294901760
    %v1748 = vsub.f32 %v1308, %v1747
    %v1749 = vand.u32 %v1748, 4294901760
    %1750 = vmatpush1.msra.mxu0 %v1749
    %1751 = vmatprep.subr.mxu0 0.0
    %v1752 = vand.u32 %v1310, 4294901760
    %v1753 = vsub.f32 %v1310, %v1752
    %v1754 = vand.u32 %v1753, 4294901760
    %1755 = vmatpush1.msra.mxu0 %v1754
    %1756 = vmatprep.subr.mxu0 0.0
    %v1757 = vand.u32 %v1312, 4294901760
    %v1758 = vsub.f32 %v1312, %v1757
    %v1759 = vand.u32 %v1758, 4294901760
    %1760 = vmatpush1.msra.mxu0 %v1759
    %1761 = vmatprep.subr.mxu0 0.0
    %1762 = vmatpush1.msra.mxu0 0.0
    %1763 = vmatprep.subr.mxu0 0.0
    %1764 = vmatpush1.msra.mxu0 0.0
    %1765 = vmatprep.subr.mxu0 0.0
    %1766 = vmatpush1.msra.mxu0 0.0
    %1767 = vmatprep.subr.mxu0 0.0
    %1768 = vmatpush1.msra.mxu0 0.0
    %1769 = vmatprep.subr.mxu0 0.0
    %1770 = vmatpush1.msra.mxu0 0.0
    %1771 = vmatprep.subr.mxu0 0.0
    %1772 = vmatpush1.msra.mxu0 0.0
    %1773 = vmatprep.subr.mxu0 0.0
    %1774 = vmatpush1.msra.mxu0 0.0
    %1775 = vmatprep.subr.mxu0 0.0
    %1776 = vmatpush1.msra.mxu0 0.0
    %1777 = vmatprep.subr.mxu0 0.0
    %1778 = vmatpush1.msra.mxu0 0.0
    %1779 = vmatprep.subr.mxu0 0.0
    %1780 = vmatpush1.msra.mxu0 0.0
    %1781 = vmatprep.subr.mxu0 0.0
    %1782 = vmatpush1.msra.mxu0 0.0
    %1783 = vmatprep.subr.mxu0 0.0
    %1784 = vmatpush1.msra.mxu0 0.0
    %1785 = vmatprep.subr.mxu0 0.0
    %1786 = vmatpush1.msra.mxu0 0.0
    %1787 = vmatprep.subr.mxu0 0.0
    %1788 = vmatpush1.msra.mxu0 0.0
    %1789 = vmatprep.subr.mxu0 0.0
    %1790 = vmatpush1.msra.mxu0 0.0
    %1791 = vmatprep.subr.mxu0 0.0
    %1792 = vmatpush1.msra.mxu0 0.0
    %1793 = vmatprep.subr.mxu0 0.0
    %1794 = vmatpush1.msra.mxu0 0.0
    %1795 = vmatprep.subr.mxu0 0.0
    %1796 = vmatpush1.msra.mxu0 0.0
    %1797 = vmatprep.subr.mxu0 0.0
    %1798 = vmatpush1.msra.mxu0 0.0
    %1799 = vmatprep.subr.mxu0 0.0
    %1800 = vmatpush1.msra.mxu0 0.0
    %1801 = vmatprep.subr.mxu0 0.0
    %1802 = vmatpush1.msra.mxu0 0.0
    %1803 = vmatprep.subr.mxu0 0.0
    %1804 = vmatpush1.msra.mxu0 0.0
    %1805 = vmatprep.subr.mxu0 0.0
    %1806 = vmatpush1.msra.mxu0 0.0
    %1807 = vmatprep.subr.mxu0 0.0
    %1808 = vmatpush1.msra.mxu0 0.0
    %1809 = vmatprep.mubr.f32.mxu0 0.0
    %v1810 = vand.u32 %v1322, 4294901760
    %1811 = vmatmul.mubr.f32.gmra.mrb[0].mxu0 %v1810
    %v1812 = vpop.f32.mrb[0].mxu0
    %v1813 = vadd.f32 %v1710, %v1812
    %v1814 = vpop.f32.mrb[0].mxu0
    %1815 = vmatprep.mubr.f32.mxu0 0.0
    %v1816 = vand.u32 %v1325, 4294901760
    %1817 = vmatmul.mubr.f32.gmra.mrb[0].mxu0 %v1816
    %v1818 = vpop.f32.mrb[0].mxu0
    %v1819 = vadd.f32 %v1718, %v1818
    %v1820 = vpop.f32.mrb[0].mxu0
    %1821 = vdwg.mxu0
    %1822 = vmatprep.subr.mxu0 0.0
    %v1823 = vand.u32 %v1298, 4294901760
    %1824 = vmatpush1.msra.mxu0 %v1823
    %1825 = vmatprep.subr.mxu0 0.0
    %v1826 = vand.u32 %v1300, 4294901760
    %1827 = vmatpush1.msra.mxu0 %v1826
    %1828 = vmatprep.subr.mxu0 0.0
    %v1829 = vand.u32 %v1302, 4294901760
    %1830 = vmatpush1.msra.mxu0 %v1829
    %1831 = vmatprep.subr.mxu0 0.0
    %v1832 = vand.u32 %v1304, 4294901760
    %1833 = vmatpush1.msra.mxu0 %v1832
    %1834 = vmatprep.subr.mxu0 0.0
    %v1835 = vand.u32 %v1306, 4294901760
    %1836 = vmatpush1.msra.mxu0 %v1835
    %1837 = vmatprep.subr.mxu0 0.0
    %v1838 = vand.u32 %v1308, 4294901760
    %1839 = vmatpush1.msra.mxu0 %v1838
    %1840 = vmatprep.subr.mxu0 0.0
    %v1841 = vand.u32 %v1310, 4294901760
    %1842 = vmatpush1.msra.mxu0 %v1841
    %1843 = vmatprep.subr.mxu0 0.0
    %v1844 = vand.u32 %v1312, 4294901760
    %1845 = vmatpush1.msra.mxu0 %v1844
    %1846 = vmatprep.subr.mxu0 0.0
    %1847 = vmatpush1.msra.mxu0 0.0
    %1848 = vmatprep.subr.mxu0 0.0
    %1849 = vmatpush1.msra.mxu0 0.0
    %1850 = vmatprep.subr.mxu0 0.0
    %1851 = vmatpush1.msra.mxu0 0.0
    %1852 = vmatprep.subr.mxu0 0.0
    %1853 = vmatpush1.msra.mxu0 0.0
    %1854 = vmatprep.subr.mxu0 0.0
    %1855 = vmatpush1.msra.mxu0 0.0
    %1856 = vmatprep.subr.mxu0 0.0
    %1857 = vmatpush1.msra.mxu0 0.0
    %1858 = vmatprep.subr.mxu0 0.0
    %1859 = vmatpush1.msra.mxu0 0.0
    %1860 = vmatprep.subr.mxu0 0.0
    %1861 = vmatpush1.msra.mxu0 0.0
    %1862 = vmatprep.subr.mxu0 0.0
    %1863 = vmatpush1.msra.mxu0 0.0
    %1864 = vmatprep.subr.mxu0 0.0
    %1865 = vmatpush1.msra.mxu0 0.0
    %1866 = vmatprep.subr.mxu0 0.0
    %1867 = vmatpush1.msra.mxu0 0.0
    %1868 = vmatprep.subr.mxu0 0.0
    %1869 = vmatpush1.msra.mxu0 0.0
    %1870 = vmatprep.subr.mxu0 0.0
    %1871 = vmatpush1.msra.mxu0 0.0
    %1872 = vmatprep.subr.mxu0 0.0
    %1873 = vmatpush1.msra.mxu0 0.0
    %1874 = vmatprep.subr.mxu0 0.0
    %1875 = vmatpush1.msra.mxu0 0.0
    %1876 = vmatprep.subr.mxu0 0.0
    %1877 = vmatpush1.msra.mxu0 0.0
    %1878 = vmatprep.subr.mxu0 0.0
    %1879 = vmatpush1.msra.mxu0 0.0
    %1880 = vmatprep.subr.mxu0 0.0
    %1881 = vmatpush1.msra.mxu0 0.0
    %1882 = vmatprep.subr.mxu0 0.0
    %1883 = vmatpush1.msra.mxu0 0.0
    %1884 = vmatprep.subr.mxu0 0.0
    %1885 = vmatpush1.msra.mxu0 0.0
    %1886 = vmatprep.subr.mxu0 0.0
    %1887 = vmatpush1.msra.mxu0 0.0
    %1888 = vmatprep.subr.mxu0 0.0
    %1889 = vmatpush1.msra.mxu0 0.0
    %1890 = vmatprep.subr.mxu0 0.0
    %1891 = vmatpush1.msra.mxu0 0.0
    %1892 = vmatprep.subr.mxu0 0.0
    %1893 = vmatpush1.msra.mxu0 0.0
    %1894 = vmatprep.mubr.f32.mxu0 0.0
    %v1895 = vand.u32 %v1322, 4294901760
    %1896 = vmatmul.mubr.f32.gmra.mrb[0].mxu0 %v1895
    %v1897 = vpop.f32.mrb[0].mxu0
    %v1898 = vadd.f32 %v1813, %v1897
    %v1899 = vpop.f32.mrb[0].mxu0
    %1900 = vmatprep.mubr.f32.mxu0 0.0
    %v1901 = vand.u32 %v1325, 4294901760
    %1902 = vmatmul.mubr.f32.gmra.mrb[0].mxu0 %v1901
    %v1903 = vpop.f32.mrb[0].mxu0
    %v1904 = vadd.f32 %v1819, %v1903
    %v1905 = vpop.f32.mrb[0].mxu0
    %1906 = vdwg.mxu0
    %v1907 = vmax.f32 %v1898, 1e-30
    %v1908 = vmax.f32 %v1904, 1e-30
    %v1909 = vrcp.pop %v1907
    %v1910 = vmul.f32 %v1294, %v1909
    %v1911 = vrcp.pop %v1908
    %v1912 = vmul.f32 %v1296, %v1911
    %1913 = vrot.lane.b32.xlu0 %v650, 64
    %v1914 = vpop.permute.xlu0 %1913
    %1915 = vrot.lane.b32.xlu0 %v651, 64
    %v1916 = vpop.permute.xlu0 %1915
    %1917 = vrot.lane.b32.xlu0 %v652, 64
    %v1918 = vpop.permute.xlu0 %1917
    %1919 = vrot.lane.b32.xlu0 %v653, 64
    %v1920 = vpop.permute.xlu0 %1919
    %1921 = vrot.lane.b32.xlu0 %v654, 64
    %v1922 = vpop.permute.xlu0 %1921
    %1923 = vrot.lane.b32.xlu0 %v655, 64
    %v1924 = vpop.permute.xlu0 %1923
    %1925 = vrot.lane.b32.xlu0 %v656, 64
    %v1926 = vpop.permute.xlu0 %1925
    %1927 = vrot.lane.b32.xlu0 %v657, 64
    %v1928 = vpop.permute.xlu0 %1927
    %v1938 = vsel %vm1284, %v1910, 0
    %v1941 = vsel %vm1284, %v1912, 0
    %1943 = vmatprep.subr.mxu0 0.0
    %v1944 = vand.u32 %v1914, 4294901760
    %1945 = vmatpush1.msra.mxu0 %v1944
    %1946 = vmatprep.subr.mxu0 0.0
    %v1947 = vand.u32 %v1916, 4294901760
    %1948 = vmatpush1.msra.mxu0 %v1947
    %1949 = vmatprep.subr.mxu0 0.0
    %v1950 = vand.u32 %v1918, 4294901760
    %1951 = vmatpush1.msra.mxu0 %v1950
    %1952 = vmatprep.subr.mxu0 0.0
    %v1953 = vand.u32 %v1920, 4294901760
    %1954 = vmatpush1.msra.mxu0 %v1953
    %1955 = vmatprep.subr.mxu0 0.0
    %v1956 = vand.u32 %v1922, 4294901760
    %1957 = vmatpush1.msra.mxu0 %v1956
    %1958 = vmatprep.subr.mxu0 0.0
    %v1959 = vand.u32 %v1924, 4294901760
    %1960 = vmatpush1.msra.mxu0 %v1959
    %1961 = vmatprep.subr.mxu0 0.0
    %v1962 = vand.u32 %v1926, 4294901760
    %1963 = vmatpush1.msra.mxu0 %v1962
    %1964 = vmatprep.subr.mxu0 0.0
    %v1965 = vand.u32 %v1928, 4294901760
    %1966 = vmatpush1.msra.mxu0 %v1965
    %1967 = vmatprep.subr.mxu0 0.0
    %1968 = vmatpush1.msra.mxu0 0.0
    %1969 = vmatprep.subr.mxu0 0.0
    %1970 = vmatpush1.msra.mxu0 0.0
    %1971 = vmatprep.subr.mxu0 0.0
    %1972 = vmatpush1.msra.mxu0 0.0
    %1973 = vmatprep.subr.mxu0 0.0
    %1974 = vmatpush1.msra.mxu0 0.0
    %1975 = vmatprep.subr.mxu0 0.0
    %1976 = vmatpush1.msra.mxu0 0.0
    %1977 = vmatprep.subr.mxu0 0.0
    %1978 = vmatpush1.msra.mxu0 0.0
    %1979 = vmatprep.subr.mxu0 0.0
    %1980 = vmatpush1.msra.mxu0 0.0
    %1981 = vmatprep.subr.mxu0 0.0
    %1982 = vmatpush1.msra.mxu0 0.0
    %1983 = vmatprep.subr.mxu0 0.0
    %1984 = vmatpush1.msra.mxu0 0.0
    %1985 = vmatprep.subr.mxu0 0.0
    %1986 = vmatpush1.msra.mxu0 0.0
    %1987 = vmatprep.subr.mxu0 0.0
    %1988 = vmatpush1.msra.mxu0 0.0
    %1989 = vmatprep.subr.mxu0 0.0
    %1990 = vmatpush1.msra.mxu0 0.0
    %1991 = vmatprep.subr.mxu0 0.0
    %1992 = vmatpush1.msra.mxu0 0.0
    %1993 = vmatprep.subr.mxu0 0.0
    %1994 = vmatpush1.msra.mxu0 0.0
    %1995 = vmatprep.subr.mxu0 0.0
    %1996 = vmatpush1.msra.mxu0 0.0
    %1997 = vmatprep.subr.mxu0 0.0
    %1998 = vmatpush1.msra.mxu0 0.0
    %1999 = vmatprep.subr.mxu0 0.0
    %2000 = vmatpush1.msra.mxu0 0.0
    %2001 = vmatprep.subr.mxu0 0.0
    %2002 = vmatpush1.msra.mxu0 0.0
    %2003 = vmatprep.subr.mxu0 0.0
    %2004 = vmatpush1.msra.mxu0 0.0
    %2005 = vmatprep.subr.mxu0 0.0
    %2006 = vmatpush1.msra.mxu0 0.0
    %2007 = vmatprep.subr.mxu0 0.0
    %2008 = vmatpush1.msra.mxu0 0.0
    %2009 = vmatprep.subr.mxu0 0.0
    %2010 = vmatpush1.msra.mxu0 0.0
    %2011 = vmatprep.subr.mxu0 0.0
    %2012 = vmatpush1.msra.mxu0 0.0
    %2013 = vmatprep.subr.mxu0 0.0
    %2014 = vmatpush1.msra.mxu0 0.0
    %2015 = vmatprep.mubr.f32.mxu0 0.0
    %v2016 = vand.u32 %v1938, 4294901760
    %v2017 = vsub.f32 %v1938, %v2016
    %v2018 = vand.u32 %v2017, 4294901760
    %v2019 = vsub.f32 %v2017, %v2018
    %v2020 = vand.u32 %v2019, 4294901760
    %2021 = vmatmul.mubr.f32.gmra.mrb[0].mxu0 %v2020
    %v2022 = vpop.f32.mrb[0].mxu0
    %v2023 = vadd.f32 0.0, %v2022
    %v2024 = vpop.f32.mrb[0].mxu0
    %2025 = vmatprep.mubr.f32.mxu0 0.0
    %v2026 = vand.u32 %v1941, 4294901760
    %v2027 = vsub.f32 %v1941, %v2026
    %v2028 = vand.u32 %v2027, 4294901760
    %v2029 = vsub.f32 %v2027, %v2028
    %v2030 = vand.u32 %v2029, 4294901760
    %2031 = vmatmul.mubr.f32.gmra.mrb[0].mxu0 %v2030
    %v2032 = vpop.f32.mrb[0].mxu0
    %v2033 = vadd.f32 0.0, %v2032
    %v2034 = vpop.f32.mrb[0].mxu0
    %2035 = vdwg.mxu0
    %2036 = vmatprep.subr.mxu0 0.0
    %v2037 = vand.u32 %v1914, 4294901760
    %v2038 = vsub.f32 %v1914, %v2037
    %v2039 = vand.u32 %v2038, 4294901760
    %v2040 = vsub.f32 %v2038, %v2039
    %v2041 = vand.u32 %v2040, 4294901760
    %2042 = vmatpush1.msra.mxu0 %v2041
    %2043 = vmatprep.subr.mxu0 0.0
    %v2044 = vand.u32 %v1916, 4294901760
    %v2045 = vsub.f32 %v1916, %v2044
    %v2046 = vand.u32 %v2045, 4294901760
    %v2047 = vsub.f32 %v2045, %v2046
    %v2048 = vand.u32 %v2047, 4294901760
    %2049 = vmatpush1.msra.mxu0 %v2048
    %2050 = vmatprep.subr.mxu0 0.0
    %v2051 = vand.u32 %v1918, 4294901760
    %v2052 = vsub.f32 %v1918, %v2051
    %v2053 = vand.u32 %v2052, 4294901760
    %v2054 = vsub.f32 %v2052, %v2053
    %v2055 = vand.u32 %v2054, 4294901760
    %2056 = vmatpush1.msra.mxu0 %v2055
    %2057 = vmatprep.subr.mxu0 0.0
    %v2058 = vand.u32 %v1920, 4294901760
    %v2059 = vsub.f32 %v1920, %v2058
    %v2060 = vand.u32 %v2059, 4294901760
    %v2061 = vsub.f32 %v2059, %v2060
    %v2062 = vand.u32 %v2061, 4294901760
    %2063 = vmatpush1.msra.mxu0 %v2062
    %2064 = vmatprep.subr.mxu0 0.0
    %v2065 = vand.u32 %v1922, 4294901760
    %v2066 = vsub.f32 %v1922, %v2065
    %v2067 = vand.u32 %v2066, 4294901760
    %v2068 = vsub.f32 %v2066, %v2067
    %v2069 = vand.u32 %v2068, 4294901760
    %2070 = vmatpush1.msra.mxu0 %v2069
    %2071 = vmatprep.subr.mxu0 0.0
    %v2072 = vand.u32 %v1924, 4294901760
    %v2073 = vsub.f32 %v1924, %v2072
    %v2074 = vand.u32 %v2073, 4294901760
    %v2075 = vsub.f32 %v2073, %v2074
    %v2076 = vand.u32 %v2075, 4294901760
    %2077 = vmatpush1.msra.mxu0 %v2076
    %2078 = vmatprep.subr.mxu0 0.0
    %v2079 = vand.u32 %v1926, 4294901760
    %v2080 = vsub.f32 %v1926, %v2079
    %v2081 = vand.u32 %v2080, 4294901760
    %v2082 = vsub.f32 %v2080, %v2081
    %v2083 = vand.u32 %v2082, 4294901760
    %2084 = vmatpush1.msra.mxu0 %v2083
    %2085 = vmatprep.subr.mxu0 0.0
    %v2086 = vand.u32 %v1928, 4294901760
    %v2087 = vsub.f32 %v1928, %v2086
    %v2088 = vand.u32 %v2087, 4294901760
    %v2089 = vsub.f32 %v2087, %v2088
    %v2090 = vand.u32 %v2089, 4294901760
    %2091 = vmatpush1.msra.mxu0 %v2090
    %2092 = vmatprep.subr.mxu0 0.0
    %2093 = vmatpush1.msra.mxu0 0.0
    %2094 = vmatprep.subr.mxu0 0.0
    %2095 = vmatpush1.msra.mxu0 0.0
    %2096 = vmatprep.subr.mxu0 0.0
    %2097 = vmatpush1.msra.mxu0 0.0
    %2098 = vmatprep.subr.mxu0 0.0
    %2099 = vmatpush1.msra.mxu0 0.0
    %2100 = vmatprep.subr.mxu0 0.0
    %2101 = vmatpush1.msra.mxu0 0.0
    %2102 = vmatprep.subr.mxu0 0.0
    %2103 = vmatpush1.msra.mxu0 0.0
    %2104 = vmatprep.subr.mxu0 0.0
    %2105 = vmatpush1.msra.mxu0 0.0
    %2106 = vmatprep.subr.mxu0 0.0
    %2107 = vmatpush1.msra.mxu0 0.0
    %2108 = vmatprep.subr.mxu0 0.0
    %2109 = vmatpush1.msra.mxu0 0.0
    %2110 = vmatprep.subr.mxu0 0.0
    %2111 = vmatpush1.msra.mxu0 0.0
    %2112 = vmatprep.subr.mxu0 0.0
    %2113 = vmatpush1.msra.mxu0 0.0
    %2114 = vmatprep.subr.mxu0 0.0
    %2115 = vmatpush1.msra.mxu0 0.0
    %2116 = vmatprep.subr.mxu0 0.0
    %2117 = vmatpush1.msra.mxu0 0.0
    %2118 = vmatprep.subr.mxu0 0.0
    %2119 = vmatpush1.msra.mxu0 0.0
    %2120 = vmatprep.subr.mxu0 0.0
    %2121 = vmatpush1.msra.mxu0 0.0
    %2122 = vmatprep.subr.mxu0 0.0
    %2123 = vmatpush1.msra.mxu0 0.0
    %2124 = vmatprep.subr.mxu0 0.0
    %2125 = vmatpush1.msra.mxu0 0.0
    %2126 = vmatprep.subr.mxu0 0.0
    %2127 = vmatpush1.msra.mxu0 0.0
    %2128 = vmatprep.subr.mxu0 0.0
    %2129 = vmatpush1.msra.mxu0 0.0
    %2130 = vmatprep.subr.mxu0 0.0
    %2131 = vmatpush1.msra.mxu0 0.0
    %2132 = vmatprep.subr.mxu0 0.0
    %2133 = vmatpush1.msra.mxu0 0.0
    %2134 = vmatprep.subr.mxu0 0.0
    %2135 = vmatpush1.msra.mxu0 0.0
    %2136 = vmatprep.subr.mxu0 0.0
    %2137 = vmatpush1.msra.mxu0 0.0
    %2138 = vmatprep.subr.mxu0 0.0
    %2139 = vmatpush1.msra.mxu0 0.0
    %2140 = vmatprep.mubr.f32.mxu0 0.0
    %v2141 = vand.u32 %v1938, 4294901760
    %2142 = vmatmul.mubr.f32.gmra.mrb[0].mxu0 %v2141
    %v2143 = vpop.f32.mrb[0].mxu0
    %v2144 = vadd.f32 %v2023, %v2143
    %v2145 = vpop.f32.mrb[0].mxu0
    %2146 = vmatprep.mubr.f32.mxu0 0.0
    %v2147 = vand.u32 %v1941, 4294901760
    %2148 = vmatmul.mubr.f32.gmra.mrb[0].mxu0 %v2147
    %v2149 = vpop.f32.mrb[0].mxu0
    %v2150 = vadd.f32 %v2033, %v2149
    %v2151 = vpop.f32.mrb[0].mxu0
    %2152 = vdwg.mxu0
    %2153 = vmatprep.subr.mxu0 0.0
    %v2154 = vand.u32 %v1914, 4294901760
    %v2155 = vsub.f32 %v1914, %v2154
    %2156 = vmatpush1.msra.mxu0 %v2155
    %2157 = vmatprep.subr.mxu0 0.0
    %v2158 = vand.u32 %v1916, 4294901760
    %v2159 = vsub.f32 %v1916, %v2158
    %2160 = vmatpush1.msra.mxu0 %v2159
    %2161 = vmatprep.subr.mxu0 0.0
    %v2162 = vand.u32 %v1918, 4294901760
    %v2163 = vsub.f32 %v1918, %v2162
    %2164 = vmatpush1.msra.mxu0 %v2163
    %2165 = vmatprep.subr.mxu0 0.0
    %v2166 = vand.u32 %v1920, 4294901760
    %v2167 = vsub.f32 %v1920, %v2166
    %2168 = vmatpush1.msra.mxu0 %v2167
    %2169 = vmatprep.subr.mxu0 0.0
    %v2170 = vand.u32 %v1922, 4294901760
    %v2171 = vsub.f32 %v1922, %v2170
    %2172 = vmatpush1.msra.mxu0 %v2171
    %2173 = vmatprep.subr.mxu0 0.0
    %v2174 = vand.u32 %v1924, 4294901760
    %v2175 = vsub.f32 %v1924, %v2174
    %2176 = vmatpush1.msra.mxu0 %v2175
    %2177 = vmatprep.subr.mxu0 0.0
    %v2178 = vand.u32 %v1926, 4294901760
    %v2179 = vsub.f32 %v1926, %v2178
    %2180 = vmatpush1.msra.mxu0 %v2179
    %2181 = vmatprep.subr.mxu0 0.0
    %v2182 = vand.u32 %v1928, 4294901760
    %v2183 = vsub.f32 %v1928, %v2182
    %2184 = vmatpush1.msra.mxu0 %v2183
    %2185 = vmatprep.subr.mxu0 0.0
    %2186 = vmatpush1.msra.mxu0 0.0
    %2187 = vmatprep.subr.mxu0 0.0
    %2188 = vmatpush1.msra.mxu0 0.0
    %2189 = vmatprep.subr.mxu0 0.0
    %2190 = vmatpush1.msra.mxu0 0.0
    %2191 = vmatprep.subr.mxu0 0.0
    %2192 = vmatpush1.msra.mxu0 0.0
    %2193 = vmatprep.subr.mxu0 0.0
    %2194 = vmatpush1.msra.mxu0 0.0
    %2195 = vmatprep.subr.mxu0 0.0
    %2196 = vmatpush1.msra.mxu0 0.0
    %2197 = vmatprep.subr.mxu0 0.0
    %2198 = vmatpush1.msra.mxu0 0.0
    %2199 = vmatprep.subr.mxu0 0.0
    %2200 = vmatpush1.msra.mxu0 0.0
    %2201 = vmatprep.subr.mxu0 0.0
    %2202 = vmatpush1.msra.mxu0 0.0
    %2203 = vmatprep.subr.mxu0 0.0
    %2204 = vmatpush1.msra.mxu0 0.0
    %2205 = vmatprep.subr.mxu0 0.0
    %2206 = vmatpush1.msra.mxu0 0.0
    %2207 = vmatprep.subr.mxu0 0.0
    %2208 = vmatpush1.msra.mxu0 0.0
    %2209 = vmatprep.subr.mxu0 0.0
    %2210 = vmatpush1.msra.mxu0 0.0
    %2211 = vmatprep.subr.mxu0 0.0
    %2212 = vmatpush1.msra.mxu0 0.0
    %2213 = vmatprep.subr.mxu0 0.0
    %2214 = vmatpush1.msra.mxu0 0.0
    %2215 = vmatprep.subr.mxu0 0.0
    %2216 = vmatpush1.msra.mxu0 0.0
    %2217 = vmatprep.subr.mxu0 0.0
    %2218 = vmatpush1.msra.mxu0 0.0
    %2219 = vmatprep.subr.mxu0 0.0
    %2220 = vmatpush1.msra.mxu0 0.0
    %2221 = vmatprep.subr.mxu0 0.0
    %2222 = vmatpush1.msra.mxu0 0.0
    %2223 = vmatprep.subr.mxu0 0.0
    %2224 = vmatpush1.msra.mxu0 0.0
    %2225 = vmatprep.subr.mxu0 0.0
    %2226 = vmatpush1.msra.mxu0 0.0
    %2227 = vmatprep.subr.mxu0 0.0
    %2228 = vmatpush1.msra.mxu0 0.0
    %2229 = vmatprep.subr.mxu0 0.0
    %2230 = vmatpush1.msra.mxu0 0.0
    %2231 = vmatprep.subr.mxu0 0.0
    %2232 = vmatpush1.msra.mxu0 0.0
    %2233 = vmatprep.mubr.f32.mxu0 0.0
    %v2234 = vand.u32 %v1938, 4294901760
    %v2235 = vsub.f32 %v1938, %v2234
    %2236 = vmatmul.mubr.f32.gmra.mrb[0].mxu0 %v2235
    %v2237 = vpop.f32.mrb[0].mxu0
    %v2238 = vadd.f32 %v2144, %v2237
    %v2239 = vpop.f32.mrb[0].mxu0
    %2240 = vmatprep.mubr.f32.mxu0 0.0
    %v2241 = vand.u32 %v1941, 4294901760
    %v2242 = vsub.f32 %v1941, %v2241
    %2243 = vmatmul.mubr.f32.gmra.mrb[0].mxu0 %v2242
    %v2244 = vpop.f32.mrb[0].mxu0
    %v2245 = vadd.f32 %v2150, %v2244
    %v2246 = vpop.f32.mrb[0].mxu0
    %2247 = vdwg.mxu0
    %2248 = vmatprep.subr.mxu0 0.0
    %v2249 = vand.u32 %v1914, 4294901760
    %2250 = vmatpush1.msra.mxu0 %v2249
    %2251 = vmatprep.subr.mxu0 0.0
    %v2252 = vand.u32 %v1916, 4294901760
    %2253 = vmatpush1.msra.mxu0 %v2252
    %2254 = vmatprep.subr.mxu0 0.0
    %v2255 = vand.u32 %v1918, 4294901760
    %2256 = vmatpush1.msra.mxu0 %v2255
    %2257 = vmatprep.subr.mxu0 0.0
    %v2258 = vand.u32 %v1920, 4294901760
    %2259 = vmatpush1.msra.mxu0 %v2258
    %2260 = vmatprep.subr.mxu0 0.0
    %v2261 = vand.u32 %v1922, 4294901760
    %2262 = vmatpush1.msra.mxu0 %v2261
    %2263 = vmatprep.subr.mxu0 0.0
    %v2264 = vand.u32 %v1924, 4294901760
    %2265 = vmatpush1.msra.mxu0 %v2264
    %2266 = vmatprep.subr.mxu0 0.0
    %v2267 = vand.u32 %v1926, 4294901760
    %2268 = vmatpush1.msra.mxu0 %v2267
    %2269 = vmatprep.subr.mxu0 0.0
    %v2270 = vand.u32 %v1928, 4294901760
    %2271 = vmatpush1.msra.mxu0 %v2270
    %2272 = vmatprep.subr.mxu0 0.0
    %2273 = vmatpush1.msra.mxu0 0.0
    %2274 = vmatprep.subr.mxu0 0.0
    %2275 = vmatpush1.msra.mxu0 0.0
    %2276 = vmatprep.subr.mxu0 0.0
    %2277 = vmatpush1.msra.mxu0 0.0
    %2278 = vmatprep.subr.mxu0 0.0
    %2279 = vmatpush1.msra.mxu0 0.0
    %2280 = vmatprep.subr.mxu0 0.0
    %2281 = vmatpush1.msra.mxu0 0.0
    %2282 = vmatprep.subr.mxu0 0.0
    %2283 = vmatpush1.msra.mxu0 0.0
    %2284 = vmatprep.subr.mxu0 0.0
    %2285 = vmatpush1.msra.mxu0 0.0
    %2286 = vmatprep.subr.mxu0 0.0
    %2287 = vmatpush1.msra.mxu0 0.0
    %2288 = vmatprep.subr.mxu0 0.0
    %2289 = vmatpush1.msra.mxu0 0.0
    %2290 = vmatprep.subr.mxu0 0.0
    %2291 = vmatpush1.msra.mxu0 0.0
    %2292 = vmatprep.subr.mxu0 0.0
    %2293 = vmatpush1.msra.mxu0 0.0
    %2294 = vmatprep.subr.mxu0 0.0
    %2295 = vmatpush1.msra.mxu0 0.0
    %2296 = vmatprep.subr.mxu0 0.0
    %2297 = vmatpush1.msra.mxu0 0.0
    %2298 = vmatprep.subr.mxu0 0.0
    %2299 = vmatpush1.msra.mxu0 0.0
    %2300 = vmatprep.subr.mxu0 0.0
    %2301 = vmatpush1.msra.mxu0 0.0
    %2302 = vmatprep.subr.mxu0 0.0
    %2303 = vmatpush1.msra.mxu0 0.0
    %2304 = vmatprep.subr.mxu0 0.0
    %2305 = vmatpush1.msra.mxu0 0.0
    %2306 = vmatprep.subr.mxu0 0.0
    %2307 = vmatpush1.msra.mxu0 0.0
    %2308 = vmatprep.subr.mxu0 0.0
    %2309 = vmatpush1.msra.mxu0 0.0
    %2310 = vmatprep.subr.mxu0 0.0
    %2311 = vmatpush1.msra.mxu0 0.0
    %2312 = vmatprep.subr.mxu0 0.0
    %2313 = vmatpush1.msra.mxu0 0.0
    %2314 = vmatprep.subr.mxu0 0.0
    %2315 = vmatpush1.msra.mxu0 0.0
    %2316 = vmatprep.subr.mxu0 0.0
    %2317 = vmatpush1.msra.mxu0 0.0
    %2318 = vmatprep.subr.mxu0 0.0
    %2319 = vmatpush1.msra.mxu0 0.0
    %2320 = vmatprep.mubr.f32.mxu0 0.0
    %v2321 = vand.u32 %v1938, 4294901760
    %v2322 = vsub.f32 %v1938, %v2321
    %v2323 = vand.u32 %v2322, 4294901760
    %2324 = vmatmul.mubr.f32.gmra.mrb[0].mxu0 %v2323
    %v2325 = vpop.f32.mrb[0].mxu0
    %v2326 = vadd.f32 %v2238, %v2325
    %v2327 = vpop.f32.mrb[0].mxu0
    %2328 = vmatprep.mubr.f32.mxu0 0.0
    %v2329 = vand.u32 %v1941, 4294901760
    %v2330 = vsub.f32 %v1941, %v2329
    %v2331 = vand.u32 %v2330, 4294901760
    %2332 = vmatmul.mubr.f32.gmra.mrb[0].mxu0 %v2331
    %v2333 = vpop.f32.mrb[0].mxu0
    %v2334 = vadd.f32 %v2245, %v2333
    %v2335 = vpop.f32.mrb[0].mxu0
    %2336 = vdwg.mxu0
    %2337 = vmatprep.subr.mxu0 0.0
    %v2338 = vand.u32 %v1914, 4294901760
    %v2339 = vsub.f32 %v1914, %v2338
    %v2340 = vand.u32 %v2339, 4294901760
    %2341 = vmatpush1.msra.mxu0 %v2340
    %2342 = vmatprep.subr.mxu0 0.0
    %v2343 = vand.u32 %v1916, 4294901760
    %v2344 = vsub.f32 %v1916, %v2343
    %v2345 = vand.u32 %v2344, 4294901760
    %2346 = vmatpush1.msra.mxu0 %v2345
    %2347 = vmatprep.subr.mxu0 0.0
    %v2348 = vand.u32 %v1918, 4294901760
    %v2349 = vsub.f32 %v1918, %v2348
    %v2350 = vand.u32 %v2349, 4294901760
    %2351 = vmatpush1.msra.mxu0 %v2350
    %2352 = vmatprep.subr.mxu0 0.0
    %v2353 = vand.u32 %v1920, 4294901760
    %v2354 = vsub.f32 %v1920, %v2353
    %v2355 = vand.u32 %v2354, 4294901760
    %2356 = vmatpush1.msra.mxu0 %v2355
    %2357 = vmatprep.subr.mxu0 0.0
    %v2358 = vand.u32 %v1922, 4294901760
    %v2359 = vsub.f32 %v1922, %v2358
    %v2360 = vand.u32 %v2359, 4294901760
    %2361 = vmatpush1.msra.mxu0 %v2360
    %2362 = vmatprep.subr.mxu0 0.0
    %v2363 = vand.u32 %v1924, 4294901760
    %v2364 = vsub.f32 %v1924, %v2363
    %v2365 = vand.u32 %v2364, 4294901760
    %2366 = vmatpush1.msra.mxu0 %v2365
    %2367 = vmatprep.subr.mxu0 0.0
    %v2368 = vand.u32 %v1926, 4294901760
    %v2369 = vsub.f32 %v1926, %v2368
    %v2370 = vand.u32 %v2369, 4294901760
    %2371 = vmatpush1.msra.mxu0 %v2370
    %2372 = vmatprep.subr.mxu0 0.0
    %v2373 = vand.u32 %v1928, 4294901760
    %v2374 = vsub.f32 %v1928, %v2373
    %v2375 = vand.u32 %v2374, 4294901760
    %2376 = vmatpush1.msra.mxu0 %v2375
    %2377 = vmatprep.subr.mxu0 0.0
    %2378 = vmatpush1.msra.mxu0 0.0
    %2379 = vmatprep.subr.mxu0 0.0
    %2380 = vmatpush1.msra.mxu0 0.0
    %2381 = vmatprep.subr.mxu0 0.0
    %2382 = vmatpush1.msra.mxu0 0.0
    %2383 = vmatprep.subr.mxu0 0.0
    %2384 = vmatpush1.msra.mxu0 0.0
    %2385 = vmatprep.subr.mxu0 0.0
    %2386 = vmatpush1.msra.mxu0 0.0
    %2387 = vmatprep.subr.mxu0 0.0
    %2388 = vmatpush1.msra.mxu0 0.0
    %2389 = vmatprep.subr.mxu0 0.0
    %2390 = vmatpush1.msra.mxu0 0.0
    %2391 = vmatprep.subr.mxu0 0.0
    %2392 = vmatpush1.msra.mxu0 0.0
    %2393 = vmatprep.subr.mxu0 0.0
    %2394 = vmatpush1.msra.mxu0 0.0
    %2395 = vmatprep.subr.mxu0 0.0
    %2396 = vmatpush1.msra.mxu0 0.0
    %2397 = vmatprep.subr.mxu0 0.0
    %2398 = vmatpush1.msra.mxu0 0.0
    %2399 = vmatprep.subr.mxu0 0.0
    %2400 = vmatpush1.msra.mxu0 0.0
    %2401 = vmatprep.subr.mxu0 0.0
    %2402 = vmatpush1.msra.mxu0 0.0
    %2403 = vmatprep.subr.mxu0 0.0
    %2404 = vmatpush1.msra.mxu0 0.0
    %2405 = vmatprep.subr.mxu0 0.0
    %2406 = vmatpush1.msra.mxu0 0.0
    %2407 = vmatprep.subr.mxu0 0.0
    %2408 = vmatpush1.msra.mxu0 0.0
    %2409 = vmatprep.subr.mxu0 0.0
    %2410 = vmatpush1.msra.mxu0 0.0
    %2411 = vmatprep.subr.mxu0 0.0
    %2412 = vmatpush1.msra.mxu0 0.0
    %2413 = vmatprep.subr.mxu0 0.0
    %2414 = vmatpush1.msra.mxu0 0.0
    %2415 = vmatprep.subr.mxu0 0.0
    %2416 = vmatpush1.msra.mxu0 0.0
    %2417 = vmatprep.subr.mxu0 0.0
    %2418 = vmatpush1.msra.mxu0 0.0
    %2419 = vmatprep.subr.mxu0 0.0
    %2420 = vmatpush1.msra.mxu0 0.0
    %2421 = vmatprep.subr.mxu0 0.0
    %2422 = vmatpush1.msra.mxu0 0.0
    %2423 = vmatprep.subr.mxu0 0.0
    %2424 = vmatpush1.msra.mxu0 0.0
    %2425 = vmatprep.mubr.f32.mxu0 0.0
    %v2426 = vand.u32 %v1938, 4294901760
    %2427 = vmatmul.mubr.f32.gmra.mrb[0].mxu0 %v2426
    %v2428 = vpop.f32.mrb[0].mxu0
    %v2429 = vadd.f32 %v2326, %v2428
    %v2430 = vpop.f32.mrb[0].mxu0
    %2431 = vmatprep.mubr.f32.mxu0 0.0
    %v2432 = vand.u32 %v1941, 4294901760
    %2433 = vmatmul.mubr.f32.gmra.mrb[0].mxu0 %v2432
    %v2434 = vpop.f32.mrb[0].mxu0
    %v2435 = vadd.f32 %v2334, %v2434
    %v2436 = vpop.f32.mrb[0].mxu0
    %2437 = vdwg.mxu0
    %2438 = vmatprep.subr.mxu0 0.0
    %v2439 = vand.u32 %v1914, 4294901760
    %2440 = vmatpush1.msra.mxu0 %v2439
    %2441 = vmatprep.subr.mxu0 0.0
    %v2442 = vand.u32 %v1916, 4294901760
    %2443 = vmatpush1.msra.mxu0 %v2442
    %2444 = vmatprep.subr.mxu0 0.0
    %v2445 = vand.u32 %v1918, 4294901760
    %2446 = vmatpush1.msra.mxu0 %v2445
    %2447 = vmatprep.subr.mxu0 0.0
    %v2448 = vand.u32 %v1920, 4294901760
    %2449 = vmatpush1.msra.mxu0 %v2448
    %2450 = vmatprep.subr.mxu0 0.0
    %v2451 = vand.u32 %v1922, 4294901760
    %2452 = vmatpush1.msra.mxu0 %v2451
    %2453 = vmatprep.subr.mxu0 0.0
    %v2454 = vand.u32 %v1924, 4294901760
    %2455 = vmatpush1.msra.mxu0 %v2454
    %2456 = vmatprep.subr.mxu0 0.0
    %v2457 = vand.u32 %v1926, 4294901760
    %2458 = vmatpush1.msra.mxu0 %v2457
    %2459 = vmatprep.subr.mxu0 0.0
    %v2460 = vand.u32 %v1928, 4294901760
    %2461 = vmatpush1.msra.mxu0 %v2460
    %2462 = vmatprep.subr.mxu0 0.0
    %2463 = vmatpush1.msra.mxu0 0.0
    %2464 = vmatprep.subr.mxu0 0.0
    %2465 = vmatpush1.msra.mxu0 0.0
    %2466 = vmatprep.subr.mxu0 0.0
    %2467 = vmatpush1.msra.mxu0 0.0
    %2468 = vmatprep.subr.mxu0 0.0
    %2469 = vmatpush1.msra.mxu0 0.0
    %2470 = vmatprep.subr.mxu0 0.0
    %2471 = vmatpush1.msra.mxu0 0.0
    %2472 = vmatprep.subr.mxu0 0.0
    %2473 = vmatpush1.msra.mxu0 0.0
    %2474 = vmatprep.subr.mxu0 0.0
    %2475 = vmatpush1.msra.mxu0 0.0
    %2476 = vmatprep.subr.mxu0 0.0
    %2477 = vmatpush1.msra.mxu0 0.0
    %2478 = vmatprep.subr.mxu0 0.0
    %2479 = vmatpush1.msra.mxu0 0.0
    %2480 = vmatprep.subr.mxu0 0.0
    %2481 = vmatpush1.msra.mxu0 0.0
    %2482 = vmatprep.subr.mxu0 0.0
    %2483 = vmatpush1.msra.mxu0 0.0
    %2484 = vmatprep.subr.mxu0 0.0
    %2485 = vmatpush1.msra.mxu0 0.0
    %2486 = vmatprep.subr.mxu0 0.0
    %2487 = vmatpush1.msra.mxu0 0.0
    %2488 = vmatprep.subr.mxu0 0.0
    %2489 = vmatpush1.msra.mxu0 0.0
    %2490 = vmatprep.subr.mxu0 0.0
    %2491 = vmatpush1.msra.mxu0 0.0
    %2492 = vmatprep.subr.mxu0 0.0
    %2493 = vmatpush1.msra.mxu0 0.0
    %2494 = vmatprep.subr.mxu0 0.0
    %2495 = vmatpush1.msra.mxu0 0.0
    %2496 = vmatprep.subr.mxu0 0.0
    %2497 = vmatpush1.msra.mxu0 0.0
    %2498 = vmatprep.subr.mxu0 0.0
    %2499 = vmatpush1.msra.mxu0 0.0
    %2500 = vmatprep.subr.mxu0 0.0
    %2501 = vmatpush1.msra.mxu0 0.0
    %2502 = vmatprep.subr.mxu0 0.0
    %2503 = vmatpush1.msra.mxu0 0.0
    %2504 = vmatprep.subr.mxu0 0.0
    %2505 = vmatpush1.msra.mxu0 0.0
    %2506 = vmatprep.subr.mxu0 0.0
    %2507 = vmatpush1.msra.mxu0 0.0
    %2508 = vmatprep.subr.mxu0 0.0
    %2509 = vmatpush1.msra.mxu0 0.0
    %2510 = vmatprep.mubr.f32.mxu0 0.0
    %v2511 = vand.u32 %v1938, 4294901760
    %2512 = vmatmul.mubr.f32.gmra.mrb[0].mxu0 %v2511
    %v2513 = vpop.f32.mrb[0].mxu0
    %v2514 = vadd.f32 %v2429, %v2513
    %v2515 = vpop.f32.mrb[0].mxu0
    %2516 = vmatprep.mubr.f32.mxu0 0.0
    %v2517 = vand.u32 %v1941, 4294901760
    %2518 = vmatmul.mubr.f32.gmra.mrb[0].mxu0 %v2517
    %v2519 = vpop.f32.mrb[0].mxu0
    %v2520 = vadd.f32 %v2435, %v2519
    %v2521 = vpop.f32.mrb[0].mxu0
    %2522 = vdwg.mxu0
    %2527 = vrot.lane.b32.xlu0 %v27, 32
    %v2528 = vpop.permute.xlu0 %2527
    %2529 = vrot.lane.b32.xlu0 %v28, 32
    %v2530 = vpop.permute.xlu0 %2529
    %2531 = vrot.lane.b32.xlu0 %v29, 32
    %v2532 = vpop.permute.xlu0 %2531
    %2533 = vrot.lane.b32.xlu0 %v30, 32
    %v2534 = vpop.permute.xlu0 %2533
    %v2540 = vsel %vm52, %v2514, 0
    %v2543 = vsel %vm52, %v2520, 0
    %2545 = vmatprep.subr.mxu0 0.0
    %v2546 = vand.u32 %v2528, 4294901760
    %2547 = vmatpush1.msra.mxu0 %v2546
    %2548 = vmatprep.subr.mxu0 0.0
    %v2549 = vand.u32 %v2530, 4294901760
    %2550 = vmatpush1.msra.mxu0 %v2549
    %2551 = vmatprep.subr.mxu0 0.0
    %v2552 = vand.u32 %v2532, 4294901760
    %2553 = vmatpush1.msra.mxu0 %v2552
    %2554 = vmatprep.subr.mxu0 0.0
    %v2555 = vand.u32 %v2534, 4294901760
    %2556 = vmatpush1.msra.mxu0 %v2555
    %2557 = vmatprep.subr.mxu0 0.0
    %2558 = vmatpush1.msra.mxu0 0.0
    %2559 = vmatprep.subr.mxu0 0.0
    %2560 = vmatpush1.msra.mxu0 0.0
    %2561 = vmatprep.subr.mxu0 0.0
    %2562 = vmatpush1.msra.mxu0 0.0
    %2563 = vmatprep.subr.mxu0 0.0
    %2564 = vmatpush1.msra.mxu0 0.0
    %2565 = vmatprep.subr.mxu0 0.0
    %2566 = vmatpush1.msra.mxu0 0.0
    %2567 = vmatprep.subr.mxu0 0.0
    %2568 = vmatpush1.msra.mxu0 0.0
    %2569 = vmatprep.subr.mxu0 0.0
    %2570 = vmatpush1.msra.mxu0 0.0
    %2571 = vmatprep.subr.mxu0 0.0
    %2572 = vmatpush1.msra.mxu0 0.0
    %2573 = vmatprep.subr.mxu0 0.0
    %2574 = vmatpush1.msra.mxu0 0.0
    %2575 = vmatprep.subr.mxu0 0.0
    %2576 = vmatpush1.msra.mxu0 0.0
    %2577 = vmatprep.subr.mxu0 0.0
    %2578 = vmatpush1.msra.mxu0 0.0
    %2579 = vmatprep.subr.mxu0 0.0
    %2580 = vmatpush1.msra.mxu0 0.0
    %2581 = vmatprep.subr.mxu0 0.0
    %2582 = vmatpush1.msra.mxu0 0.0
    %2583 = vmatprep.subr.mxu0 0.0
    %2584 = vmatpush1.msra.mxu0 0.0
    %2585 = vmatprep.subr.mxu0 0.0
    %2586 = vmatpush1.msra.mxu0 0.0
    %2587 = vmatprep.subr.mxu0 0.0
    %2588 = vmatpush1.msra.mxu0 0.0
    %2589 = vmatprep.subr.mxu0 0.0
    %2590 = vmatpush1.msra.mxu0 0.0
    %2591 = vmatprep.subr.mxu0 0.0
    %2592 = vmatpush1.msra.mxu0 0.0
    %2593 = vmatprep.subr.mxu0 0.0
    %2594 = vmatpush1.msra.mxu0 0.0
    %2595 = vmatprep.subr.mxu0 0.0
    %2596 = vmatpush1.msra.mxu0 0.0
    %2597 = vmatprep.subr.mxu0 0.0
    %2598 = vmatpush1.msra.mxu0 0.0
    %2599 = vmatprep.subr.mxu0 0.0
    %2600 = vmatpush1.msra.mxu0 0.0
    %2601 = vmatprep.subr.mxu0 0.0
    %2602 = vmatpush1.msra.mxu0 0.0
    %2603 = vmatprep.subr.mxu0 0.0
    %2604 = vmatpush1.msra.mxu0 0.0
    %2605 = vmatprep.subr.mxu0 0.0
    %2606 = vmatpush1.msra.mxu0 0.0
    %2607 = vmatprep.subr.mxu0 0.0
    %2608 = vmatpush1.msra.mxu0 0.0
    %2609 = vmatprep.subr.mxu0 0.0
    %2610 = vmatpush1.msra.mxu0 0.0
    %2611 = vmatprep.subr.mxu0 0.0
    %2612 = vmatpush1.msra.mxu0 0.0
    %2613 = vmatprep.mubr.f32.mxu0 0.0
    %v2614 = vand.u32 %v2540, 4294901760
    %v2615 = vsub.f32 %v2540, %v2614
    %v2616 = vand.u32 %v2615, 4294901760
    %v2617 = vsub.f32 %v2615, %v2616
    %v2618 = vand.u32 %v2617, 4294901760
    %2619 = vmatmul.mubr.f32.gmra.mrb[0].mxu0 %v2618
    %v2620 = vpop.f32.mrb[0].mxu0
    %v2621 = vadd.f32 0.0, %v2620
    %v2622 = vpop.f32.mrb[0].mxu0
    %2623 = vmatprep.mubr.f32.mxu0 0.0
    %v2624 = vand.u32 %v2543, 4294901760
    %v2625 = vsub.f32 %v2543, %v2624
    %v2626 = vand.u32 %v2625, 4294901760
    %v2627 = vsub.f32 %v2625, %v2626
    %v2628 = vand.u32 %v2627, 4294901760
    %2629 = vmatmul.mubr.f32.gmra.mrb[0].mxu0 %v2628
    %v2630 = vpop.f32.mrb[0].mxu0
    %v2631 = vadd.f32 0.0, %v2630
    %v2632 = vpop.f32.mrb[0].mxu0
    %2633 = vdwg.mxu0
    %2634 = vmatprep.subr.mxu0 0.0
    %v2635 = vand.u32 %v2528, 4294901760
    %v2636 = vsub.f32 %v2528, %v2635
    %v2637 = vand.u32 %v2636, 4294901760
    %v2638 = vsub.f32 %v2636, %v2637
    %v2639 = vand.u32 %v2638, 4294901760
    %2640 = vmatpush1.msra.mxu0 %v2639
    %2641 = vmatprep.subr.mxu0 0.0
    %v2642 = vand.u32 %v2530, 4294901760
    %v2643 = vsub.f32 %v2530, %v2642
    %v2644 = vand.u32 %v2643, 4294901760
    %v2645 = vsub.f32 %v2643, %v2644
    %v2646 = vand.u32 %v2645, 4294901760
    %2647 = vmatpush1.msra.mxu0 %v2646
    %2648 = vmatprep.subr.mxu0 0.0
    %v2649 = vand.u32 %v2532, 4294901760
    %v2650 = vsub.f32 %v2532, %v2649
    %v2651 = vand.u32 %v2650, 4294901760
    %v2652 = vsub.f32 %v2650, %v2651
    %v2653 = vand.u32 %v2652, 4294901760
    %2654 = vmatpush1.msra.mxu0 %v2653
    %2655 = vmatprep.subr.mxu0 0.0
    %v2656 = vand.u32 %v2534, 4294901760
    %v2657 = vsub.f32 %v2534, %v2656
    %v2658 = vand.u32 %v2657, 4294901760
    %v2659 = vsub.f32 %v2657, %v2658
    %v2660 = vand.u32 %v2659, 4294901760
    %2661 = vmatpush1.msra.mxu0 %v2660
    %2662 = vmatprep.subr.mxu0 0.0
    %2663 = vmatpush1.msra.mxu0 0.0
    %2664 = vmatprep.subr.mxu0 0.0
    %2665 = vmatpush1.msra.mxu0 0.0
    %2666 = vmatprep.subr.mxu0 0.0
    %2667 = vmatpush1.msra.mxu0 0.0
    %2668 = vmatprep.subr.mxu0 0.0
    %2669 = vmatpush1.msra.mxu0 0.0
    %2670 = vmatprep.subr.mxu0 0.0
    %2671 = vmatpush1.msra.mxu0 0.0
    %2672 = vmatprep.subr.mxu0 0.0
    %2673 = vmatpush1.msra.mxu0 0.0
    %2674 = vmatprep.subr.mxu0 0.0
    %2675 = vmatpush1.msra.mxu0 0.0
    %2676 = vmatprep.subr.mxu0 0.0
    %2677 = vmatpush1.msra.mxu0 0.0
    %2678 = vmatprep.subr.mxu0 0.0
    %2679 = vmatpush1.msra.mxu0 0.0
    %2680 = vmatprep.subr.mxu0 0.0
    %2681 = vmatpush1.msra.mxu0 0.0
    %2682 = vmatprep.subr.mxu0 0.0
    %2683 = vmatpush1.msra.mxu0 0.0
    %2684 = vmatprep.subr.mxu0 0.0
    %2685 = vmatpush1.msra.mxu0 0.0
    %2686 = vmatprep.subr.mxu0 0.0
    %2687 = vmatpush1.msra.mxu0 0.0
    %2688 = vmatprep.subr.mxu0 0.0
    %2689 = vmatpush1.msra.mxu0 0.0
    %2690 = vmatprep.subr.mxu0 0.0
    %2691 = vmatpush1.msra.mxu0 0.0
    %2692 = vmatprep.subr.mxu0 0.0
    %2693 = vmatpush1.msra.mxu0 0.0
    %2694 = vmatprep.subr.mxu0 0.0
    %2695 = vmatpush1.msra.mxu0 0.0
    %2696 = vmatprep.subr.mxu0 0.0
    %2697 = vmatpush1.msra.mxu0 0.0
    %2698 = vmatprep.subr.mxu0 0.0
    %2699 = vmatpush1.msra.mxu0 0.0
    %2700 = vmatprep.subr.mxu0 0.0
    %2701 = vmatpush1.msra.mxu0 0.0
    %2702 = vmatprep.subr.mxu0 0.0
    %2703 = vmatpush1.msra.mxu0 0.0
    %2704 = vmatprep.subr.mxu0 0.0
    %2705 = vmatpush1.msra.mxu0 0.0
    %2706 = vmatprep.subr.mxu0 0.0
    %2707 = vmatpush1.msra.mxu0 0.0
    %2708 = vmatprep.subr.mxu0 0.0
    %2709 = vmatpush1.msra.mxu0 0.0
    %2710 = vmatprep.subr.mxu0 0.0
    %2711 = vmatpush1.msra.mxu0 0.0
    %2712 = vmatprep.subr.mxu0 0.0
    %2713 = vmatpush1.msra.mxu0 0.0
    %2714 = vmatprep.subr.mxu0 0.0
    %2715 = vmatpush1.msra.mxu0 0.0
    %2716 = vmatprep.subr.mxu0 0.0
    %2717 = vmatpush1.msra.mxu0 0.0
    %2718 = vmatprep.mubr.f32.mxu0 0.0
    %v2719 = vand.u32 %v2540, 4294901760
    %2720 = vmatmul.mubr.f32.gmra.mrb[0].mxu0 %v2719
    %v2721 = vpop.f32.mrb[0].mxu0
    %v2722 = vadd.f32 %v2621, %v2721
    %v2723 = vpop.f32.mrb[0].mxu0
    %2724 = vmatprep.mubr.f32.mxu0 0.0
    %v2725 = vand.u32 %v2543, 4294901760
    %2726 = vmatmul.mubr.f32.gmra.mrb[0].mxu0 %v2725
    %v2727 = vpop.f32.mrb[0].mxu0
    %v2728 = vadd.f32 %v2631, %v2727
    %v2729 = vpop.f32.mrb[0].mxu0
    %2730 = vdwg.mxu0
    %2731 = vmatprep.subr.mxu0 0.0
    %v2732 = vand.u32 %v2528, 4294901760
    %v2733 = vsub.f32 %v2528, %v2732
    %2734 = vmatpush1.msra.mxu0 %v2733
    %2735 = vmatprep.subr.mxu0 0.0
    %v2736 = vand.u32 %v2530, 4294901760
    %v2737 = vsub.f32 %v2530, %v2736
    %2738 = vmatpush1.msra.mxu0 %v2737
    %2739 = vmatprep.subr.mxu0 0.0
    %v2740 = vand.u32 %v2532, 4294901760
    %v2741 = vsub.f32 %v2532, %v2740
    %2742 = vmatpush1.msra.mxu0 %v2741
    %2743 = vmatprep.subr.mxu0 0.0
    %v2744 = vand.u32 %v2534, 4294901760
    %v2745 = vsub.f32 %v2534, %v2744
    %2746 = vmatpush1.msra.mxu0 %v2745
    %2747 = vmatprep.subr.mxu0 0.0
    %2748 = vmatpush1.msra.mxu0 0.0
    %2749 = vmatprep.subr.mxu0 0.0
    %2750 = vmatpush1.msra.mxu0 0.0
    %2751 = vmatprep.subr.mxu0 0.0
    %2752 = vmatpush1.msra.mxu0 0.0
    %2753 = vmatprep.subr.mxu0 0.0
    %2754 = vmatpush1.msra.mxu0 0.0
    %2755 = vmatprep.subr.mxu0 0.0
    %2756 = vmatpush1.msra.mxu0 0.0
    %2757 = vmatprep.subr.mxu0 0.0
    %2758 = vmatpush1.msra.mxu0 0.0
    %2759 = vmatprep.subr.mxu0 0.0
    %2760 = vmatpush1.msra.mxu0 0.0
    %2761 = vmatprep.subr.mxu0 0.0
    %2762 = vmatpush1.msra.mxu0 0.0
    %2763 = vmatprep.subr.mxu0 0.0
    %2764 = vmatpush1.msra.mxu0 0.0
    %2765 = vmatprep.subr.mxu0 0.0
    %2766 = vmatpush1.msra.mxu0 0.0
    %2767 = vmatprep.subr.mxu0 0.0
    %2768 = vmatpush1.msra.mxu0 0.0
    %2769 = vmatprep.subr.mxu0 0.0
    %2770 = vmatpush1.msra.mxu0 0.0
    %2771 = vmatprep.subr.mxu0 0.0
    %2772 = vmatpush1.msra.mxu0 0.0
    %2773 = vmatprep.subr.mxu0 0.0
    %2774 = vmatpush1.msra.mxu0 0.0
    %2775 = vmatprep.subr.mxu0 0.0
    %2776 = vmatpush1.msra.mxu0 0.0
    %2777 = vmatprep.subr.mxu0 0.0
    %2778 = vmatpush1.msra.mxu0 0.0
    %2779 = vmatprep.subr.mxu0 0.0
    %2780 = vmatpush1.msra.mxu0 0.0
    %2781 = vmatprep.subr.mxu0 0.0
    %2782 = vmatpush1.msra.mxu0 0.0
    %2783 = vmatprep.subr.mxu0 0.0
    %2784 = vmatpush1.msra.mxu0 0.0
    %2785 = vmatprep.subr.mxu0 0.0
    %2786 = vmatpush1.msra.mxu0 0.0
    %2787 = vmatprep.subr.mxu0 0.0
    %2788 = vmatpush1.msra.mxu0 0.0
    %2789 = vmatprep.subr.mxu0 0.0
    %2790 = vmatpush1.msra.mxu0 0.0
    %2791 = vmatprep.subr.mxu0 0.0
    %2792 = vmatpush1.msra.mxu0 0.0
    %2793 = vmatprep.subr.mxu0 0.0
    %2794 = vmatpush1.msra.mxu0 0.0
    %2795 = vmatprep.subr.mxu0 0.0
    %2796 = vmatpush1.msra.mxu0 0.0
    %2797 = vmatprep.subr.mxu0 0.0
    %2798 = vmatpush1.msra.mxu0 0.0
    %2799 = vmatprep.subr.mxu0 0.0
    %2800 = vmatpush1.msra.mxu0 0.0
    %2801 = vmatprep.subr.mxu0 0.0
    %2802 = vmatpush1.msra.mxu0 0.0
    %2803 = vmatprep.mubr.f32.mxu0 0.0
    %v2804 = vand.u32 %v2540, 4294901760
    %v2805 = vsub.f32 %v2540, %v2804
    %2806 = vmatmul.mubr.f32.gmra.mrb[0].mxu0 %v2805
    %v2807 = vpop.f32.mrb[0].mxu0
    %v2808 = vadd.f32 %v2722, %v2807
    %v2809 = vpop.f32.mrb[0].mxu0
    %2810 = vmatprep.mubr.f32.mxu0 0.0
    %v2811 = vand.u32 %v2543, 4294901760
    %v2812 = vsub.f32 %v2543, %v2811
    %2813 = vmatmul.mubr.f32.gmra.mrb[0].mxu0 %v2812
    %v2814 = vpop.f32.mrb[0].mxu0
    %v2815 = vadd.f32 %v2728, %v2814
    %v2816 = vpop.f32.mrb[0].mxu0
    %2817 = vdwg.mxu0
    %2818 = vmatprep.subr.mxu0 0.0
    %v2819 = vand.u32 %v2528, 4294901760
    %2820 = vmatpush1.msra.mxu0 %v2819
    %2821 = vmatprep.subr.mxu0 0.0
    %v2822 = vand.u32 %v2530, 4294901760
    %2823 = vmatpush1.msra.mxu0 %v2822
    %2824 = vmatprep.subr.mxu0 0.0
    %v2825 = vand.u32 %v2532, 4294901760
    %2826 = vmatpush1.msra.mxu0 %v2825
    %2827 = vmatprep.subr.mxu0 0.0
    %v2828 = vand.u32 %v2534, 4294901760
    %2829 = vmatpush1.msra.mxu0 %v2828
    %2830 = vmatprep.subr.mxu0 0.0
    %2831 = vmatpush1.msra.mxu0 0.0
    %2832 = vmatprep.subr.mxu0 0.0
    %2833 = vmatpush1.msra.mxu0 0.0
    %2834 = vmatprep.subr.mxu0 0.0
    %2835 = vmatpush1.msra.mxu0 0.0
    %2836 = vmatprep.subr.mxu0 0.0
    %2837 = vmatpush1.msra.mxu0 0.0
    %2838 = vmatprep.subr.mxu0 0.0
    %2839 = vmatpush1.msra.mxu0 0.0
    %2840 = vmatprep.subr.mxu0 0.0
    %2841 = vmatpush1.msra.mxu0 0.0
    %2842 = vmatprep.subr.mxu0 0.0
    %2843 = vmatpush1.msra.mxu0 0.0
    %2844 = vmatprep.subr.mxu0 0.0
    %2845 = vmatpush1.msra.mxu0 0.0
    %2846 = vmatprep.subr.mxu0 0.0
    %2847 = vmatpush1.msra.mxu0 0.0
    %2848 = vmatprep.subr.mxu0 0.0
    %2849 = vmatpush1.msra.mxu0 0.0
    %2850 = vmatprep.subr.mxu0 0.0
    %2851 = vmatpush1.msra.mxu0 0.0
    %2852 = vmatprep.subr.mxu0 0.0
    %2853 = vmatpush1.msra.mxu0 0.0
    %2854 = vmatprep.subr.mxu0 0.0
    %2855 = vmatpush1.msra.mxu0 0.0
    %2856 = vmatprep.subr.mxu0 0.0
    %2857 = vmatpush1.msra.mxu0 0.0
    %2858 = vmatprep.subr.mxu0 0.0
    %2859 = vmatpush1.msra.mxu0 0.0
    %2860 = vmatprep.subr.mxu0 0.0
    %2861 = vmatpush1.msra.mxu0 0.0
    %2862 = vmatprep.subr.mxu0 0.0
    %2863 = vmatpush1.msra.mxu0 0.0
    %2864 = vmatprep.subr.mxu0 0.0
    %2865 = vmatpush1.msra.mxu0 0.0
    %2866 = vmatprep.subr.mxu0 0.0
    %2867 = vmatpush1.msra.mxu0 0.0
    %2868 = vmatprep.subr.mxu0 0.0
    %2869 = vmatpush1.msra.mxu0 0.0
    %2870 = vmatprep.subr.mxu0 0.0
    %2871 = vmatpush1.msra.mxu0 0.0
    %2872 = vmatprep.subr.mxu0 0.0
    %2873 = vmatpush1.msra.mxu0 0.0
    %2874 = vmatprep.subr.mxu0 0.0
    %2875 = vmatpush1.msra.mxu0 0.0
    %2876 = vmatprep.subr.mxu0 0.0
    %2877 = vmatpush1.msra.mxu0 0.0
    %2878 = vmatprep.subr.mxu0 0.0
    %2879 = vmatpush1.msra.mxu0 0.0
    %2880 = vmatprep.subr.mxu0 0.0
    %2881 = vmatpush1.msra.mxu0 0.0
    %2882 = vmatprep.subr.mxu0 0.0
    %2883 = vmatpush1.msra.mxu0 0.0
    %2884 = vmatprep.subr.mxu0 0.0
    %2885 = vmatpush1.msra.mxu0 0.0
    %2886 = vmatprep.mubr.f32.mxu0 0.0
    %v2887 = vand.u32 %v2540, 4294901760
    %v2888 = vsub.f32 %v2540, %v2887
    %v2889 = vand.u32 %v2888, 4294901760
    %2890 = vmatmul.mubr.f32.gmra.mrb[0].mxu0 %v2889
    %v2891 = vpop.f32.mrb[0].mxu0
    %v2892 = vadd.f32 %v2808, %v2891
    %v2893 = vpop.f32.mrb[0].mxu0
    %2894 = vmatprep.mubr.f32.mxu0 0.0
    %v2895 = vand.u32 %v2543, 4294901760
    %v2896 = vsub.f32 %v2543, %v2895
    %v2897 = vand.u32 %v2896, 4294901760
    %2898 = vmatmul.mubr.f32.gmra.mrb[0].mxu0 %v2897
    %v2899 = vpop.f32.mrb[0].mxu0
    %v2900 = vadd.f32 %v2815, %v2899
    %v2901 = vpop.f32.mrb[0].mxu0
    %2902 = vdwg.mxu0
    %2903 = vmatprep.subr.mxu0 0.0
    %v2904 = vand.u32 %v2528, 4294901760
    %v2905 = vsub.f32 %v2528, %v2904
    %v2906 = vand.u32 %v2905, 4294901760
    %2907 = vmatpush1.msra.mxu0 %v2906
    %2908 = vmatprep.subr.mxu0 0.0
    %v2909 = vand.u32 %v2530, 4294901760
    %v2910 = vsub.f32 %v2530, %v2909
    %v2911 = vand.u32 %v2910, 4294901760
    %2912 = vmatpush1.msra.mxu0 %v2911
    %2913 = vmatprep.subr.mxu0 0.0
    %v2914 = vand.u32 %v2532, 4294901760
    %v2915 = vsub.f32 %v2532, %v2914
    %v2916 = vand.u32 %v2915, 4294901760
    %2917 = vmatpush1.msra.mxu0 %v2916
    %2918 = vmatprep.subr.mxu0 0.0
    %v2919 = vand.u32 %v2534, 4294901760
    %v2920 = vsub.f32 %v2534, %v2919
    %v2921 = vand.u32 %v2920, 4294901760
    %2922 = vmatpush1.msra.mxu0 %v2921
    %2923 = vmatprep.subr.mxu0 0.0
    %2924 = vmatpush1.msra.mxu0 0.0
    %2925 = vmatprep.subr.mxu0 0.0
    %2926 = vmatpush1.msra.mxu0 0.0
    %2927 = vmatprep.subr.mxu0 0.0
    %2928 = vmatpush1.msra.mxu0 0.0
    %2929 = vmatprep.subr.mxu0 0.0
    %2930 = vmatpush1.msra.mxu0 0.0
    %2931 = vmatprep.subr.mxu0 0.0
    %2932 = vmatpush1.msra.mxu0 0.0
    %2933 = vmatprep.subr.mxu0 0.0
    %2934 = vmatpush1.msra.mxu0 0.0
    %2935 = vmatprep.subr.mxu0 0.0
    %2936 = vmatpush1.msra.mxu0 0.0
    %2937 = vmatprep.subr.mxu0 0.0
    %2938 = vmatpush1.msra.mxu0 0.0
    %2939 = vmatprep.subr.mxu0 0.0
    %2940 = vmatpush1.msra.mxu0 0.0
    %2941 = vmatprep.subr.mxu0 0.0
    %2942 = vmatpush1.msra.mxu0 0.0
    %2943 = vmatprep.subr.mxu0 0.0
    %2944 = vmatpush1.msra.mxu0 0.0
    %2945 = vmatprep.subr.mxu0 0.0
    %2946 = vmatpush1.msra.mxu0 0.0
    %2947 = vmatprep.subr.mxu0 0.0
    %2948 = vmatpush1.msra.mxu0 0.0
    %2949 = vmatprep.subr.mxu0 0.0
    %2950 = vmatpush1.msra.mxu0 0.0
    %2951 = vmatprep.subr.mxu0 0.0
    %2952 = vmatpush1.msra.mxu0 0.0
    %2953 = vmatprep.subr.mxu0 0.0
    %2954 = vmatpush1.msra.mxu0 0.0
    %2955 = vmatprep.subr.mxu0 0.0
    %2956 = vmatpush1.msra.mxu0 0.0
    %2957 = vmatprep.subr.mxu0 0.0
    %2958 = vmatpush1.msra.mxu0 0.0
    %2959 = vmatprep.subr.mxu0 0.0
    %2960 = vmatpush1.msra.mxu0 0.0
    %2961 = vmatprep.subr.mxu0 0.0
    %2962 = vmatpush1.msra.mxu0 0.0
    %2963 = vmatprep.subr.mxu0 0.0
    %2964 = vmatpush1.msra.mxu0 0.0
    %2965 = vmatprep.subr.mxu0 0.0
    %2966 = vmatpush1.msra.mxu0 0.0
    %2967 = vmatprep.subr.mxu0 0.0
    %2968 = vmatpush1.msra.mxu0 0.0
    %2969 = vmatprep.subr.mxu0 0.0
    %2970 = vmatpush1.msra.mxu0 0.0
    %2971 = vmatprep.subr.mxu0 0.0
    %2972 = vmatpush1.msra.mxu0 0.0
    %2973 = vmatprep.subr.mxu0 0.0
    %2974 = vmatpush1.msra.mxu0 0.0
    %2975 = vmatprep.subr.mxu0 0.0
    %2976 = vmatpush1.msra.mxu0 0.0
    %2977 = vmatprep.subr.mxu0 0.0
    %2978 = vmatpush1.msra.mxu0 0.0
    %2979 = vmatprep.mubr.f32.mxu0 0.0
    %v2980 = vand.u32 %v2540, 4294901760
    %2981 = vmatmul.mubr.f32.gmra.mrb[0].mxu0 %v2980
    %v2982 = vpop.f32.mrb[0].mxu0
    %v2983 = vadd.f32 %v2892, %v2982
    %v2984 = vpop.f32.mrb[0].mxu0
    %2985 = vmatprep.mubr.f32.mxu0 0.0
    %v2986 = vand.u32 %v2543, 4294901760
    %2987 = vmatmul.mubr.f32.gmra.mrb[0].mxu0 %v2986
    %v2988 = vpop.f32.mrb[0].mxu0
    %v2989 = vadd.f32 %v2900, %v2988
    %v2990 = vpop.f32.mrb[0].mxu0
    %2991 = vdwg.mxu0
    %2992 = vmatprep.subr.mxu0 0.0
    %v2993 = vand.u32 %v2528, 4294901760
    %2994 = vmatpush1.msra.mxu0 %v2993
    %2995 = vmatprep.subr.mxu0 0.0
    %v2996 = vand.u32 %v2530, 4294901760
    %2997 = vmatpush1.msra.mxu0 %v2996
    %2998 = vmatprep.subr.mxu0 0.0
    %v2999 = vand.u32 %v2532, 4294901760
    %3000 = vmatpush1.msra.mxu0 %v2999
    %3001 = vmatprep.subr.mxu0 0.0
    %v3002 = vand.u32 %v2534, 4294901760
    %3003 = vmatpush1.msra.mxu0 %v3002
    %3004 = vmatprep.subr.mxu0 0.0
    %3005 = vmatpush1.msra.mxu0 0.0
    %3006 = vmatprep.subr.mxu0 0.0
    %3007 = vmatpush1.msra.mxu0 0.0
    %3008 = vmatprep.subr.mxu0 0.0
    %3009 = vmatpush1.msra.mxu0 0.0
    %3010 = vmatprep.subr.mxu0 0.0
    %3011 = vmatpush1.msra.mxu0 0.0
    %3012 = vmatprep.subr.mxu0 0.0
    %3013 = vmatpush1.msra.mxu0 0.0
    %3014 = vmatprep.subr.mxu0 0.0
    %3015 = vmatpush1.msra.mxu0 0.0
    %3016 = vmatprep.subr.mxu0 0.0
    %3017 = vmatpush1.msra.mxu0 0.0
    %3018 = vmatprep.subr.mxu0 0.0
    %3019 = vmatpush1.msra.mxu0 0.0
    %3020 = vmatprep.subr.mxu0 0.0
    %3021 = vmatpush1.msra.mxu0 0.0
    %3022 = vmatprep.subr.mxu0 0.0
    %3023 = vmatpush1.msra.mxu0 0.0
    %3024 = vmatprep.subr.mxu0 0.0
    %3025 = vmatpush1.msra.mxu0 0.0
    %3026 = vmatprep.subr.mxu0 0.0
    %3027 = vmatpush1.msra.mxu0 0.0
    %3028 = vmatprep.subr.mxu0 0.0
    %3029 = vmatpush1.msra.mxu0 0.0
    %3030 = vmatprep.subr.mxu0 0.0
    %3031 = vmatpush1.msra.mxu0 0.0
    %3032 = vmatprep.subr.mxu0 0.0
    %3033 = vmatpush1.msra.mxu0 0.0
    %3034 = vmatprep.subr.mxu0 0.0
    %3035 = vmatpush1.msra.mxu0 0.0
    %3036 = vmatprep.subr.mxu0 0.0
    %3037 = vmatpush1.msra.mxu0 0.0
    %3038 = vmatprep.subr.mxu0 0.0
    %3039 = vmatpush1.msra.mxu0 0.0
    %3040 = vmatprep.subr.mxu0 0.0
    %3041 = vmatpush1.msra.mxu0 0.0
    %3042 = vmatprep.subr.mxu0 0.0
    %3043 = vmatpush1.msra.mxu0 0.0
    %3044 = vmatprep.subr.mxu0 0.0
    %3045 = vmatpush1.msra.mxu0 0.0
    %3046 = vmatprep.subr.mxu0 0.0
    %3047 = vmatpush1.msra.mxu0 0.0
    %3048 = vmatprep.subr.mxu0 0.0
    %3049 = vmatpush1.msra.mxu0 0.0
    %3050 = vmatprep.subr.mxu0 0.0
    %3051 = vmatpush1.msra.mxu0 0.0
    %3052 = vmatprep.subr.mxu0 0.0
    %3053 = vmatpush1.msra.mxu0 0.0
    %3054 = vmatprep.subr.mxu0 0.0
    %3055 = vmatpush1.msra.mxu0 0.0
    %3056 = vmatprep.subr.mxu0 0.0
    %3057 = vmatpush1.msra.mxu0 0.0
    %3058 = vmatprep.subr.mxu0 0.0
    %3059 = vmatpush1.msra.mxu0 0.0
    %3060 = vmatprep.mubr.f32.mxu0 0.0
    %v3061 = vand.u32 %v2540, 4294901760
    %3062 = vmatmul.mubr.f32.gmra.mrb[0].mxu0 %v3061
    %v3063 = vpop.f32.mrb[0].mxu0
    %v3064 = vadd.f32 %v2983, %v3063
    %v3065 = vpop.f32.mrb[0].mxu0
    %3066 = vmatprep.mubr.f32.mxu0 0.0
    %v3067 = vand.u32 %v2543, 4294901760
    %3068 = vmatmul.mubr.f32.gmra.mrb[0].mxu0 %v3067
    %v3069 = vpop.f32.mrb[0].mxu0
    %v3070 = vadd.f32 %v2989, %v3069
    %v3071 = vpop.f32.mrb[0].mxu0
    %3072 = vdwg.mxu0
    %v3073 = vadd.f32 %v25, %v3064
    %v3074 = vadd.f32 %v26, %v3070
    %3076 = vrot.lane.b32.xlu0 %v83, 32
    %v3077 = vpop.permute.xlu0 %3076
    %v3079 = vadd.f32 %v3073, %v3077
    %v3080 = vadd.f32 %v3074, %v3077
    %v3081 = vsel %vm52, %v3079, 0.0
    %3082 = vadd.xlane.f32.xlu0 %v3081
    %v3083 = vpop.xlane.xlu0 %3082
    %v3084 = vsel %vm52, %v3080, 0.0
    %3085 = vadd.xlane.f32.xlu0 %v3084
    %v3086 = vpop.xlane.xlu0 %3085
    %v3087 = vmul.f32 %v3083, %v59
    %v3088 = vmul.f32 %v3086, %v59
    %v3089 = vsub.f32 %v3079, %v3087
    %v3090 = vsub.f32 %v3080, %v3088
    %v3091 = vmul.f32 %v3089, %v3089
    %v3092 = vmul.f32 %v3090, %v3090
    %v3093 = vsel %vm52, %v3091, 0.0
    %3094 = vadd.xlane.f32.xlu0 %v3093
    %v3095 = vpop.xlane.xlu0 %3094
    %v3096 = vsel %vm52, %v3092, 0.0
    %3097 = vadd.xlane.f32.xlu0 %v3096
    %v3098 = vpop.xlane.xlu0 %3097
    %v3099 = vmul.f32 %v3095, %v59
    %v3100 = vmul.f32 %v3098, %v59
    %v3101 = vadd.f32 %v3099, 1e-05
    %v3102 = vadd.f32 %v3100, 1e-05
    %v3103 = vrsqrt.pop %v3101
    %v3104 = vrsqrt.pop %v3102
    %v3105 = vmul.f32 %v3089, %v3103
    %v3106 = vmul.f32 %v3090, %v3104
    %v3107 = vlaneseq
    %v3108 = vshrl.u32 %v3107, 7
    %v3109 = vsub.s32 0, %v3108
    %v3110 = vrot.slane %v40, %v3109
    %v3112 = vsel %vm52, %v3105, 0
    %v3115 = vsel %vm52, %v3106, 0
    %3117 = vmatprep.subr.mxu0 0.0
    %v3118 = vand.u32 %v31, 4294901760
    %3119 = vmatpush1.msra.mxu0 %v3118
    %3120 = vmatprep.subr.mxu0 0.0
    %v3121 = vand.u32 %v32, 4294901760
    %3122 = vmatpush1.msra.mxu0 %v3121
    %3123 = vmatprep.subr.mxu0 0.0
    %v3124 = vand.u32 %v33, 4294901760
    %3125 = vmatpush1.msra.mxu0 %v3124
    %3126 = vmatprep.subr.mxu0 0.0
    %v3127 = vand.u32 %v34, 4294901760
    %3128 = vmatpush1.msra.mxu0 %v3127
    %3129 = vmatprep.subr.mxu0 0.0
    %3130 = vmatpush1.msra.mxu0 0.0
    %3131 = vmatprep.subr.mxu0 0.0
    %3132 = vmatpush1.msra.mxu0 0.0
    %3133 = vmatprep.subr.mxu0 0.0
    %3134 = vmatpush1.msra.mxu0 0.0
    %3135 = vmatprep.subr.mxu0 0.0
    %3136 = vmatpush1.msra.mxu0 0.0
    %3137 = vmatprep.subr.mxu0 0.0
    %3138 = vmatpush1.msra.mxu0 0.0
    %3139 = vmatprep.subr.mxu0 0.0
    %3140 = vmatpush1.msra.mxu0 0.0
    %3141 = vmatprep.subr.mxu0 0.0
    %3142 = vmatpush1.msra.mxu0 0.0
    %3143 = vmatprep.subr.mxu0 0.0
    %3144 = vmatpush1.msra.mxu0 0.0
    %3145 = vmatprep.subr.mxu0 0.0
    %3146 = vmatpush1.msra.mxu0 0.0
    %3147 = vmatprep.subr.mxu0 0.0
    %3148 = vmatpush1.msra.mxu0 0.0
    %3149 = vmatprep.subr.mxu0 0.0
    %3150 = vmatpush1.msra.mxu0 0.0
    %3151 = vmatprep.subr.mxu0 0.0
    %3152 = vmatpush1.msra.mxu0 0.0
    %3153 = vmatprep.subr.mxu0 0.0
    %3154 = vmatpush1.msra.mxu0 0.0
    %3155 = vmatprep.subr.mxu0 0.0
    %3156 = vmatpush1.msra.mxu0 0.0
    %3157 = vmatprep.subr.mxu0 0.0
    %3158 = vmatpush1.msra.mxu0 0.0
    %3159 = vmatprep.subr.mxu0 0.0
    %3160 = vmatpush1.msra.mxu0 0.0
    %3161 = vmatprep.subr.mxu0 0.0
    %3162 = vmatpush1.msra.mxu0 0.0
    %3163 = vmatprep.subr.mxu0 0.0
    %3164 = vmatpush1.msra.mxu0 0.0
    %3165 = vmatprep.subr.mxu0 0.0
    %3166 = vmatpush1.msra.mxu0 0.0
    %3167 = vmatprep.subr.mxu0 0.0
    %3168 = vmatpush1.msra.mxu0 0.0
    %3169 = vmatprep.subr.mxu0 0.0
    %3170 = vmatpush1.msra.mxu0 0.0
    %3171 = vmatprep.subr.mxu0 0.0
    %3172 = vmatpush1.msra.mxu0 0.0
    %3173 = vmatprep.subr.mxu0 0.0
    %3174 = vmatpush1.msra.mxu0 0.0
    %3175 = vmatprep.subr.mxu0 0.0
    %3176 = vmatpush1.msra.mxu0 0.0
    %3177 = vmatprep.subr.mxu0 0.0
    %3178 = vmatpush1.msra.mxu0 0.0
    %3179 = vmatprep.subr.mxu0 0.0
    %3180 = vmatpush1.msra.mxu0 0.0
    %3181 = vmatprep.subr.mxu0 0.0
    %3182 = vmatpush1.msra.mxu0 0.0
    %3183 = vmatprep.subr.mxu0 0.0
    %3184 = vmatpush1.msra.mxu0 0.0
    %3185 = vmatprep.mubr.f32.mxu0 0.0
    %v3186 = vand.u32 %v3112, 4294901760
    %v3187 = vsub.f32 %v3112, %v3186
    %v3188 = vand.u32 %v3187, 4294901760
    %v3189 = vsub.f32 %v3187, %v3188
    %v3190 = vand.u32 %v3189, 4294901760
    %3191 = vmatmul.mubr.f32.gmra.mrb[0].mxu0 %v3190
    %v3192 = vpop.f32.mrb[0].mxu0
    %v3193 = vadd.f32 %v3110, %v3192
    %v3194 = vpop.f32.mrb[0].mxu0
    %3195 = vmatprep.mubr.f32.mxu0 0.0
    %v3196 = vand.u32 %v3115, 4294901760
    %v3197 = vsub.f32 %v3115, %v3196
    %v3198 = vand.u32 %v3197, 4294901760
    %v3199 = vsub.f32 %v3197, %v3198
    %v3200 = vand.u32 %v3199, 4294901760
    %3201 = vmatmul.mubr.f32.gmra.mrb[0].mxu0 %v3200
    %v3202 = vpop.f32.mrb[0].mxu0
    %v3203 = vadd.f32 %v3110, %v3202
    %v3204 = vpop.f32.mrb[0].mxu0
    %3205 = vdwg.mxu0
    %3206 = vmatprep.subr.mxu0 0.0
    %v3207 = vand.u32 %v31, 4294901760
    %v3208 = vsub.f32 %v31, %v3207
    %v3209 = vand.u32 %v3208, 4294901760
    %v3210 = vsub.f32 %v3208, %v3209
    %v3211 = vand.u32 %v3210, 4294901760
    %3212 = vmatpush1.msra.mxu0 %v3211
    %3213 = vmatprep.subr.mxu0 0.0
    %v3214 = vand.u32 %v32, 4294901760
    %v3215 = vsub.f32 %v32, %v3214
    %v3216 = vand.u32 %v3215, 4294901760
    %v3217 = vsub.f32 %v3215, %v3216
    %v3218 = vand.u32 %v3217, 4294901760
    %3219 = vmatpush1.msra.mxu0 %v3218
    %3220 = vmatprep.subr.mxu0 0.0
    %v3221 = vand.u32 %v33, 4294901760
    %v3222 = vsub.f32 %v33, %v3221
    %v3223 = vand.u32 %v3222, 4294901760
    %v3224 = vsub.f32 %v3222, %v3223
    %v3225 = vand.u32 %v3224, 4294901760
    %3226 = vmatpush1.msra.mxu0 %v3225
    %3227 = vmatprep.subr.mxu0 0.0
    %v3228 = vand.u32 %v34, 4294901760
    %v3229 = vsub.f32 %v34, %v3228
    %v3230 = vand.u32 %v3229, 4294901760
    %v3231 = vsub.f32 %v3229, %v3230
    %v3232 = vand.u32 %v3231, 4294901760
    %3233 = vmatpush1.msra.mxu0 %v3232
    %3234 = vmatprep.subr.mxu0 0.0
    %3235 = vmatpush1.msra.mxu0 0.0
    %3236 = vmatprep.subr.mxu0 0.0
    %3237 = vmatpush1.msra.mxu0 0.0
    %3238 = vmatprep.subr.mxu0 0.0
    %3239 = vmatpush1.msra.mxu0 0.0
    %3240 = vmatprep.subr.mxu0 0.0
    %3241 = vmatpush1.msra.mxu0 0.0
    %3242 = vmatprep.subr.mxu0 0.0
    %3243 = vmatpush1.msra.mxu0 0.0
    %3244 = vmatprep.subr.mxu0 0.0
    %3245 = vmatpush1.msra.mxu0 0.0
    %3246 = vmatprep.subr.mxu0 0.0
    %3247 = vmatpush1.msra.mxu0 0.0
    %3248 = vmatprep.subr.mxu0 0.0
    %3249 = vmatpush1.msra.mxu0 0.0
    %3250 = vmatprep.subr.mxu0 0.0
    %3251 = vmatpush1.msra.mxu0 0.0
    %3252 = vmatprep.subr.mxu0 0.0
    %3253 = vmatpush1.msra.mxu0 0.0
    %3254 = vmatprep.subr.mxu0 0.0
    %3255 = vmatpush1.msra.mxu0 0.0
    %3256 = vmatprep.subr.mxu0 0.0
    %3257 = vmatpush1.msra.mxu0 0.0
    %3258 = vmatprep.subr.mxu0 0.0
    %3259 = vmatpush1.msra.mxu0 0.0
    %3260 = vmatprep.subr.mxu0 0.0
    %3261 = vmatpush1.msra.mxu0 0.0
    %3262 = vmatprep.subr.mxu0 0.0
    %3263 = vmatpush1.msra.mxu0 0.0
    %3264 = vmatprep.subr.mxu0 0.0
    %3265 = vmatpush1.msra.mxu0 0.0
    %3266 = vmatprep.subr.mxu0 0.0
    %3267 = vmatpush1.msra.mxu0 0.0
    %3268 = vmatprep.subr.mxu0 0.0
    %3269 = vmatpush1.msra.mxu0 0.0
    %3270 = vmatprep.subr.mxu0 0.0
    %3271 = vmatpush1.msra.mxu0 0.0
    %3272 = vmatprep.subr.mxu0 0.0
    %3273 = vmatpush1.msra.mxu0 0.0
    %3274 = vmatprep.subr.mxu0 0.0
    %3275 = vmatpush1.msra.mxu0 0.0
    %3276 = vmatprep.subr.mxu0 0.0
    %3277 = vmatpush1.msra.mxu0 0.0
    %3278 = vmatprep.subr.mxu0 0.0
    %3279 = vmatpush1.msra.mxu0 0.0
    %3280 = vmatprep.subr.mxu0 0.0
    %3281 = vmatpush1.msra.mxu0 0.0
    %3282 = vmatprep.subr.mxu0 0.0
    %3283 = vmatpush1.msra.mxu0 0.0
    %3284 = vmatprep.subr.mxu0 0.0
    %3285 = vmatpush1.msra.mxu0 0.0
    %3286 = vmatprep.subr.mxu0 0.0
    %3287 = vmatpush1.msra.mxu0 0.0
    %3288 = vmatprep.subr.mxu0 0.0
    %3289 = vmatpush1.msra.mxu0 0.0
    %3290 = vmatprep.mubr.f32.mxu0 0.0
    %v3291 = vand.u32 %v3112, 4294901760
    %3292 = vmatmul.mubr.f32.gmra.mrb[0].mxu0 %v3291
    %v3293 = vpop.f32.mrb[0].mxu0
    %v3294 = vadd.f32 %v3193, %v3293
    %v3295 = vpop.f32.mrb[0].mxu0
    %3296 = vmatprep.mubr.f32.mxu0 0.0
    %v3297 = vand.u32 %v3115, 4294901760
    %3298 = vmatmul.mubr.f32.gmra.mrb[0].mxu0 %v3297
    %v3299 = vpop.f32.mrb[0].mxu0
    %v3300 = vadd.f32 %v3203, %v3299
    %v3301 = vpop.f32.mrb[0].mxu0
    %3302 = vdwg.mxu0
    %3303 = vmatprep.subr.mxu0 0.0
    %v3304 = vand.u32 %v31, 4294901760
    %v3305 = vsub.f32 %v31, %v3304
    %3306 = vmatpush1.msra.mxu0 %v3305
    %3307 = vmatprep.subr.mxu0 0.0
    %v3308 = vand.u32 %v32, 4294901760
    %v3309 = vsub.f32 %v32, %v3308
    %3310 = vmatpush1.msra.mxu0 %v3309
    %3311 = vmatprep.subr.mxu0 0.0
    %v3312 = vand.u32 %v33, 4294901760
    %v3313 = vsub.f32 %v33, %v3312
    %3314 = vmatpush1.msra.mxu0 %v3313
    %3315 = vmatprep.subr.mxu0 0.0
    %v3316 = vand.u32 %v34, 4294901760
    %v3317 = vsub.f32 %v34, %v3316
    %3318 = vmatpush1.msra.mxu0 %v3317
    %3319 = vmatprep.subr.mxu0 0.0
    %3320 = vmatpush1.msra.mxu0 0.0
    %3321 = vmatprep.subr.mxu0 0.0
    %3322 = vmatpush1.msra.mxu0 0.0
    %3323 = vmatprep.subr.mxu0 0.0
    %3324 = vmatpush1.msra.mxu0 0.0
    %3325 = vmatprep.subr.mxu0 0.0
    %3326 = vmatpush1.msra.mxu0 0.0
    %3327 = vmatprep.subr.mxu0 0.0
    %3328 = vmatpush1.msra.mxu0 0.0
    %3329 = vmatprep.subr.mxu0 0.0
    %3330 = vmatpush1.msra.mxu0 0.0
    %3331 = vmatprep.subr.mxu0 0.0
    %3332 = vmatpush1.msra.mxu0 0.0
    %3333 = vmatprep.subr.mxu0 0.0
    %3334 = vmatpush1.msra.mxu0 0.0
    %3335 = vmatprep.subr.mxu0 0.0
    %3336 = vmatpush1.msra.mxu0 0.0
    %3337 = vmatprep.subr.mxu0 0.0
    %3338 = vmatpush1.msra.mxu0 0.0
    %3339 = vmatprep.subr.mxu0 0.0
    %3340 = vmatpush1.msra.mxu0 0.0
    %3341 = vmatprep.subr.mxu0 0.0
    %3342 = vmatpush1.msra.mxu0 0.0
    %3343 = vmatprep.subr.mxu0 0.0
    %3344 = vmatpush1.msra.mxu0 0.0
    %3345 = vmatprep.subr.mxu0 0.0
    %3346 = vmatpush1.msra.mxu0 0.0
    %3347 = vmatprep.subr.mxu0 0.0
    %3348 = vmatpush1.msra.mxu0 0.0
    %3349 = vmatprep.subr.mxu0 0.0
    %3350 = vmatpush1.msra.mxu0 0.0
    %3351 = vmatprep.subr.mxu0 0.0
    %3352 = vmatpush1.msra.mxu0 0.0
    %3353 = vmatprep.subr.mxu0 0.0
    %3354 = vmatpush1.msra.mxu0 0.0
    %3355 = vmatprep.subr.mxu0 0.0
    %3356 = vmatpush1.msra.mxu0 0.0
    %3357 = vmatprep.subr.mxu0 0.0
    %3358 = vmatpush1.msra.mxu0 0.0
    %3359 = vmatprep.subr.mxu0 0.0
    %3360 = vmatpush1.msra.mxu0 0.0
    %3361 = vmatprep.subr.mxu0 0.0
    %3362 = vmatpush1.msra.mxu0 0.0
    %3363 = vmatprep.subr.mxu0 0.0
    %3364 = vmatpush1.msra.mxu0 0.0
    %3365 = vmatprep.subr.mxu0 0.0
    %3366 = vmatpush1.msra.mxu0 0.0
    %3367 = vmatprep.subr.mxu0 0.0
    %3368 = vmatpush1.msra.mxu0 0.0
    %3369 = vmatprep.subr.mxu0 0.0
    %3370 = vmatpush1.msra.mxu0 0.0
    %3371 = vmatprep.subr.mxu0 0.0
    %3372 = vmatpush1.msra.mxu0 0.0
    %3373 = vmatprep.subr.mxu0 0.0
    %3374 = vmatpush1.msra.mxu0 0.0
    %3375 = vmatprep.mubr.f32.mxu0 0.0
    %v3376 = vand.u32 %v3112, 4294901760
    %v3377 = vsub.f32 %v3112, %v3376
    %3378 = vmatmul.mubr.f32.gmra.mrb[0].mxu0 %v3377
    %v3379 = vpop.f32.mrb[0].mxu0
    %v3380 = vadd.f32 %v3294, %v3379
    %v3381 = vpop.f32.mrb[0].mxu0
    %3382 = vmatprep.mubr.f32.mxu0 0.0
    %v3383 = vand.u32 %v3115, 4294901760
    %v3384 = vsub.f32 %v3115, %v3383
    %3385 = vmatmul.mubr.f32.gmra.mrb[0].mxu0 %v3384
    %v3386 = vpop.f32.mrb[0].mxu0
    %v3387 = vadd.f32 %v3300, %v3386
    %v3388 = vpop.f32.mrb[0].mxu0
    %3389 = vdwg.mxu0
    %3390 = vmatprep.subr.mxu0 0.0
    %v3391 = vand.u32 %v31, 4294901760
    %3392 = vmatpush1.msra.mxu0 %v3391
    %3393 = vmatprep.subr.mxu0 0.0
    %v3394 = vand.u32 %v32, 4294901760
    %3395 = vmatpush1.msra.mxu0 %v3394
    %3396 = vmatprep.subr.mxu0 0.0
    %v3397 = vand.u32 %v33, 4294901760
    %3398 = vmatpush1.msra.mxu0 %v3397
    %3399 = vmatprep.subr.mxu0 0.0
    %v3400 = vand.u32 %v34, 4294901760
    %3401 = vmatpush1.msra.mxu0 %v3400
    %3402 = vmatprep.subr.mxu0 0.0
    %3403 = vmatpush1.msra.mxu0 0.0
    %3404 = vmatprep.subr.mxu0 0.0
    %3405 = vmatpush1.msra.mxu0 0.0
    %3406 = vmatprep.subr.mxu0 0.0
    %3407 = vmatpush1.msra.mxu0 0.0
    %3408 = vmatprep.subr.mxu0 0.0
    %3409 = vmatpush1.msra.mxu0 0.0
    %3410 = vmatprep.subr.mxu0 0.0
    %3411 = vmatpush1.msra.mxu0 0.0
    %3412 = vmatprep.subr.mxu0 0.0
    %3413 = vmatpush1.msra.mxu0 0.0
    %3414 = vmatprep.subr.mxu0 0.0
    %3415 = vmatpush1.msra.mxu0 0.0
    %3416 = vmatprep.subr.mxu0 0.0
    %3417 = vmatpush1.msra.mxu0 0.0
    %3418 = vmatprep.subr.mxu0 0.0
    %3419 = vmatpush1.msra.mxu0 0.0
    %3420 = vmatprep.subr.mxu0 0.0
    %3421 = vmatpush1.msra.mxu0 0.0
    %3422 = vmatprep.subr.mxu0 0.0
    %3423 = vmatpush1.msra.mxu0 0.0
    %3424 = vmatprep.subr.mxu0 0.0
    %3425 = vmatpush1.msra.mxu0 0.0
    %3426 = vmatprep.subr.mxu0 0.0
    %3427 = vmatpush1.msra.mxu0 0.0
    %3428 = vmatprep.subr.mxu0 0.0
    %3429 = vmatpush1.msra.mxu0 0.0
    %3430 = vmatprep.subr.mxu0 0.0
    %3431 = vmatpush1.msra.mxu0 0.0
    %3432 = vmatprep.subr.mxu0 0.0
    %3433 = vmatpush1.msra.mxu0 0.0
    %3434 = vmatprep.subr.mxu0 0.0
    %3435 = vmatpush1.msra.mxu0 0.0
    %3436 = vmatprep.subr.mxu0 0.0
    %3437 = vmatpush1.msra.mxu0 0.0
    %3438 = vmatprep.subr.mxu0 0.0
    %3439 = vmatpush1.msra.mxu0 0.0
    %3440 = vmatprep.subr.mxu0 0.0
    %3441 = vmatpush1.msra.mxu0 0.0
    %3442 = vmatprep.subr.mxu0 0.0
    %3443 = vmatpush1.msra.mxu0 0.0
    %3444 = vmatprep.subr.mxu0 0.0
    %3445 = vmatpush1.msra.mxu0 0.0
    %3446 = vmatprep.subr.mxu0 0.0
    %3447 = vmatpush1.msra.mxu0 0.0
    %3448 = vmatprep.subr.mxu0 0.0
    %3449 = vmatpush1.msra.mxu0 0.0
    %3450 = vmatprep.subr.mxu0 0.0
    %3451 = vmatpush1.msra.mxu0 0.0
    %3452 = vmatprep.subr.mxu0 0.0
    %3453 = vmatpush1.msra.mxu0 0.0
    %3454 = vmatprep.subr.mxu0 0.0
    %3455 = vmatpush1.msra.mxu0 0.0
    %3456 = vmatprep.subr.mxu0 0.0
    %3457 = vmatpush1.msra.mxu0 0.0
    %3458 = vmatprep.mubr.f32.mxu0 0.0
    %v3459 = vand.u32 %v3112, 4294901760
    %v3460 = vsub.f32 %v3112, %v3459
    %v3461 = vand.u32 %v3460, 4294901760
    %3462 = vmatmul.mubr.f32.gmra.mrb[0].mxu0 %v3461
    %v3463 = vpop.f32.mrb[0].mxu0
    %v3464 = vadd.f32 %v3380, %v3463
    %v3465 = vpop.f32.mrb[0].mxu0
    %3466 = vmatprep.mubr.f32.mxu0 0.0
    %v3467 = vand.u32 %v3115, 4294901760
    %v3468 = vsub.f32 %v3115, %v3467
    %v3469 = vand.u32 %v3468, 4294901760
    %3470 = vmatmul.mubr.f32.gmra.mrb[0].mxu0 %v3469
    %v3471 = vpop.f32.mrb[0].mxu0
    %v3472 = vadd.f32 %v3387, %v3471
    %v3473 = vpop.f32.mrb[0].mxu0
    %3474 = vdwg.mxu0
    %3475 = vmatprep.subr.mxu0 0.0
    %v3476 = vand.u32 %v31, 4294901760
    %v3477 = vsub.f32 %v31, %v3476
    %v3478 = vand.u32 %v3477, 4294901760
    %3479 = vmatpush1.msra.mxu0 %v3478
    %3480 = vmatprep.subr.mxu0 0.0
    %v3481 = vand.u32 %v32, 4294901760
    %v3482 = vsub.f32 %v32, %v3481
    %v3483 = vand.u32 %v3482, 4294901760
    %3484 = vmatpush1.msra.mxu0 %v3483
    %3485 = vmatprep.subr.mxu0 0.0
    %v3486 = vand.u32 %v33, 4294901760
    %v3487 = vsub.f32 %v33, %v3486
    %v3488 = vand.u32 %v3487, 4294901760
    %3489 = vmatpush1.msra.mxu0 %v3488
    %3490 = vmatprep.subr.mxu0 0.0
    %v3491 = vand.u32 %v34, 4294901760
    %v3492 = vsub.f32 %v34, %v3491
    %v3493 = vand.u32 %v3492, 4294901760
    %3494 = vmatpush1.msra.mxu0 %v3493
    %3495 = vmatprep.subr.mxu0 0.0
    %3496 = vmatpush1.msra.mxu0 0.0
    %3497 = vmatprep.subr.mxu0 0.0
    %3498 = vmatpush1.msra.mxu0 0.0
    %3499 = vmatprep.subr.mxu0 0.0
    %3500 = vmatpush1.msra.mxu0 0.0
    %3501 = vmatprep.subr.mxu0 0.0
    %3502 = vmatpush1.msra.mxu0 0.0
    %3503 = vmatprep.subr.mxu0 0.0
    %3504 = vmatpush1.msra.mxu0 0.0
    %3505 = vmatprep.subr.mxu0 0.0
    %3506 = vmatpush1.msra.mxu0 0.0
    %3507 = vmatprep.subr.mxu0 0.0
    %3508 = vmatpush1.msra.mxu0 0.0
    %3509 = vmatprep.subr.mxu0 0.0
    %3510 = vmatpush1.msra.mxu0 0.0
    %3511 = vmatprep.subr.mxu0 0.0
    %3512 = vmatpush1.msra.mxu0 0.0
    %3513 = vmatprep.subr.mxu0 0.0
    %3514 = vmatpush1.msra.mxu0 0.0
    %3515 = vmatprep.subr.mxu0 0.0
    %3516 = vmatpush1.msra.mxu0 0.0
    %3517 = vmatprep.subr.mxu0 0.0
    %3518 = vmatpush1.msra.mxu0 0.0
    %3519 = vmatprep.subr.mxu0 0.0
    %3520 = vmatpush1.msra.mxu0 0.0
    %3521 = vmatprep.subr.mxu0 0.0
    %3522 = vmatpush1.msra.mxu0 0.0
    %3523 = vmatprep.subr.mxu0 0.0
    %3524 = vmatpush1.msra.mxu0 0.0
    %3525 = vmatprep.subr.mxu0 0.0
    %3526 = vmatpush1.msra.mxu0 0.0
    %3527 = vmatprep.subr.mxu0 0.0
    %3528 = vmatpush1.msra.mxu0 0.0
    %3529 = vmatprep.subr.mxu0 0.0
    %3530 = vmatpush1.msra.mxu0 0.0
    %3531 = vmatprep.subr.mxu0 0.0
    %3532 = vmatpush1.msra.mxu0 0.0
    %3533 = vmatprep.subr.mxu0 0.0
    %3534 = vmatpush1.msra.mxu0 0.0
    %3535 = vmatprep.subr.mxu0 0.0
    %3536 = vmatpush1.msra.mxu0 0.0
    %3537 = vmatprep.subr.mxu0 0.0
    %3538 = vmatpush1.msra.mxu0 0.0
    %3539 = vmatprep.subr.mxu0 0.0
    %3540 = vmatpush1.msra.mxu0 0.0
    %3541 = vmatprep.subr.mxu0 0.0
    %3542 = vmatpush1.msra.mxu0 0.0
    %3543 = vmatprep.subr.mxu0 0.0
    %3544 = vmatpush1.msra.mxu0 0.0
    %3545 = vmatprep.subr.mxu0 0.0
    %3546 = vmatpush1.msra.mxu0 0.0
    %3547 = vmatprep.subr.mxu0 0.0
    %3548 = vmatpush1.msra.mxu0 0.0
    %3549 = vmatprep.subr.mxu0 0.0
    %3550 = vmatpush1.msra.mxu0 0.0
    %3551 = vmatprep.mubr.f32.mxu0 0.0
    %v3552 = vand.u32 %v3112, 4294901760
    %3553 = vmatmul.mubr.f32.gmra.mrb[0].mxu0 %v3552
    %v3554 = vpop.f32.mrb[0].mxu0
    %v3555 = vadd.f32 %v3464, %v3554
    %v3556 = vpop.f32.mrb[0].mxu0
    %3557 = vmatprep.mubr.f32.mxu0 0.0
    %v3558 = vand.u32 %v3115, 4294901760
    %3559 = vmatmul.mubr.f32.gmra.mrb[0].mxu0 %v3558
    %v3560 = vpop.f32.mrb[0].mxu0
    %v3561 = vadd.f32 %v3472, %v3560
    %v3562 = vpop.f32.mrb[0].mxu0
    %3563 = vdwg.mxu0
    %3564 = vmatprep.subr.mxu0 0.0
    %v3565 = vand.u32 %v31, 4294901760
    %3566 = vmatpush1.msra.mxu0 %v3565
    %3567 = vmatprep.subr.mxu0 0.0
    %v3568 = vand.u32 %v32, 4294901760
    %3569 = vmatpush1.msra.mxu0 %v3568
    %3570 = vmatprep.subr.mxu0 0.0
    %v3571 = vand.u32 %v33, 4294901760
    %3572 = vmatpush1.msra.mxu0 %v3571
    %3573 = vmatprep.subr.mxu0 0.0
    %v3574 = vand.u32 %v34, 4294901760
    %3575 = vmatpush1.msra.mxu0 %v3574
    %3576 = vmatprep.subr.mxu0 0.0
    %3577 = vmatpush1.msra.mxu0 0.0
    %3578 = vmatprep.subr.mxu0 0.0
    %3579 = vmatpush1.msra.mxu0 0.0
    %3580 = vmatprep.subr.mxu0 0.0
    %3581 = vmatpush1.msra.mxu0 0.0
    %3582 = vmatprep.subr.mxu0 0.0
    %3583 = vmatpush1.msra.mxu0 0.0
    %3584 = vmatprep.subr.mxu0 0.0
    %3585 = vmatpush1.msra.mxu0 0.0
    %3586 = vmatprep.subr.mxu0 0.0
    %3587 = vmatpush1.msra.mxu0 0.0
    %3588 = vmatprep.subr.mxu0 0.0
    %3589 = vmatpush1.msra.mxu0 0.0
    %3590 = vmatprep.subr.mxu0 0.0
    %3591 = vmatpush1.msra.mxu0 0.0
    %3592 = vmatprep.subr.mxu0 0.0
    %3593 = vmatpush1.msra.mxu0 0.0
    %3594 = vmatprep.subr.mxu0 0.0
    %3595 = vmatpush1.msra.mxu0 0.0
    %3596 = vmatprep.subr.mxu0 0.0
    %3597 = vmatpush1.msra.mxu0 0.0
    %3598 = vmatprep.subr.mxu0 0.0
    %3599 = vmatpush1.msra.mxu0 0.0
    %3600 = vmatprep.subr.mxu0 0.0
    %3601 = vmatpush1.msra.mxu0 0.0
    %3602 = vmatprep.subr.mxu0 0.0
    %3603 = vmatpush1.msra.mxu0 0.0
    %3604 = vmatprep.subr.mxu0 0.0
    %3605 = vmatpush1.msra.mxu0 0.0
    %3606 = vmatprep.subr.mxu0 0.0
    %3607 = vmatpush1.msra.mxu0 0.0
    %3608 = vmatprep.subr.mxu0 0.0
    %3609 = vmatpush1.msra.mxu0 0.0
    %3610 = vmatprep.subr.mxu0 0.0
    %3611 = vmatpush1.msra.mxu0 0.0
    %3612 = vmatprep.subr.mxu0 0.0
    %3613 = vmatpush1.msra.mxu0 0.0
    %3614 = vmatprep.subr.mxu0 0.0
    %3615 = vmatpush1.msra.mxu0 0.0
    %3616 = vmatprep.subr.mxu0 0.0
    %3617 = vmatpush1.msra.mxu0 0.0
    %3618 = vmatprep.subr.mxu0 0.0
    %3619 = vmatpush1.msra.mxu0 0.0
    %3620 = vmatprep.subr.mxu0 0.0
    %3621 = vmatpush1.msra.mxu0 0.0
    %3622 = vmatprep.subr.mxu0 0.0
    %3623 = vmatpush1.msra.mxu0 0.0
    %3624 = vmatprep.subr.mxu0 0.0
    %3625 = vmatpush1.msra.mxu0 0.0
    %3626 = vmatprep.subr.mxu0 0.0
    %3627 = vmatpush1.msra.mxu0 0.0
    %3628 = vmatprep.subr.mxu0 0.0
    %3629 = vmatpush1.msra.mxu0 0.0
    %3630 = vmatprep.subr.mxu0 0.0
    %3631 = vmatpush1.msra.mxu0 0.0
    %3632 = vmatprep.mubr.f32.mxu0 0.0
    %v3633 = vand.u32 %v3112, 4294901760
    %3634 = vmatmul.mubr.f32.gmra.mrb[0].mxu0 %v3633
    %v3635 = vpop.f32.mrb[0].mxu0
    %v3636 = vadd.f32 %v3555, %v3635
    %v3637 = vpop.f32.mrb[0].mxu0
    %3638 = vmatprep.mubr.f32.mxu0 0.0
    %v3639 = vand.u32 %v3115, 4294901760
    %3640 = vmatmul.mubr.f32.gmra.mrb[0].mxu0 %v3639
    %v3641 = vpop.f32.mrb[0].mxu0
    %v3642 = vadd.f32 %v3561, %v3641
    %v3643 = vpop.f32.mrb[0].mxu0
    %3644 = vdwg.mxu0
    %v3645 = vmul.f32 %v3636, 0.5
    %v3646 = vmul.f32 %v3642, 0.5
    %v3647 = vmul.f32 %v3636, 0.70710677
    %v3648 = vmul.f32 %v3642, 0.70710677
    %vm3649 = vcmp.ge.f32.partialorder %v3647, 0.0
    %vm3650 = vcmp.ge.f32.partialorder %v3648, 0.0
    %v3651 = vsel %vm3649, 1.0, -1.0
    %v3652 = vsel %vm3650, 1.0, -1.0
    %v3653 = vand.u32 2147483647, %v3647
    %v3654 = vand.u32 2147483647, %v3648
    %v3655 = vmul.f32 %v3653, 0.3275911
    %v3656 = vmul.f32 %v3654, 0.3275911
    %v3657 = vadd.f32 %v3655, 1.0
    %v3658 = vadd.f32 %v3656, 1.0
    %v3659 = vrcp.pop %v3657
    %v3660 = vmul.f32 1.0, %v3659
    %v3661 = vrcp.pop %v3658
    %v3662 = vmul.f32 1.0, %v3661
    %v3663 = vmul.f32 %v3660, 1.0614054
    %v3664 = vmul.f32 %v3662, 1.0614054
    %v3665 = vadd.f32 %v3663, -1.4531521
    %v3666 = vadd.f32 %v3664, -1.4531521
    %v3667 = vmul.f32 %v3665, %v3660
    %v3668 = vmul.f32 %v3666, %v3662
    %v3669 = vadd.f32 %v3667, 1.4214138
    %v3670 = vadd.f32 %v3668, 1.4214138
    %v3671 = vmul.f32 %v3669, %v3660
    %v3672 = vmul.f32 %v3670, %v3662
    %v3673 = vadd.f32 %v3671, -0.28449672
    %v3674 = vadd.f32 %v3672, -0.28449672
    %v3675 = vmul.f32 %v3673, %v3660
    %v3676 = vmul.f32 %v3674, %v3662
    %v3677 = vadd.f32 %v3675, 0.2548296
    %v3678 = vadd.f32 %v3676, 0.2548296
    %v3679 = vmul.f32 %v3677, %v3660
    %v3680 = vmul.f32 %v3678, %v3662
    %v3681 = vsub.f32 0.0, %v3653
    %v3682 = vsub.f32 0.0, %v3654
    %v3683 = vmul.f32 %v3681, %v3653
    %v3684 = vmul.f32 %v3682, %v3654
    %v3685 = vmul.f32 %v3683, 1.442695
    %v3686 = vpow.pop %v3685
    %v3687 = vmul.f32 %v3684, 1.442695
    %v3688 = vpow.pop %v3687
    %v3689 = vmul.f32 %v3679, %v3686
    %v3690 = vmul.f32 %v3680, %v3688
    %v3691 = vsub.f32 1.0, %v3689
    %v3692 = vsub.f32 1.0, %v3690
    %v3693 = vmul.f32 %v3651, %v3691
    %v3694 = vmul.f32 %v3652, %v3692
    %v3695 = vadd.f32 %v3693, 1.0
    %v3696 = vadd.f32 %v3694, 1.0
    %v3697 = vmul.f32 %v3645, %v3695
    %v3698 = vmul.f32 %v3646, %v3696
    %v3699 = vlaneseq
    %v3700 = vshrl.u32 %v3699, 7
    %v3701 = vsub.s32 0, %v3700
    %v3702 = vrot.slane %v41, %v3701
    %3703 = vmatprep.subr.mxu0 0.0
    %v3704 = vand.u32 %v35, 4294901760
    %3705 = vmatpush1.xpose.msra.mxu0 %v3704
    %3706 = vmatprep.subr.mxu0 0.0
    %v3707 = vand.u32 %v36, 4294901760
    %3708 = vmatpush1.xpose.msra.mxu0 %v3707
    %3709 = vmatprep.subr.mxu0 0.0
    %v3710 = vand.u32 %v37, 4294901760
    %3711 = vmatpush1.xpose.msra.mxu0 %v3710
    %3712 = vmatprep.subr.mxu0 0.0
    %v3713 = vand.u32 %v38, 4294901760
    %3714 = vmatpush1.xpose.msra.mxu0 %v3713
    %3715 = vmatprep.subr.mxu0 0.0
    %3716 = vmatpush1.xpose.msra.mxu0 0.0
    %3717 = vmatprep.subr.mxu0 0.0
    %3718 = vmatpush1.xpose.msra.mxu0 0.0
    %3719 = vmatprep.subr.mxu0 0.0
    %3720 = vmatpush1.xpose.msra.mxu0 0.0
    %3721 = vmatprep.subr.mxu0 0.0
    %3722 = vmatpush1.xpose.msra.mxu0 0.0
    %3723 = vmatprep.subr.mxu0 0.0
    %3724 = vmatpush1.xpose.msra.mxu0 0.0
    %3725 = vmatprep.subr.mxu0 0.0
    %3726 = vmatpush1.xpose.msra.mxu0 0.0
    %3727 = vmatprep.subr.mxu0 0.0
    %3728 = vmatpush1.xpose.msra.mxu0 0.0
    %3729 = vmatprep.subr.mxu0 0.0
    %3730 = vmatpush1.xpose.msra.mxu0 0.0
    %3731 = vmatprep.subr.mxu0 0.0
    %3732 = vmatpush1.xpose.msra.mxu0 0.0
    %3733 = vmatprep.subr.mxu0 0.0
    %3734 = vmatpush1.xpose.msra.mxu0 0.0
    %3735 = vmatprep.subr.mxu0 0.0
    %3736 = vmatpush1.xpose.msra.mxu0 0.0
    %3737 = vmatprep.subr.mxu0 0.0
    %3738 = vmatpush1.xpose.msra.mxu0 0.0
    %3739 = vmatprep.subr.mxu0 0.0
    %3740 = vmatpush1.xpose.msra.mxu0 0.0
    %3741 = vmatprep.subr.mxu0 0.0
    %3742 = vmatpush1.xpose.msra.mxu0 0.0
    %3743 = vmatprep.subr.mxu0 0.0
    %3744 = vmatpush1.xpose.msra.mxu0 0.0
    %3745 = vmatprep.subr.mxu0 0.0
    %3746 = vmatpush1.xpose.msra.mxu0 0.0
    %3747 = vmatprep.subr.mxu0 0.0
    %3748 = vmatpush1.xpose.msra.mxu0 0.0
    %3749 = vmatprep.subr.mxu0 0.0
    %3750 = vmatpush1.xpose.msra.mxu0 0.0
    %3751 = vmatprep.subr.mxu0 0.0
    %3752 = vmatpush1.xpose.msra.mxu0 0.0
    %3753 = vmatprep.subr.mxu0 0.0
    %3754 = vmatpush1.xpose.msra.mxu0 0.0
    %3755 = vmatprep.subr.mxu0 0.0
    %3756 = vmatpush1.xpose.msra.mxu0 0.0
    %3757 = vmatprep.subr.mxu0 0.0
    %3758 = vmatpush1.xpose.msra.mxu0 0.0
    %3759 = vmatprep.subr.mxu0 0.0
    %3760 = vmatpush1.xpose.msra.mxu0 0.0
    %3761 = vmatprep.subr.mxu0 0.0
    %3762 = vmatpush1.xpose.msra.mxu0 0.0
    %3763 = vmatprep.subr.mxu0 0.0
    %3764 = vmatpush1.xpose.msra.mxu0 0.0
    %3765 = vmatprep.subr.mxu0 0.0
    %3766 = vmatpush1.xpose.msra.mxu0 0.0
    %3767 = vmatprep.subr.mxu0 0.0
    %3768 = vmatpush1.xpose.msra.mxu0 0.0
    %3769 = vmatprep.subr.mxu0 0.0
    %3770 = vmatpush1.xpose.msra.mxu0 0.0
    %3771 = vmatprep.mubr.f32.mxu0 0.0
    %v3772 = vand.u32 %v3697, 4294901760
    %v3773 = vsub.f32 %v3697, %v3772
    %v3774 = vand.u32 %v3773, 4294901760
    %v3775 = vsub.f32 %v3773, %v3774
    %v3776 = vand.u32 %v3775, 4294901760
    %3777 = vmatmul.mubr.f32.gmra.mrb[0].mxu0 %v3776
    %v3778 = vpop.f32.mrb[0].mxu0
    %v3779 = vadd.f32 %v3702, %v3778
    %v3780 = vpop.f32.mrb[0].mxu0
    %3781 = vmatprep.mubr.f32.mxu0 0.0
    %v3782 = vand.u32 %v3698, 4294901760
    %v3783 = vsub.f32 %v3698, %v3782
    %v3784 = vand.u32 %v3783, 4294901760
    %v3785 = vsub.f32 %v3783, %v3784
    %v3786 = vand.u32 %v3785, 4294901760
    %3787 = vmatmul.mubr.f32.gmra.mrb[0].mxu0 %v3786
    %v3788 = vpop.f32.mrb[0].mxu0
    %v3789 = vadd.f32 %v3702, %v3788
    %v3790 = vpop.f32.mrb[0].mxu0
    %3791 = vdwg.mxu0
    %3792 = vmatprep.subr.mxu0 0.0
    %v3793 = vand.u32 %v35, 4294901760
    %v3794 = vsub.f32 %v35, %v3793
    %v3795 = vand.u32 %v3794, 4294901760
    %v3796 = vsub.f32 %v3794, %v3795
    %v3797 = vand.u32 %v3796, 4294901760
    %3798 = vmatpush1.xpose.msra.mxu0 %v3797
    %3799 = vmatprep.subr.mxu0 0.0
    %v3800 = vand.u32 %v36, 4294901760
    %v3801 = vsub.f32 %v36, %v3800
    %v3802 = vand.u32 %v3801, 4294901760
    %v3803 = vsub.f32 %v3801, %v3802
    %v3804 = vand.u32 %v3803, 4294901760
    %3805 = vmatpush1.xpose.msra.mxu0 %v3804
    %3806 = vmatprep.subr.mxu0 0.0
    %v3807 = vand.u32 %v37, 4294901760
    %v3808 = vsub.f32 %v37, %v3807
    %v3809 = vand.u32 %v3808, 4294901760
    %v3810 = vsub.f32 %v3808, %v3809
    %v3811 = vand.u32 %v3810, 4294901760
    %3812 = vmatpush1.xpose.msra.mxu0 %v3811
    %3813 = vmatprep.subr.mxu0 0.0
    %v3814 = vand.u32 %v38, 4294901760
    %v3815 = vsub.f32 %v38, %v3814
    %v3816 = vand.u32 %v3815, 4294901760
    %v3817 = vsub.f32 %v3815, %v3816
    %v3818 = vand.u32 %v3817, 4294901760
    %3819 = vmatpush1.xpose.msra.mxu0 %v3818
    %3820 = vmatprep.subr.mxu0 0.0
    %3821 = vmatpush1.xpose.msra.mxu0 0.0
    %3822 = vmatprep.subr.mxu0 0.0
    %3823 = vmatpush1.xpose.msra.mxu0 0.0
    %3824 = vmatprep.subr.mxu0 0.0
    %3825 = vmatpush1.xpose.msra.mxu0 0.0
    %3826 = vmatprep.subr.mxu0 0.0
    %3827 = vmatpush1.xpose.msra.mxu0 0.0
    %3828 = vmatprep.subr.mxu0 0.0
    %3829 = vmatpush1.xpose.msra.mxu0 0.0
    %3830 = vmatprep.subr.mxu0 0.0
    %3831 = vmatpush1.xpose.msra.mxu0 0.0
    %3832 = vmatprep.subr.mxu0 0.0
    %3833 = vmatpush1.xpose.msra.mxu0 0.0
    %3834 = vmatprep.subr.mxu0 0.0
    %3835 = vmatpush1.xpose.msra.mxu0 0.0
    %3836 = vmatprep.subr.mxu0 0.0
    %3837 = vmatpush1.xpose.msra.mxu0 0.0
    %3838 = vmatprep.subr.mxu0 0.0
    %3839 = vmatpush1.xpose.msra.mxu0 0.0
    %3840 = vmatprep.subr.mxu0 0.0
    %3841 = vmatpush1.xpose.msra.mxu0 0.0
    %3842 = vmatprep.subr.mxu0 0.0
    %3843 = vmatpush1.xpose.msra.mxu0 0.0
    %3844 = vmatprep.subr.mxu0 0.0
    %3845 = vmatpush1.xpose.msra.mxu0 0.0
    %3846 = vmatprep.subr.mxu0 0.0
    %3847 = vmatpush1.xpose.msra.mxu0 0.0
    %3848 = vmatprep.subr.mxu0 0.0
    %3849 = vmatpush1.xpose.msra.mxu0 0.0
    %3850 = vmatprep.subr.mxu0 0.0
    %3851 = vmatpush1.xpose.msra.mxu0 0.0
    %3852 = vmatprep.subr.mxu0 0.0
    %3853 = vmatpush1.xpose.msra.mxu0 0.0
    %3854 = vmatprep.subr.mxu0 0.0
    %3855 = vmatpush1.xpose.msra.mxu0 0.0
    %3856 = vmatprep.subr.mxu0 0.0
    %3857 = vmatpush1.xpose.msra.mxu0 0.0
    %3858 = vmatprep.subr.mxu0 0.0
    %3859 = vmatpush1.xpose.msra.mxu0 0.0
    %3860 = vmatprep.subr.mxu0 0.0
    %3861 = vmatpush1.xpose.msra.mxu0 0.0
    %3862 = vmatprep.subr.mxu0 0.0
    %3863 = vmatpush1.xpose.msra.mxu0 0.0
    %3864 = vmatprep.subr.mxu0 0.0
    %3865 = vmatpush1.xpose.msra.mxu0 0.0
    %3866 = vmatprep.subr.mxu0 0.0
    %3867 = vmatpush1.xpose.msra.mxu0 0.0
    %3868 = vmatprep.subr.mxu0 0.0
    %3869 = vmatpush1.xpose.msra.mxu0 0.0
    %3870 = vmatprep.subr.mxu0 0.0
    %3871 = vmatpush1.xpose.msra.mxu0 0.0
    %3872 = vmatprep.subr.mxu0 0.0
    %3873 = vmatpush1.xpose.msra.mxu0 0.0
    %3874 = vmatprep.subr.mxu0 0.0
    %3875 = vmatpush1.xpose.msra.mxu0 0.0
    %3876 = vmatprep.mubr.f32.mxu0 0.0
    %v3877 = vand.u32 %v3697, 4294901760
    %3878 = vmatmul.mubr.f32.gmra.mrb[0].mxu0 %v3877
    %v3879 = vpop.f32.mrb[0].mxu0
    %v3880 = vadd.f32 %v3779, %v3879
    %v3881 = vpop.f32.mrb[0].mxu0
    %3882 = vmatprep.mubr.f32.mxu0 0.0
    %v3883 = vand.u32 %v3698, 4294901760
    %3884 = vmatmul.mubr.f32.gmra.mrb[0].mxu0 %v3883
    %v3885 = vpop.f32.mrb[0].mxu0
    %v3886 = vadd.f32 %v3789, %v3885
    %v3887 = vpop.f32.mrb[0].mxu0
    %3888 = vdwg.mxu0
    %3889 = vmatprep.subr.mxu0 0.0
    %v3890 = vand.u32 %v35, 4294901760
    %v3891 = vsub.f32 %v35, %v3890
    %3892 = vmatpush1.xpose.msra.mxu0 %v3891
    %3893 = vmatprep.subr.mxu0 0.0
    %v3894 = vand.u32 %v36, 4294901760
    %v3895 = vsub.f32 %v36, %v3894
    %3896 = vmatpush1.xpose.msra.mxu0 %v3895
    %3897 = vmatprep.subr.mxu0 0.0
    %v3898 = vand.u32 %v37, 4294901760
    %v3899 = vsub.f32 %v37, %v3898
    %3900 = vmatpush1.xpose.msra.mxu0 %v3899
    %3901 = vmatprep.subr.mxu0 0.0
    %v3902 = vand.u32 %v38, 4294901760
    %v3903 = vsub.f32 %v38, %v3902
    %3904 = vmatpush1.xpose.msra.mxu0 %v3903
    %3905 = vmatprep.subr.mxu0 0.0
    %3906 = vmatpush1.xpose.msra.mxu0 0.0
    %3907 = vmatprep.subr.mxu0 0.0
    %3908 = vmatpush1.xpose.msra.mxu0 0.0
    %3909 = vmatprep.subr.mxu0 0.0
    %3910 = vmatpush1.xpose.msra.mxu0 0.0
    %3911 = vmatprep.subr.mxu0 0.0
    %3912 = vmatpush1.xpose.msra.mxu0 0.0
    %3913 = vmatprep.subr.mxu0 0.0
    %3914 = vmatpush1.xpose.msra.mxu0 0.0
    %3915 = vmatprep.subr.mxu0 0.0
    %3916 = vmatpush1.xpose.msra.mxu0 0.0
    %3917 = vmatprep.subr.mxu0 0.0
    %3918 = vmatpush1.xpose.msra.mxu0 0.0
    %3919 = vmatprep.subr.mxu0 0.0
    %3920 = vmatpush1.xpose.msra.mxu0 0.0
    %3921 = vmatprep.subr.mxu0 0.0
    %3922 = vmatpush1.xpose.msra.mxu0 0.0
    %3923 = vmatprep.subr.mxu0 0.0
    %3924 = vmatpush1.xpose.msra.mxu0 0.0
    %3925 = vmatprep.subr.mxu0 0.0
    %3926 = vmatpush1.xpose.msra.mxu0 0.0
    %3927 = vmatprep.subr.mxu0 0.0
    %3928 = vmatpush1.xpose.msra.mxu0 0.0
    %3929 = vmatprep.subr.mxu0 0.0
    %3930 = vmatpush1.xpose.msra.mxu0 0.0
    %3931 = vmatprep.subr.mxu0 0.0
    %3932 = vmatpush1.xpose.msra.mxu0 0.0
    %3933 = vmatprep.subr.mxu0 0.0
    %3934 = vmatpush1.xpose.msra.mxu0 0.0
    %3935 = vmatprep.subr.mxu0 0.0
    %3936 = vmatpush1.xpose.msra.mxu0 0.0
    %3937 = vmatprep.subr.mxu0 0.0
    %3938 = vmatpush1.xpose.msra.mxu0 0.0
    %3939 = vmatprep.subr.mxu0 0.0
    %3940 = vmatpush1.xpose.msra.mxu0 0.0
    %3941 = vmatprep.subr.mxu0 0.0
    %3942 = vmatpush1.xpose.msra.mxu0 0.0
    %3943 = vmatprep.subr.mxu0 0.0
    %3944 = vmatpush1.xpose.msra.mxu0 0.0
    %3945 = vmatprep.subr.mxu0 0.0
    %3946 = vmatpush1.xpose.msra.mxu0 0.0
    %3947 = vmatprep.subr.mxu0 0.0
    %3948 = vmatpush1.xpose.msra.mxu0 0.0
    %3949 = vmatprep.subr.mxu0 0.0
    %3950 = vmatpush1.xpose.msra.mxu0 0.0
    %3951 = vmatprep.subr.mxu0 0.0
    %3952 = vmatpush1.xpose.msra.mxu0 0.0
    %3953 = vmatprep.subr.mxu0 0.0
    %3954 = vmatpush1.xpose.msra.mxu0 0.0
    %3955 = vmatprep.subr.mxu0 0.0
    %3956 = vmatpush1.xpose.msra.mxu0 0.0
    %3957 = vmatprep.subr.mxu0 0.0
    %3958 = vmatpush1.xpose.msra.mxu0 0.0
    %3959 = vmatprep.subr.mxu0 0.0
    %3960 = vmatpush1.xpose.msra.mxu0 0.0
    %3961 = vmatprep.mubr.f32.mxu0 0.0
    %v3962 = vand.u32 %v3697, 4294901760
    %v3963 = vsub.f32 %v3697, %v3962
    %3964 = vmatmul.mubr.f32.gmra.mrb[0].mxu0 %v3963
    %v3965 = vpop.f32.mrb[0].mxu0
    %v3966 = vadd.f32 %v3880, %v3965
    %v3967 = vpop.f32.mrb[0].mxu0
    %3968 = vmatprep.mubr.f32.mxu0 0.0
    %v3969 = vand.u32 %v3698, 4294901760
    %v3970 = vsub.f32 %v3698, %v3969
    %3971 = vmatmul.mubr.f32.gmra.mrb[0].mxu0 %v3970
    %v3972 = vpop.f32.mrb[0].mxu0
    %v3973 = vadd.f32 %v3886, %v3972
    %v3974 = vpop.f32.mrb[0].mxu0
    %3975 = vdwg.mxu0
    %3976 = vmatprep.subr.mxu0 0.0
    %v3977 = vand.u32 %v35, 4294901760
    %3978 = vmatpush1.xpose.msra.mxu0 %v3977
    %3979 = vmatprep.subr.mxu0 0.0
    %v3980 = vand.u32 %v36, 4294901760
    %3981 = vmatpush1.xpose.msra.mxu0 %v3980
    %3982 = vmatprep.subr.mxu0 0.0
    %v3983 = vand.u32 %v37, 4294901760
    %3984 = vmatpush1.xpose.msra.mxu0 %v3983
    %3985 = vmatprep.subr.mxu0 0.0
    %v3986 = vand.u32 %v38, 4294901760
    %3987 = vmatpush1.xpose.msra.mxu0 %v3986
    %3988 = vmatprep.subr.mxu0 0.0
    %3989 = vmatpush1.xpose.msra.mxu0 0.0
    %3990 = vmatprep.subr.mxu0 0.0
    %3991 = vmatpush1.xpose.msra.mxu0 0.0
    %3992 = vmatprep.subr.mxu0 0.0
    %3993 = vmatpush1.xpose.msra.mxu0 0.0
    %3994 = vmatprep.subr.mxu0 0.0
    %3995 = vmatpush1.xpose.msra.mxu0 0.0
    %3996 = vmatprep.subr.mxu0 0.0
    %3997 = vmatpush1.xpose.msra.mxu0 0.0
    %3998 = vmatprep.subr.mxu0 0.0
    %3999 = vmatpush1.xpose.msra.mxu0 0.0
    %4000 = vmatprep.subr.mxu0 0.0
    %4001 = vmatpush1.xpose.msra.mxu0 0.0
    %4002 = vmatprep.subr.mxu0 0.0
    %4003 = vmatpush1.xpose.msra.mxu0 0.0
    %4004 = vmatprep.subr.mxu0 0.0
    %4005 = vmatpush1.xpose.msra.mxu0 0.0
    %4006 = vmatprep.subr.mxu0 0.0
    %4007 = vmatpush1.xpose.msra.mxu0 0.0
    %4008 = vmatprep.subr.mxu0 0.0
    %4009 = vmatpush1.xpose.msra.mxu0 0.0
    %4010 = vmatprep.subr.mxu0 0.0
    %4011 = vmatpush1.xpose.msra.mxu0 0.0
    %4012 = vmatprep.subr.mxu0 0.0
    %4013 = vmatpush1.xpose.msra.mxu0 0.0
    %4014 = vmatprep.subr.mxu0 0.0
    %4015 = vmatpush1.xpose.msra.mxu0 0.0
    %4016 = vmatprep.subr.mxu0 0.0
    %4017 = vmatpush1.xpose.msra.mxu0 0.0
    %4018 = vmatprep.subr.mxu0 0.0
    %4019 = vmatpush1.xpose.msra.mxu0 0.0
    %4020 = vmatprep.subr.mxu0 0.0
    %4021 = vmatpush1.xpose.msra.mxu0 0.0
    %4022 = vmatprep.subr.mxu0 0.0
    %4023 = vmatpush1.xpose.msra.mxu0 0.0
    %4024 = vmatprep.subr.mxu0 0.0
    %4025 = vmatpush1.xpose.msra.mxu0 0.0
    %4026 = vmatprep.subr.mxu0 0.0
    %4027 = vmatpush1.xpose.msra.mxu0 0.0
    %4028 = vmatprep.subr.mxu0 0.0
    %4029 = vmatpush1.xpose.msra.mxu0 0.0
    %4030 = vmatprep.subr.mxu0 0.0
    %4031 = vmatpush1.xpose.msra.mxu0 0.0
    %4032 = vmatprep.subr.mxu0 0.0
    %4033 = vmatpush1.xpose.msra.mxu0 0.0
    %4034 = vmatprep.subr.mxu0 0.0
    %4035 = vmatpush1.xpose.msra.mxu0 0.0
    %4036 = vmatprep.subr.mxu0 0.0
    %4037 = vmatpush1.xpose.msra.mxu0 0.0
    %4038 = vmatprep.subr.mxu0 0.0
    %4039 = vmatpush1.xpose.msra.mxu0 0.0
    %4040 = vmatprep.subr.mxu0 0.0
    %4041 = vmatpush1.xpose.msra.mxu0 0.0
    %4042 = vmatprep.subr.mxu0 0.0
    %4043 = vmatpush1.xpose.msra.mxu0 0.0
    %4044 = vmatprep.mubr.f32.mxu0 0.0
    %v4045 = vand.u32 %v3697, 4294901760
    %v4046 = vsub.f32 %v3697, %v4045
    %v4047 = vand.u32 %v4046, 4294901760
    %4048 = vmatmul.mubr.f32.gmra.mrb[0].mxu0 %v4047
    %v4049 = vpop.f32.mrb[0].mxu0
    %v4050 = vadd.f32 %v3966, %v4049
    %v4051 = vpop.f32.mrb[0].mxu0
    %4052 = vmatprep.mubr.f32.mxu0 0.0
    %v4053 = vand.u32 %v3698, 4294901760
    %v4054 = vsub.f32 %v3698, %v4053
    %v4055 = vand.u32 %v4054, 4294901760
    %4056 = vmatmul.mubr.f32.gmra.mrb[0].mxu0 %v4055
    %v4057 = vpop.f32.mrb[0].mxu0
    %v4058 = vadd.f32 %v3973, %v4057
    %v4059 = vpop.f32.mrb[0].mxu0
    %4060 = vdwg.mxu0
    %4061 = vmatprep.subr.mxu0 0.0
    %v4062 = vand.u32 %v35, 4294901760
    %v4063 = vsub.f32 %v35, %v4062
    %v4064 = vand.u32 %v4063, 4294901760
    %4065 = vmatpush1.xpose.msra.mxu0 %v4064
    %4066 = vmatprep.subr.mxu0 0.0
    %v4067 = vand.u32 %v36, 4294901760
    %v4068 = vsub.f32 %v36, %v4067
    %v4069 = vand.u32 %v4068, 4294901760
    %4070 = vmatpush1.xpose.msra.mxu0 %v4069
    %4071 = vmatprep.subr.mxu0 0.0
    %v4072 = vand.u32 %v37, 4294901760
    %v4073 = vsub.f32 %v37, %v4072
    %v4074 = vand.u32 %v4073, 4294901760
    %4075 = vmatpush1.xpose.msra.mxu0 %v4074
    %4076 = vmatprep.subr.mxu0 0.0
    %v4077 = vand.u32 %v38, 4294901760
    %v4078 = vsub.f32 %v38, %v4077
    %v4079 = vand.u32 %v4078, 4294901760
    %4080 = vmatpush1.xpose.msra.mxu0 %v4079
    %4081 = vmatprep.subr.mxu0 0.0
    %4082 = vmatpush1.xpose.msra.mxu0 0.0
    %4083 = vmatprep.subr.mxu0 0.0
    %4084 = vmatpush1.xpose.msra.mxu0 0.0
    %4085 = vmatprep.subr.mxu0 0.0
    %4086 = vmatpush1.xpose.msra.mxu0 0.0
    %4087 = vmatprep.subr.mxu0 0.0
    %4088 = vmatpush1.xpose.msra.mxu0 0.0
    %4089 = vmatprep.subr.mxu0 0.0
    %4090 = vmatpush1.xpose.msra.mxu0 0.0
    %4091 = vmatprep.subr.mxu0 0.0
    %4092 = vmatpush1.xpose.msra.mxu0 0.0
    %4093 = vmatprep.subr.mxu0 0.0
    %4094 = vmatpush1.xpose.msra.mxu0 0.0
    %4095 = vmatprep.subr.mxu0 0.0
    %4096 = vmatpush1.xpose.msra.mxu0 0.0
    %4097 = vmatprep.subr.mxu0 0.0
    %4098 = vmatpush1.xpose.msra.mxu0 0.0
    %4099 = vmatprep.subr.mxu0 0.0
    %4100 = vmatpush1.xpose.msra.mxu0 0.0
    %4101 = vmatprep.subr.mxu0 0.0
    %4102 = vmatpush1.xpose.msra.mxu0 0.0
    %4103 = vmatprep.subr.mxu0 0.0
    %4104 = vmatpush1.xpose.msra.mxu0 0.0
    %4105 = vmatprep.subr.mxu0 0.0
    %4106 = vmatpush1.xpose.msra.mxu0 0.0
    %4107 = vmatprep.subr.mxu0 0.0
    %4108 = vmatpush1.xpose.msra.mxu0 0.0
    %4109 = vmatprep.subr.mxu0 0.0
    %4110 = vmatpush1.xpose.msra.mxu0 0.0
    %4111 = vmatprep.subr.mxu0 0.0
    %4112 = vmatpush1.xpose.msra.mxu0 0.0
    %4113 = vmatprep.subr.mxu0 0.0
    %4114 = vmatpush1.xpose.msra.mxu0 0.0
    %4115 = vmatprep.subr.mxu0 0.0
    %4116 = vmatpush1.xpose.msra.mxu0 0.0
    %4117 = vmatprep.subr.mxu0 0.0
    %4118 = vmatpush1.xpose.msra.mxu0 0.0
    %4119 = vmatprep.subr.mxu0 0.0
    %4120 = vmatpush1.xpose.msra.mxu0 0.0
    %4121 = vmatprep.subr.mxu0 0.0
    %4122 = vmatpush1.xpose.msra.mxu0 0.0
    %4123 = vmatprep.subr.mxu0 0.0
    %4124 = vmatpush1.xpose.msra.mxu0 0.0
    %4125 = vmatprep.subr.mxu0 0.0
    %4126 = vmatpush1.xpose.msra.mxu0 0.0
    %4127 = vmatprep.subr.mxu0 0.0
    %4128 = vmatpush1.xpose.msra.mxu0 0.0
    %4129 = vmatprep.subr.mxu0 0.0
    %4130 = vmatpush1.xpose.msra.mxu0 0.0
    %4131 = vmatprep.subr.mxu0 0.0
    %4132 = vmatpush1.xpose.msra.mxu0 0.0
    %4133 = vmatprep.subr.mxu0 0.0
    %4134 = vmatpush1.xpose.msra.mxu0 0.0
    %4135 = vmatprep.subr.mxu0 0.0
    %4136 = vmatpush1.xpose.msra.mxu0 0.0
    %4137 = vmatprep.mubr.f32.mxu0 0.0
    %v4138 = vand.u32 %v3697, 4294901760
    %4139 = vmatmul.mubr.f32.gmra.mrb[0].mxu0 %v4138
    %v4140 = vpop.f32.mrb[0].mxu0
    %v4141 = vadd.f32 %v4050, %v4140
    %v4142 = vpop.f32.mrb[0].mxu0
    %4143 = vmatprep.mubr.f32.mxu0 0.0
    %v4144 = vand.u32 %v3698, 4294901760
    %4145 = vmatmul.mubr.f32.gmra.mrb[0].mxu0 %v4144
    %v4146 = vpop.f32.mrb[0].mxu0
    %v4147 = vadd.f32 %v4058, %v4146
    %v4148 = vpop.f32.mrb[0].mxu0
    %4149 = vdwg.mxu0
    %4150 = vmatprep.subr.mxu0 0.0
    %v4151 = vand.u32 %v35, 4294901760
    %4152 = vmatpush1.xpose.msra.mxu0 %v4151
    %4153 = vmatprep.subr.mxu0 0.0
    %v4154 = vand.u32 %v36, 4294901760
    %4155 = vmatpush1.xpose.msra.mxu0 %v4154
    %4156 = vmatprep.subr.mxu0 0.0
    %v4157 = vand.u32 %v37, 4294901760
    %4158 = vmatpush1.xpose.msra.mxu0 %v4157
    %4159 = vmatprep.subr.mxu0 0.0
    %v4160 = vand.u32 %v38, 4294901760
    %4161 = vmatpush1.xpose.msra.mxu0 %v4160
    %4162 = vmatprep.subr.mxu0 0.0
    %4163 = vmatpush1.xpose.msra.mxu0 0.0
    %4164 = vmatprep.subr.mxu0 0.0
    %4165 = vmatpush1.xpose.msra.mxu0 0.0
    %4166 = vmatprep.subr.mxu0 0.0
    %4167 = vmatpush1.xpose.msra.mxu0 0.0
    %4168 = vmatprep.subr.mxu0 0.0
    %4169 = vmatpush1.xpose.msra.mxu0 0.0
    %4170 = vmatprep.subr.mxu0 0.0
    %4171 = vmatpush1.xpose.msra.mxu0 0.0
    %4172 = vmatprep.subr.mxu0 0.0
    %4173 = vmatpush1.xpose.msra.mxu0 0.0
    %4174 = vmatprep.subr.mxu0 0.0
    %4175 = vmatpush1.xpose.msra.mxu0 0.0
    %4176 = vmatprep.subr.mxu0 0.0
    %4177 = vmatpush1.xpose.msra.mxu0 0.0
    %4178 = vmatprep.subr.mxu0 0.0
    %4179 = vmatpush1.xpose.msra.mxu0 0.0
    %4180 = vmatprep.subr.mxu0 0.0
    %4181 = vmatpush1.xpose.msra.mxu0 0.0
    %4182 = vmatprep.subr.mxu0 0.0
    %4183 = vmatpush1.xpose.msra.mxu0 0.0
    %4184 = vmatprep.subr.mxu0 0.0
    %4185 = vmatpush1.xpose.msra.mxu0 0.0
    %4186 = vmatprep.subr.mxu0 0.0
    %4187 = vmatpush1.xpose.msra.mxu0 0.0
    %4188 = vmatprep.subr.mxu0 0.0
    %4189 = vmatpush1.xpose.msra.mxu0 0.0
    %4190 = vmatprep.subr.mxu0 0.0
    %4191 = vmatpush1.xpose.msra.mxu0 0.0
    %4192 = vmatprep.subr.mxu0 0.0
    %4193 = vmatpush1.xpose.msra.mxu0 0.0
    %4194 = vmatprep.subr.mxu0 0.0
    %4195 = vmatpush1.xpose.msra.mxu0 0.0
    %4196 = vmatprep.subr.mxu0 0.0
    %4197 = vmatpush1.xpose.msra.mxu0 0.0
    %4198 = vmatprep.subr.mxu0 0.0
    %4199 = vmatpush1.xpose.msra.mxu0 0.0
    %4200 = vmatprep.subr.mxu0 0.0
    %4201 = vmatpush1.xpose.msra.mxu0 0.0
    %4202 = vmatprep.subr.mxu0 0.0
    %4203 = vmatpush1.xpose.msra.mxu0 0.0
    %4204 = vmatprep.subr.mxu0 0.0
    %4205 = vmatpush1.xpose.msra.mxu0 0.0
    %4206 = vmatprep.subr.mxu0 0.0
    %4207 = vmatpush1.xpose.msra.mxu0 0.0
    %4208 = vmatprep.subr.mxu0 0.0
    %4209 = vmatpush1.xpose.msra.mxu0 0.0
    %4210 = vmatprep.subr.mxu0 0.0
    %4211 = vmatpush1.xpose.msra.mxu0 0.0
    %4212 = vmatprep.subr.mxu0 0.0
    %4213 = vmatpush1.xpose.msra.mxu0 0.0
    %4214 = vmatprep.subr.mxu0 0.0
    %4215 = vmatpush1.xpose.msra.mxu0 0.0
    %4216 = vmatprep.subr.mxu0 0.0
    %4217 = vmatpush1.xpose.msra.mxu0 0.0
    %4218 = vmatprep.mubr.f32.mxu0 0.0
    %v4219 = vand.u32 %v3697, 4294901760
    %4220 = vmatmul.mubr.f32.gmra.mrb[0].mxu0 %v4219
    %v4221 = vpop.f32.mrb[0].mxu0
    %v4222 = vadd.f32 %v4141, %v4221
    %v4223 = vpop.f32.mrb[0].mxu0
    %4224 = vmatprep.mubr.f32.mxu0 0.0
    %v4225 = vand.u32 %v3698, 4294901760
    %4226 = vmatmul.mubr.f32.gmra.mrb[0].mxu0 %v4225
    %v4227 = vpop.f32.mrb[0].mxu0
    %v4228 = vadd.f32 %v4147, %v4227
    %v4229 = vpop.f32.mrb[0].mxu0
    %4230 = vdwg.mxu0
    %v4231 = vadd.f32 %v3079, %v4222
    %v4232 = vadd.f32 %v3080, %v4228
    %4233 = vst.msk [vmem:[%s2] sm:$0xff] %vm52, %v4231
    %4234 = vst.msk [vmem:[%s2 + $0x8] sm:$0xff] %vm52, %v4232
    // Predicated region
    $region14: #{block_forward.1} parent=1 // pred_check
      _
    $region15: #{block_forward.1} parent=1 // pred_check_branch
      %4236 = sbr.rel (0) target = $region17
    $region16: #{block_forward.1} parent=1 // pred_region
      _
    $region17: #{block_forward.1} parent=1 // pred_fallthru
      _
    // Predicated region
    $region18: #{block_forward.1} parent=1 // pred_check
      _
    $region19: #{block_forward.1} parent=1 // pred_check_branch
      %4238 = sbr.rel (0) target = $region21
    $region20: #{block_forward.1} parent=1 // pred_region
      _
    $region21: #{block_forward.1} parent=1 // pred_fallthru
      _
    %4239 = vsyncpa [#allocation3], 1

</llo_original>
